<compile_context>
chip_gen: v7x
topology: tpu7x:2x2x1
jax: 0.10.0
libtpu: 0.0.40
codegen_flags: <defaults>
</compile_context>

<pallas_src>
import math
import functools

import jax
import jax.numpy as jnp
from jax import lax
from jax.experimental import pallas as pl
from jax.experimental.pallas import tpu as pltpu

POOL_RATIO = 0.5
LAMB = 1.0
NEG_SLOPE = 0.2


# ----------------------------------------------------------------------------
# Per-generation tiling helpers
# ----------------------------------------------------------------------------
def _vmem_limit_bytes():
    """Scoped-VMEM cap by chip generation (v5e/v6e: 128 MiB physical, v7x: 64 MiB/TC)."""
    try:
        kind = jax.devices()[0].device_kind.lower()
    except Exception:
        kind = ""
    if "v5" in kind or "v6" in kind:
        return 100 * 1024 * 1024
    return 48 * 1024 * 1024


def _choose_gb(num_graphs, per_graph_bytes, vmem_limit):
    """Largest per-step graph batch whose (double-buffered) blocks + intermediates
    fit the VMEM budget.  Always returns a divisor of num_graphs; prefers
    sublane-aligned (multiple-of-8) batches when the whole batch does not fit, and
    keeps >= 2 grid steps for large G (v7x megacore + DMA pipelining)."""
    cap = max(1, int(vmem_limit) // max(6 * int(per_graph_bytes), 1))
    if num_graphs >= 16:
        cap = min(cap, num_graphs // 2)
    if cap >= num_graphs:
        return num_graphs
    divisors = [d for d in range(1, cap + 1) if num_graphs % d == 0]
    aligned = [d for d in divisors if d % 8 == 0]
    return max(aligned) if aligned else max(divisors)


def _cparams(vmem_limit):
    return pltpu.CompilerParams(dimension_semantics=("parallel",),
                                vmem_limit_bytes=vmem_limit)


# ----------------------------------------------------------------------------
# In-kernel math helpers (traced inline inside the Pallas kernels)
# ----------------------------------------------------------------------------
def _diag_mask(n):
    ri = lax.broadcasted_iota(jnp.int32, (n, n), 0)
    ci = lax.broadcasted_iota(jnp.int32, (n, n), 1)
    return ri == ci


def _feature_transform(x, w):
    """Hoisted x @ W for every graph in the block as one MXU-shaped matmul."""
    gb, n, f = x.shape
    h = w.shape[1]
    if n % 8 == 0:
        xw = jnp.dot(x.reshape(gb * n, f), w, preferred_element_type=jnp.float32)
        return xw.reshape(gb, n, h)
    # sublane-unaligned node count: fall back to a batched matmul vs. broadcast weight
    wb = jnp.broadcast_to(w, (gb, f, h))
    return jnp.einsum("gnf,gfh->gnh", x, wb, preferred_element_type=jnp.float32)


def _gcn_layer(a, xw, b, diag):
    """relu( (D^-1/2 (A + remaining self loops) D^-1/2)^T @ (x W) + b ), batched.
    a: (Gb, n, n) with a[g, src, dst]; xw: (Gb, n, H) (already x @ W); b: (1, H)."""
    a_sl = jnp.where(diag & (a == 0.0), 1.0, a)            # add_remaining_self_loops(fill=1)
    deg = jnp.sum(a_sl, axis=-1, keepdims=True)            # (Gb, n, 1) out-degree
    dinv = jnp.where(deg > 0.0, lax.rsqrt(deg), 0.0)
    at = jnp.swapaxes(a_sl, 1, 2)                          # standard-form batched matmul operand
    agg = jnp.einsum("gds,gsf->gdf", at, dinv * xw,
                     preferred_element_type=jnp.float32)   # (A^T @ (dinv*xw)) per graph
    return jnp.maximum(dinv * agg + b, 0.0)


def _info_score(a, h, diag):
    """NodeInformationScore, batched and lane-dense:
    score[g, j] = sum_f | ((I - D^-1/2 A D^-1/2)^T h)[g, j, f] |  (self loops removed)."""
    a_i = jnp.where(diag, 0.0, a)
    deg = jnp.sum(a_i, axis=-1, keepdims=True)
    dinv = jnp.where(deg > 0.0, lax.rsqrt(deg), 0.0)
    at = jnp.swapaxes(a_i, 1, 2)
    agg = jnp.einsum("gds,gsf->gdf", at, dinv * h, preferred_element_type=jnp.float32)
    info = h - dinv * agg                                  # (Gb, n, H)
    return jnp.sum(jnp.abs(info), axis=-1)                 # (Gb, n)


def _sl_adjacency(x, att, a_ind, lamb, neg_slope):
    """HGP-SL structure learning (sample=False, sparse=False), batched over graphs:
    w_ij = leaky_relu(att_l.x_i + att_r.x_j) + lamb*A_ind[i,j]; per-graph row softmax."""
    e_l = jnp.sum(x * att[0:1, :], axis=-1, keepdims=True)       # (Gb, k, 1)
    e_r_col = jnp.sum(x * att[1:2, :], axis=-1, keepdims=True)   # (Gb, k, 1)
    # broadcast e_r along rows via a rank-1 MXU outer product (no sublane->lane relayout)
    e_r = jnp.einsum("gic,gjc->gij", jnp.ones_like(e_r_col), e_r_col,
                     preferred_element_type=jnp.float32)         # (Gb, k, k)
    w = e_l + e_r
    w = jnp.where(w > 0.0, w, neg_slope * w)                     # leaky_relu
    w = w + lamb * a_ind
    # one graph per batch row => within-graph softmax needs no mask
    m = jnp.max(w, axis=-1, keepdims=True)
    p = jnp.exp(w - m)
    denom = jnp.sum(p, axis=-1, keepdims=True)
    return p * pl.reciprocal(denom, approx=True)                 # EUP divide (free VLIW slot)


def _readout(v):
    """[global_max_pool || global_mean_pool] over nodes: (Gb, k, H) -> (Gb, 2H)."""
    inv_k = 1.0 / v.shape[1]
    return jnp.concatenate([jnp.max(v, axis=1), jnp.sum(v, axis=1) * inv_k], axis=-1)


# ----------------------------------------------------------------------------
# Kernels (Gb graphs per grid step)
# ----------------------------------------------------------------------------
def _conv_score_kernel(adj_ref, x_ref, w_ref, b_ref, h_ref, s_ref):
    """Fused: GCNConv1 + relu and NodeInformationScore on the same adjacency."""
    a = adj_ref[...]                                       # (Gb, Np, Np)
    diag = _diag_mask(a.shape[-1])                         # computed once, shared
    xw = _feature_transform(x_ref[...], w_ref[...])        # hoisted (Gb*Np, F)@(F, H)
    h = _gcn_layer(a, xw, b_ref[...], diag)
    h_ref[...] = h
    s_ref[...] = _info_score(a, h, diag)                   # (Gb, Np) lane-dense slab


def _pool_conv_score_kernel(sel_ref, h_ref, adj_ref, att_ref, w_ref, b_ref,
                            a_out_ref, h_out_ref, s_out_ref, r_out_ref,
                            *, lamb, neg_slope):
    """Fused: one-hot top-k gather (MXU) -> structure learning -> GCNConv2 + relu
    -> next info score -> [gmp||gap] readout of the pooled features."""
    sel = sel_ref[...]                                     # (Gb, k, Np) one-hot selection
    xp = jnp.einsum("gkn,gnh->gkh", sel, h_ref[...],
                    preferred_element_type=jnp.float32)    # pooled features
    sa = jnp.einsum("gkn,gnm->gkm", sel, adj_ref[...],
                    preferred_element_type=jnp.float32)
    aind = jnp.einsum("gkm,gjm->gkj", sa, sel,
                      preferred_element_type=jnp.float32)  # induced-subgraph adjacency
    a_new = _sl_adjacency(xp, att_ref[...], aind, lamb, neg_slope)
    a_out_ref[...] = a_new                                 # needed for pool2's induced subgraph
    diag = _diag_mask(a_new.shape[-1])
    xw = _feature_transform(xp, w_ref[...])
    h2 = _gcn_layer(a_new, xw, b_ref[...], diag)
    h_out_ref[...] = h2
    s_out_ref[...] = _info_score(a_new, h2, diag)
    r_out_ref[...] = _readout(xp)                          # x1 readout, never leaves the kernel raw


def _pool_conv_readout_kernel(sel_ref, h_ref, adj_ref, att_ref, w_ref, b_ref,
                              r_pool_ref, r_conv_ref, *, lamb, neg_slope):
    """Fused: one-hot gather -> structure learning -> GCNConv3 + relu -> both remaining
    readouts.  The learned adjacency and conv3 features never hit HBM."""
    sel = sel_ref[...]
    xp = jnp.einsum("gkn,gnh->gkh", sel, h_ref[...], preferred_element_type=jnp.float32)
    sa = jnp.einsum("gkn,gnm->gkm", sel, adj_ref[...], preferred_element_type=jnp.float32)
    aind = jnp.einsum("gkm,gjm->gkj", sa, sel, preferred_element_type=jnp.float32)
    a_new = _sl_adjacency(xp, att_ref[...], aind, lamb, neg_slope)
    diag = _diag_mask(a_new.shape[-1])
    xw = _feature_transform(xp, w_ref[...])
    h3 = _gcn_layer(a_new, xw, b_ref[...], diag)
    r_pool_ref[...] = _readout(xp)                         # x2 readout
    r_conv_ref[...] = _readout(h3)                         # x3 readout


def _head_kernel(r1_ref, r2_ref, r3_ref,
                 w1_ref, b1_ref, w2_ref, b2_ref, w3_ref, b3_ref,
                 logp_ref, bfc_ref):
    """Fused: relu-sum of readouts + MLP head + log_softmax."""
    x = (jnp.maximum(r1_ref[...], 0.0)
         + jnp.maximum(r2_ref[...], 0.0)
         + jnp.maximum(r3_ref[...], 0.0))
    bfc_ref[...] = x                                       # before_fc
    h = jnp.maximum(jnp.dot(x, w1_ref[...], preferred_element_type=jnp.float32) + b1_ref[...], 0.0)
    # TODO(synk): dropout omitted (module evaluated in eval mode; training dropout is stochastic)
    h = jnp.dot(h, w2_ref[...], preferred_element_type=jnp.float32) + b2_ref[...]
    logits = jnp.dot(h, w3_ref[...], preferred_element_type=jnp.float32) + b3_ref[...]
    m = jnp.max(logits, axis=-1, keepdims=True)
    z = logits - m
    lse = jnp.log(jnp.sum(jnp.exp(z), axis=-1, keepdims=True))
    logp_ref[...] = z - lse


# ----------------------------------------------------------------------------
# pallas_call wrappers
# ----------------------------------------------------------------------------
def conv_score(adj, x, w, b):
    G, Np, _ = adj.shape
    Fin, H = w.shape
    vmem = _vmem_limit_bytes()
    per_graph = 4 * (Np * Np + Np * Fin + 3 * Np * H + Np)
    gb = _choose_gb(G, per_graph, vmem)
    return pl.pallas_call(
        _conv_score_kernel,
        grid=(G // gb,),
        in_specs=[
            pl.BlockSpec((gb, Np, Np), lambda g: (g, 0, 0)),
            pl.BlockSpec((gb, Np, Fin), lambda g: (g, 0, 0)),
            pl.BlockSpec((Fin, H), lambda g: (0, 0)),       # resident across steps
            pl.BlockSpec((1, H), lambda g: (0, 0)),
        ],
        out_specs=(
            pl.BlockSpec((gb, Np, H), lambda g: (g, 0, 0)),
            pl.BlockSpec((gb, Np), lambda g: (g, 0)),
        ),
        out_shape=(
            jax.ShapeDtypeStruct((G, Np, H), jnp.float32),
            jax.ShapeDtypeStruct((G, Np), jnp.float32),
        ),
        compiler_params=_cparams(vmem),
    )(adj, x, w, b)


def pool_conv_score(sel, h, adj, att, w, b):
    G, k, Np = sel.shape
    H = w.shape[1]
    vmem = _vmem_limit_bytes()
    per_graph = 4 * (2 * k * Np + 2 * Np * H + 2 * Np * Np + 4 * k * k + 3 * k * H + k + 4 * H)
    gb = _choose_gb(G, per_graph, vmem)
    kern = functools.partial(_pool_conv_score_kernel, lamb=LAMB, neg_slope=NEG_SLOPE)
    return pl.pallas_call(
        kern,
        grid=(G // gb,),
        in_specs=[
            pl.BlockSpec((gb, k, Np), lambda g: (g, 0, 0)),
            pl.BlockSpec((gb, Np, H), lambda g: (g, 0, 0)),
            pl.BlockSpec((gb, Np, Np), lambda g: (g, 0, 0)),
            pl.BlockSpec((2, H), lambda g: (0, 0)),
            pl.BlockSpec((H, H), lambda g: (0, 0)),
            pl.BlockSpec((1, H), lambda g: (0, 0)),
        ],
        out_specs=(
            pl.BlockSpec((gb, k, k), lambda g: (g, 0, 0)),
            pl.BlockSpec((gb, k, H), lambda g: (g, 0, 0)),
            pl.BlockSpec((gb, k), lambda g: (g, 0)),
            pl.BlockSpec((gb, 2 * H), lambda g: (g, 0)),
        ),
        out_shape=(
            jax.ShapeDtypeStruct((G, k, k), jnp.float32),
            jax.ShapeDtypeStruct((G, k, H), jnp.float32),
            jax.ShapeDtypeStruct((G, k), jnp.float32),
            jax.ShapeDtypeStruct((G, 2 * H), jnp.float32),
        ),
        compiler_params=_cparams(vmem),
    )(sel, h, adj, att, w, b)


def pool_conv_readout(sel, h, adj, att, w, b):
    G, k, n = sel.shape
    H = w.shape[1]
    vmem = _vmem_limit_bytes()
    per_graph = 4 * (2 * k * n + 2 * n * H + 2 * n * n + 4 * k * k + 3 * k * H + 4 * H)
    gb = _choose_gb(G, per_graph, vmem)
    kern = functools.partial(_pool_conv_readout_kernel, lamb=LAMB, neg_slope=NEG_SLOPE)
    return pl.pallas_call(
        kern,
        grid=(G // gb,),
        in_specs=[
            pl.BlockSpec((gb, k, n), lambda g: (g, 0, 0)),
            pl.BlockSpec((gb, n, H), lambda g: (g, 0, 0)),
            pl.BlockSpec((gb, n, n), lambda g: (g, 0, 0)),
            pl.BlockSpec((2, H), lambda g: (0, 0)),
            pl.BlockSpec((H, H), lambda g: (0, 0)),
            pl.BlockSpec((1, H), lambda g: (0, 0)),
        ],
        out_specs=(
            pl.BlockSpec((gb, 2 * H), lambda g: (g, 0)),
            pl.BlockSpec((gb, 2 * H), lambda g: (g, 0)),
        ),
        out_shape=(
            jax.ShapeDtypeStruct((G, 2 * H), jnp.float32),
            jax.ShapeDtypeStruct((G, 2 * H), jnp.float32),
        ),
        compiler_params=_cparams(vmem),
    )(sel, h, adj, att, w, b)


def readout_head(r1, r2, r3, p):
    G, H2 = r1.shape
    H = p["lin1_w"].shape[1]
    C = p["lin3_w"].shape[1]
    vmem = _vmem_limit_bytes()
    per_graph = 4 * (4 * H2 + 2 * H + C)
    gb = _choose_gb(G, per_graph, vmem)
    return pl.pallas_call(
        _head_kernel,
        grid=(G // gb,),
        in_specs=[
            pl.BlockSpec((gb, H2), lambda g: (g, 0)),
            pl.BlockSpec((gb, H2), lambda g: (g, 0)),
            pl.BlockSpec((gb, H2), lambda g: (g, 0)),
            pl.BlockSpec((H2, H), lambda g: (0, 0)),
            pl.BlockSpec((1, H), lambda g: (0, 0)),
            pl.BlockSpec((H, H), lambda g: (0, 0)),
            pl.BlockSpec((1, H), lambda g: (0, 0)),
            pl.BlockSpec((H, C), lambda g: (0, 0)),
            pl.BlockSpec((1, C), lambda g: (0, 0)),
        ],
        out_specs=(
            pl.BlockSpec((gb, C), lambda g: (g, 0)),
            pl.BlockSpec((gb, H2), lambda g: (g, 0)),
        ),
        out_shape=(
            jax.ShapeDtypeStruct((G, C), jnp.float32),
            jax.ShapeDtypeStruct((G, H2), jnp.float32),
        ),
        compiler_params=_cparams(vmem),
    )(r1, r2, r3, p["lin1_w"], p["lin1_b"], p["lin2_w"], p["lin2_b"],
      p["lin3_w"], p["lin3_b"])


# ----------------------------------------------------------------------------
# Forward pass (only top-k + one-hot selection stay as tiny XLA glue)
# ----------------------------------------------------------------------------
def forward(params, x, adj):
    G, Np, _ = x.shape
    nhid = params["conv1_w"].shape[1]
    k1 = int(math.ceil(POOL_RATIO * Np))
    k2 = int(math.ceil(POOL_RATIO * k1))
    att1 = params["att1"].reshape(2, nhid)
    att2 = params["att2"].reshape(2, nhid)

    # conv1 + relu fused with pool1's node-information score (hoisted x @ W)
    h1, s1 = conv_score(adj, x, params["conv1_w"], params["conv1_b"])

    # pool1: per-graph top-k -> one-hot selector consumed by the next fused kernel
    _, idx1 = lax.top_k(s1, k1)
    sel1 = jax.nn.one_hot(idx1, Np, dtype=jnp.float32)              # (G, k1, Np)

    # fused: MXU gather (xp1, aind1) + structure learning + conv2 + relu + info score + readout1
    a1, h2, s2, r1 = pool_conv_score(sel1, h1, adj, att1,
                                     params["conv2_w"], params["conv2_b"])

    # pool2: top-k -> one-hot selector
    _, idx2 = lax.top_k(s2, k2)
    sel2 = jax.nn.one_hot(idx2, k1, dtype=jnp.float32)              # (G, k2, k1)

    # fused: MXU gather + structure learning + conv3 + relu + readout2/readout3
    r2, r3 = pool_conv_readout(sel2, h2, a1, att2,
                               params["conv3_w"], params["conv3_b"])

    # relu-sum of readouts + MLP head + log_softmax
    logp, before_fc = readout_head(r1, r2, r3, params)
    return logp, before_fc


def init_params(key, num_features, nhid, num_classes):
    ks = jax.random.split(key, 11)

    def w(k, shape, scale=0.1):
        return (scale * jax.random.normal(k, shape)).astype(jnp.float32)

    return {
        "conv1_w": w(ks[0], (num_features, nhid)), "conv1_b": w(ks[1], (1, nhid)),
        "conv2_w": w(ks[2], (nhid, nhid)),         "conv2_b": jnp.zeros((1, nhid), jnp.float32),
        "conv3_w": w(ks[3], (nhid, nhid)),         "conv3_b": jnp.zeros((1, nhid), jnp.float32),
        "att1":    w(ks[4], (1, 2 * nhid)),
        "att2":    w(ks[5], (1, 2 * nhid)),
        "lin1_w":  w(ks[6], (2 * nhid, nhid)),     "lin1_b": w(ks[7], (1, nhid)),
        "lin2_w":  w(ks[8], (nhid, nhid)),         "lin2_b": jnp.zeros((1, nhid), jnp.float32),
        "lin3_w":  w(ks[9], (nhid, num_classes)),  "lin3_b": w(ks[10], (1, num_classes)),
    }


if __name__ == "__main__":
    key = jax.random.PRNGKey(0)
    n_graphs, nodes_per_graph = 2, 16
    num_features, nhid, num_classes = 16, 32, 4

    k_feat, k_adj, k_par = jax.random.split(key, 3)
    x = jax.random.normal(k_feat, (n_graphs, nodes_per_graph, num_features), dtype=jnp.float32)

    # deterministic symmetric per-graph adjacency, no self loops
    r = jax.random.uniform(k_adj, (n_graphs, nodes_per_graph, nodes_per_graph))
    u = jnp.triu((r < 0.4).astype(jnp.float32), k=1)
    adj = u + jnp.swapaxes(u, 1, 2)

    params = init_params(k_par, num_features, nhid, num_classes)

    logp, before_fc = jax.jit(forward)(params, x, adj)
    jax.block_until_ready((logp, before_fc))
    assert logp.shape == (n_graphs, num_classes)
    assert before_fc.shape == (n_graphs, 2 * nhid)
    print("KERNEL_OK")
</pallas_src>

<mosaic_0001>
module attributes {stable_mosaic.version = 11 : i64} {
  func.func @_conv_score_kernel(%arg0: i32, %arg1: memref<2x16x16xf32, #tpu.memory_space<vmem>>, %arg2: memref<2x16x16xf32, #tpu.memory_space<vmem>>, %arg3: memref<16x32xf32, #tpu.memory_space<vmem>>, %arg4: memref<1x32xf32, #tpu.memory_space<vmem>>, %arg5: memref<2x16x32xf32, #tpu.memory_space<vmem>>, %arg6: memref<2x16xf32, #tpu.memory_space<vmem>>) attributes {dimension_semantics = [#tpu.dimension_semantics<parallel>], iteration_bounds = array<i64: 1>, scalar_prefetch = 0 : i64, scratch_operands = 0 : i64, tpu.core_type = #tpu.core_type<tc>, window_params = [{transform_indices = @transform_0, window_bounds = array<i64: 2, 16, 16>}, {transform_indices = @transform_1, window_bounds = array<i64: 2, 16, 16>}, {pipeline_mode = #tpu.pipeline_mode<synchronous>, transform_indices = @transform_2, window_bounds = array<i64: 16, 32>}, {pipeline_mode = #tpu.pipeline_mode<synchronous>, transform_indices = @transform_3, window_bounds = array<i64: 1, 32>}, {transform_indices = @transform_4, window_bounds = array<i64: 2, 16, 32>}, {transform_indices = @transform_5, window_bounds = array<i64: 2, 16>}]} {
    %c0 = arith.constant 0 : index
    %c0_0 = arith.constant 0 : index
    %c0_1 = arith.constant 0 : index
    %0 = vector.load %arg1[%c0, %c0_0, %c0_1] : memref<2x16x16xf32, #tpu.memory_space<vmem>>, vector<2x16x16xf32>
    %1 = tpu.iota {dimensions = array<i32: 0>} : vector<16x16xi32>
    %2 = tpu.iota {dimensions = array<i32: 1>} : vector<16x16xi32>
    %3 = arith.cmpi eq, %1, %2 : vector<16x16xi32>
    %c0_2 = arith.constant 0 : index
    %c0_3 = arith.constant 0 : index
    %c0_4 = arith.constant 0 : index
    %4 = vector.load %arg2[%c0_2, %c0_3, %c0_4] : memref<2x16x16xf32, #tpu.memory_space<vmem>>, vector<2x16x16xf32>
    %c0_5 = arith.constant 0 : index
    %c0_6 = arith.constant 0 : index
    %5 = vector.load %arg3[%c0_5, %c0_6] : memref<16x32xf32, #tpu.memory_space<vmem>>, vector<16x32xf32>
    %6 = vector.shape_cast %4 : vector<2x16x16xf32> to vector<32x16xf32>
    %cst = arith.constant dense<0.000000e+00> : vector<32x32xf32>
    %7 = tpu.matmul %6, %5, %cst {dimension_numbers = #tpu.dot_dimension_numbers<[1], [0], [0], [1], [0, 0, 1, 1], [], []>} : vector<32x16xf32>, vector<16x32xf32>, vector<32x32xf32> -> vector<32x32xf32>
    %8 = vector.shape_cast %7 : vector<32x32xf32> to vector<2x16x32xf32>
    %c0_7 = arith.constant 0 : index
    %c0_8 = arith.constant 0 : index
    %9 = vector.load %arg4[%c0_7, %c0_8] : memref<1x32xf32, #tpu.memory_space<vmem>>, vector<1x32xf32>
    %cst_9 = arith.constant 0.000000e+00 : f32
    %10 = vector.broadcast %cst_9 : f32 to vector<2x16x16xf32>
    %11 = arith.cmpf oeq, %0, %10 : vector<2x16x16xf32>
    %12 = vector.shape_cast %3 : vector<16x16xi1> to vector<1x16x16xi1>
    %13 = vector.broadcast %12 : vector<1x16x16xi1> to vector<2x16x16xi1>
    %14 = arith.andi %13, %11 : vector<2x16x16xi1>
    %cst_10 = arith.constant 1.000000e+00 : f32
    %15 = vector.broadcast %cst_10 : f32 to vector<2x16x16xf32>
    %16 = arith.select %14, %15, %0 : vector<2x16x16xi1>, vector<2x16x16xf32>
    %cst_11 = arith.constant dense<0.000000e+00> : vector<2x16xf32>
    %17 = vector.multi_reduction <add>, %16, %cst_11 [2] : vector<2x16x16xf32> to vector<2x16xf32>
    %18 = vector.shape_cast %17 : vector<2x16xf32> to vector<2x16x1xf32>
    %cst_12 = arith.constant 0.000000e+00 : f32
    %19 = vector.broadcast %cst_12 : f32 to vector<2x16x1xf32>
    %20 = arith.cmpf ogt, %18, %19 : vector<2x16x1xf32>
    %21 = math.rsqrt %18 : vector<2x16x1xf32>
    %cst_13 = arith.constant 0.000000e+00 : f32
    %22 = vector.broadcast %cst_13 : f32 to vector<2x16x1xf32>
    %23 = arith.select %20, %21, %22 : vector<2x16x1xi1>, vector<2x16x1xf32>
    %24 = tpu.transpose %16, [0, 2, 1] : vector<2x16x16xf32> -> vector<2x16x16xf32>
    %25 = vector.broadcast %23 : vector<2x16x1xf32> to vector<2x16x32xf32>
    %26 = arith.mulf %25, %8 : vector<2x16x32xf32>
    "tpu.trace_start"() <{level = 10 : i32, message = "gds,gsf->gdf"}> : () -> ()
    %cst_14 = arith.constant dense<0.000000e+00> : vector<2x16x32xf32>
    %27 = tpu.matmul %24, %26, %cst_14 {dimension_numbers = #tpu.dot_dimension_numbers<[2], [1], [1], [2], [0, 0, 0, 1, 1, 2], [0], [0]>} : vector<2x16x16xf32>, vector<2x16x32xf32>, vector<2x16x32xf32> -> vector<2x16x32xf32>
    "tpu.trace_stop"() : () -> ()
    %28 = vector.broadcast %23 : vector<2x16x1xf32> to vector<2x16x32xf32>
    %29 = arith.mulf %28, %27 : vector<2x16x32xf32>
    %30 = vector.shape_cast %9 : vector<1x32xf32> to vector<1x1x32xf32>
    %31 = vector.broadcast %30 : vector<1x1x32xf32> to vector<2x16x32xf32>
    %32 = arith.addf %29, %31 : vector<2x16x32xf32>
    %cst_15 = arith.constant 0.000000e+00 : f32
    %33 = vector.broadcast %cst_15 : f32 to vector<2x16x32xf32>
    %34 = arith.maximumf %32, %33 : vector<2x16x32xf32>
    %c0_16 = arith.constant 0 : index
    %c0_17 = arith.constant 0 : index
    %c0_18 = arith.constant 0 : index
    %35 = vector.load %arg5[%c0_16, %c0_17, %c0_18] : memref<2x16x32xf32, #tpu.memory_space<vmem>>, vector<2x16x32xf32>
    tpu.vector_store %arg5[%c0_16, %c0_17, %c0_18], %34 {strides = array<i32>} : memref<2x16x32xf32, #tpu.memory_space<vmem>>, vector<2x16x32xf32>,
    %cst_19 = arith.constant 0.000000e+00 : f32
    %36 = vector.shape_cast %3 : vector<16x16xi1> to vector<1x16x16xi1>
    %37 = vector.broadcast %36 : vector<1x16x16xi1> to vector<2x16x16xi1>
    %38 = vector.broadcast %cst_19 : f32 to vector<2x16x16xf32>
    %39 = arith.select %37, %38, %0 : vector<2x16x16xi1>, vector<2x16x16xf32>
    %cst_20 = arith.constant dense<0.000000e+00> : vector<2x16xf32>
    %40 = vector.multi_reduction <add>, %39, %cst_20 [2] : vector<2x16x16xf32> to vector<2x16xf32>
    %41 = vector.shape_cast %40 : vector<2x16xf32> to vector<2x16x1xf32>
    %cst_21 = arith.constant 0.000000e+00 : f32
    %42 = vector.broadcast %cst_21 : f32 to vector<2x16x1xf32>
    %43 = arith.cmpf ogt, %41, %42 : vector<2x16x1xf32>
    %44 = math.rsqrt %41 : vector<2x16x1xf32>
    %cst_22 = arith.constant 0.000000e+00 : f32
    %45 = vector.broadcast %cst_22 : f32 to vector<2x16x1xf32>
    %46 = arith.select %43, %44, %45 : vector<2x16x1xi1>, vector<2x16x1xf32>
    %47 = tpu.transpose %39, [0, 2, 1] : vector<2x16x16xf32> -> vector<2x16x16xf32>
    %48 = vector.broadcast %46 : vector<2x16x1xf32> to vector<2x16x32xf32>
    %49 = arith.mulf %48, %34 : vector<2x16x32xf32>
    "tpu.trace_start"() <{level = 10 : i32, message = "gds,gsf->gdf"}> : () -> ()
    %cst_23 = arith.constant dense<0.000000e+00> : vector<2x16x32xf32>
    %50 = tpu.matmul %47, %49, %cst_23 {dimension_numbers = #tpu.dot_dimension_numbers<[2], [1], [1], [2], [0, 0, 0, 1, 1, 2], [0], [0]>} : vector<2x16x16xf32>, vector<2x16x32xf32>, vector<2x16x32xf32> -> vector<2x16x32xf32>
    "tpu.trace_stop"() : () -> ()
    %51 = vector.broadcast %46 : vector<2x16x1xf32> to vector<2x16x32xf32>
    %52 = arith.mulf %51, %50 : vector<2x16x32xf32>
    %53 = arith.subf %34, %52 : vector<2x16x32xf32>
    %54 = math.absf %53 : vector<2x16x32xf32>
    %cst_24 = arith.constant dense<0.000000e+00> : vector<2x16xf32>
    %55 = vector.multi_reduction <add>, %54, %cst_24 [2] : vector<2x16x32xf32> to vector<2x16xf32>
    %c0_25 = arith.constant 0 : index
    %c0_26 = arith.constant 0 : index
    %56 = vector.load %arg6[%c0_25, %c0_26] : memref<2x16xf32, #tpu.memory_space<vmem>>, vector<2x16xf32>
    tpu.vector_store %arg6[%c0_25, %c0_26], %55 {strides = array<i32>} : memref<2x16xf32, #tpu.memory_space<vmem>>, vector<2x16xf32>,
    return
  }
  func.func @transform_0(%arg0: i32) -> (i32, i32, i32) {
    %c0_i32 = arith.constant 0 : i32
    %c0_i32_0 = arith.constant 0 : i32
    %c0_i32_1 = arith.constant 0 : i32
    return %arg0, %c0_i32, %c0_i32_0 : i32, i32, i32
  }
  func.func @transform_1(%arg0: i32) -> (i32, i32, i32) {
    %c0_i32 = arith.constant 0 : i32
    %c0_i32_0 = arith.constant 0 : i32
    %c0_i32_1 = arith.constant 0 : i32
    return %arg0, %c0_i32, %c0_i32_0 : i32, i32, i32
  }
  func.func @transform_2(%arg0: i32) -> (i32, i32) {
    %c0_i32 = arith.constant 0 : i32
    %c0_i32_0 = arith.constant 0 : i32
    %c0_i32_1 = arith.constant 0 : i32
    return %c0_i32, %c0_i32_0 : i32, i32
  }
  func.func @transform_3(%arg0: i32) -> (i32, i32) {
    %c0_i32 = arith.constant 0 : i32
    %c0_i32_0 = arith.constant 0 : i32
    %c0_i32_1 = arith.constant 0 : i32
    return %c0_i32, %c0_i32_0 : i32, i32
  }
  func.func @transform_4(%arg0: i32) -> (i32, i32, i32) {
    %c0_i32 = arith.constant 0 : i32
    %c0_i32_0 = arith.constant 0 : i32
    %c0_i32_1 = arith.constant 0 : i32
    return %arg0, %c0_i32, %c0_i32_0 : i32, i32, i32
  }
  func.func @transform_5(%arg0: i32) -> (i32, i32) {
    %c0_i32 = arith.constant 0 : i32
    %c0_i32_0 = arith.constant 0 : i32
    return %arg0, %c0_i32 : i32, i32
  }
}

module attributes {stable_mosaic.version = 11 : i64} {
  func.func @_pool_conv_score_kernel(%arg0: i32, %arg1: memref<2x8x16xf32, #tpu.memory_space<vmem>>, %arg2: memref<2x16x32xf32, #tpu.memory_space<vmem>>, %arg3: memref<2x16x16xf32, #tpu.memory_space<vmem>>, %arg4: memref<2x32xf32, #tpu.memory_space<vmem>>, %arg5: memref<32x32xf32, #tpu.memory_space<vmem>>, %arg6: memref<1x32xf32, #tpu.memory_space<vmem>>, %arg7: memref<2x8x8xf32, #tpu.memory_space<vmem>>, %arg8: memref<2x8x32xf32, #tpu.memory_space<vmem>>, %arg9: memref<2x8xf32, #tpu.memory_space<vmem>>, %arg10: memref<2x64xf32, #tpu.memory_space<vmem>>) attributes {dimension_semantics = [#tpu.dimension_semantics<parallel>], iteration_bounds = array<i64: 1>, scalar_prefetch = 0 : i64, scratch_operands = 0 : i64, tpu.core_type = #tpu.core_type<tc>, window_params = [{transform_indices = @transform_0, window_bounds = array<i64: 2, 8, 16>}, {transform_indices = @transform_1, window_bounds = array<i64: 2, 16, 32>}, {transform_indices = @transform_2, window_bounds = array<i64: 2, 16, 16>}, {pipeline_mode = #tpu.pipeline_mode<synchronous>, transform_indices = @transform_3, window_bounds = array<i64: 2, 32>}, {pipeline_mode = #tpu.pipeline_mode<synchronous>, transform_indices = @transform_4, window_bounds = array<i64: 32, 32>}, {pipeline_mode = #tpu.pipeline_mode<synchronous>, transform_indices = @transform_5, window_bounds = array<i64: 1, 32>}, {transform_indices = @transform_6, window_bounds = array<i64: 2, 8, 8>}, {transform_indices = @transform_7, window_bounds = array<i64: 2, 8, 32>}, {transform_indices = @transform_8, window_bounds = array<i64: 2, 8>}, {transform_indices = @transform_9, window_bounds = array<i64: 2, 64>}]} {
    %c0 = arith.constant 0 : index
    %c0_0 = arith.constant 0 : index
    %c0_1 = arith.constant 0 : index
    %0 = vector.load %arg1[%c0, %c0_0, %c0_1] : memref<2x8x16xf32, #tpu.memory_space<vmem>>, vector<2x8x16xf32>
    %c0_2 = arith.constant 0 : index
    %c0_3 = arith.constant 0 : index
    %c0_4 = arith.constant 0 : index
    %1 = vector.load %arg2[%c0_2, %c0_3, %c0_4] : memref<2x16x32xf32, #tpu.memory_space<vmem>>, vector<2x16x32xf32>
    "tpu.trace_start"() <{level = 10 : i32, message = "gkn,gnh->gkh"}> : () -> ()
    %cst = arith.constant dense<0.000000e+00> : vector<2x8x32xf32>
    %2 = tpu.matmul %0, %1, %cst {dimension_numbers = #tpu.dot_dimension_numbers<[2], [1], [1], [2], [0, 0, 0, 1, 1, 2], [0], [0]>} : vector<2x8x16xf32>, vector<2x16x32xf32>, vector<2x8x32xf32> -> vector<2x8x32xf32>
    "tpu.trace_stop"() : () -> ()
    %c0_5 = arith.constant 0 : index
    %c0_6 = arith.constant 0 : index
    %c0_7 = arith.constant 0 : index
    %3 = vector.load %arg3[%c0_5, %c0_6, %c0_7] : memref<2x16x16xf32, #tpu.memory_space<vmem>>, vector<2x16x16xf32>
    "tpu.trace_start"() <{level = 10 : i32, message = "gkn,gnm->gkm"}> : () -> ()
    %cst_8 = arith.constant dense<0.000000e+00> : vector<2x8x16xf32>
    %4 = tpu.matmul %0, %3, %cst_8 {dimension_numbers = #tpu.dot_dimension_numbers<[2], [1], [1], [2], [0, 0, 0, 1, 1, 2], [0], [0]>} : vector<2x8x16xf32>, vector<2x16x16xf32>, vector<2x8x16xf32> -> vector<2x8x16xf32>
    "tpu.trace_stop"() : () -> ()
    "tpu.trace_start"() <{level = 10 : i32, message = "gkm,gjm->gkj"}> : () -> ()
    %cst_9 = arith.constant dense<0.000000e+00> : vector<2x8x8xf32>
    %5 = tpu.matmul %4, %0, %cst_9 {dimension_numbers = #tpu.dot_dimension_numbers<[2], [2], [1], [1], [0, 0, 0, 1, 1, 1], [0], [0]>} : vector<2x8x16xf32>, vector<2x8x16xf32>, vector<2x8x8xf32> -> vector<2x8x8xf32>
    "tpu.trace_stop"() : () -> ()
    %c0_10 = arith.constant 0 : index
    %c0_11 = arith.constant 0 : index
    %6 = vector.load %arg4[%c0_10, %c0_11] : memref<2x32xf32, #tpu.memory_space<vmem>>, vector<2x32xf32>
    %7 = vector.extract_strided_slice %6 {offsets = [0, 0], sizes = [1, 32], strides = [1, 1]} : vector<2x32xf32> to vector<1x32xf32>
    %8 = vector.shape_cast %7 : vector<1x32xf32> to vector<1x1x32xf32>
    %9 = vector.broadcast %8 : vector<1x1x32xf32> to vector<2x8x32xf32>
    %10 = arith.mulf %2, %9 : vector<2x8x32xf32>
    %cst_12 = arith.constant dense<0.000000e+00> : vector<2x8xf32>
    %11 = vector.multi_reduction <add>, %10, %cst_12 [2] : vector<2x8x32xf32> to vector<2x8xf32>
    %12 = vector.shape_cast %11 : vector<2x8xf32> to vector<2x8x1xf32>
    %13 = vector.extract_strided_slice %6 {offsets = [1, 0], sizes = [1, 32], strides = [1, 1]} : vector<2x32xf32> to vector<1x32xf32>
    %14 = vector.shape_cast %13 : vector<1x32xf32> to vector<1x1x32xf32>
    %15 = vector.broadcast %14 : vector<1x1x32xf32> to vector<2x8x32xf32>
    %16 = arith.mulf %2, %15 : vector<2x8x32xf32>
    %cst_13 = arith.constant dense<0.000000e+00> : vector<2x8xf32>
    %17 = vector.multi_reduction <add>, %16, %cst_13 [2] : vector<2x8x32xf32> to vector<2x8xf32>
    %18 = vector.shape_cast %17 : vector<2x8xf32> to vector<2x8x1xf32>
    %cst_14 = arith.constant 1.000000e+00 : f32
    %19 = vector.broadcast %cst_14 : f32 to vector<2x8x1xf32>
    "tpu.trace_start"() <{level = 10 : i32, message = "gic,gjc->gij"}> : () -> ()
    %cst_15 = arith.constant dense<0.000000e+00> : vector<2x8x8xf32>
    %20 = tpu.matmul %19, %18, %cst_15 {dimension_numbers = #tpu.dot_dimension_numbers<[2], [2], [1], [1], [0, 0, 0, 1, 1, 1], [0], [0]>} : vector<2x8x1xf32>, vector<2x8x1xf32>, vector<2x8x8xf32> -> vector<2x8x8xf32>
    "tpu.trace_stop"() : () -> ()
    %21 = vector.broadcast %12 : vector<2x8x1xf32> to vector<2x8x8xf32>
    %22 = arith.addf %21, %20 : vector<2x8x8xf32>
    %cst_16 = arith.constant 0.000000e+00 : f32
    %23 = vector.broadcast %cst_16 : f32 to vector<2x8x8xf32>
    %24 = arith.cmpf ogt, %22, %23 : vector<2x8x8xf32>
    %cst_17 = arith.constant 2.000000e-01 : f32
    %25 = vector.broadcast %cst_17 : f32 to vector<2x8x8xf32>
    %26 = arith.mulf %25, %22 : vector<2x8x8xf32>
    %27 = arith.select %24, %22, %26 : vector<2x8x8xi1>, vector<2x8x8xf32>
    %cst_18 = arith.constant 1.000000e+00 : f32
    %28 = vector.broadcast %cst_18 : f32 to vector<2x8x8xf32>
    %29 = arith.mulf %28, %5 : vector<2x8x8xf32>
    %30 = arith.addf %27, %29 : vector<2x8x8xf32>
    %cst_19 = arith.constant dense<0xFF800000> : vector<2x8xf32>
    %31 = vector.multi_reduction <maximumf>, %30, %cst_19 [2] : vector<2x8x8xf32> to vector<2x8xf32>
    %32 = vector.shape_cast %31 : vector<2x8xf32> to vector<2x8x1xf32>
    %33 = vector.broadcast %32 : vector<2x8x1xf32> to vector<2x8x8xf32>
    %34 = arith.subf %30, %33 : vector<2x8x8xf32>
    %35 = math.exp %34 : vector<2x8x8xf32>
    %cst_20 = arith.constant dense<0.000000e+00> : vector<2x8xf32>
    %36 = vector.multi_reduction <add>, %35, %cst_20 [2] : vector<2x8x8xf32> to vector<2x8xf32>
    %37 = vector.shape_cast %36 : vector<2x8xf32> to vector<2x8x1xf32>
    %38 = tpu.reciprocal %37 {approx = true} : vector<2x8x1xf32> -> vector<2x8x1xf32>
    %39 = vector.broadcast %38 : vector<2x8x1xf32> to vector<2x8x8xf32>
    %40 = arith.mulf %35, %39 : vector<2x8x8xf32>
    %c0_21 = arith.constant 0 : index
    %c0_22 = arith.constant 0 : index
    %c0_23 = arith.constant 0 : index
    %41 = vector.load %arg7[%c0_21, %c0_22, %c0_23] : memref<2x8x8xf32, #tpu.memory_space<vmem>>, vector<2x8x8xf32>
    tpu.vector_store %arg7[%c0_21, %c0_22, %c0_23], %40 {strides = array<i32>} : memref<2x8x8xf32, #tpu.memory_space<vmem>>, vector<2x8x8xf32>,
    %42 = tpu.iota {dimensions = array<i32: 0>} : vector<8x8xi32>
    %43 = tpu.iota {dimensions = array<i32: 1>} : vector<8x8xi32>
    %44 = arith.cmpi eq, %42, %43 : vector<8x8xi32>
    %c0_24 = arith.constant 0 : index
    %c0_25 = arith.constant 0 : index
    %45 = vector.load %arg5[%c0_24, %c0_25] : memref<32x32xf32, #tpu.memory_space<vmem>>, vector<32x32xf32>
    %46 = vector.shape_cast %2 : vector<2x8x32xf32> to vector<16x32xf32>
    %cst_26 = arith.constant dense<0.000000e+00> : vector<16x32xf32>
    %47 = tpu.matmul %46, %45, %cst_26 {dimension_numbers = #tpu.dot_dimension_numbers<[1], [0], [0], [1], [0, 0, 1, 1], [], []>} : vector<16x32xf32>, vector<32x32xf32>, vector<16x32xf32> -> vector<16x32xf32>
    %48 = vector.shape_cast %47 : vector<16x32xf32> to vector<2x8x32xf32>
    %c0_27 = arith.constant 0 : index
    %c0_28 = arith.constant 0 : index
    %49 = vector.load %arg6[%c0_27, %c0_28] : memref<1x32xf32, #tpu.memory_space<vmem>>, vector<1x32xf32>
    %cst_29 = arith.constant 0.000000e+00 : f32
    %50 = vector.broadcast %cst_29 : f32 to vector<2x8x8xf32>
    %51 = arith.cmpf oeq, %40, %50 : vector<2x8x8xf32>
    %52 = vector.shape_cast %44 : vector<8x8xi1> to vector<1x8x8xi1>
    %53 = vector.broadcast %52 : vector<1x8x8xi1> to vector<2x8x8xi1>
    %54 = arith.andi %53, %51 : vector<2x8x8xi1>
    %cst_30 = arith.constant 1.000000e+00 : f32
    %55 = vector.broadcast %cst_30 : f32 to vector<2x8x8xf32>
    %56 = arith.select %54, %55, %40 : vector<2x8x8xi1>, vector<2x8x8xf32>
    %cst_31 = arith.constant dense<0.000000e+00> : vector<2x8xf32>
    %57 = vector.multi_reduction <add>, %56, %cst_31 [2] : vector<2x8x8xf32> to vector<2x8xf32>
    %58 = vector.shape_cast %57 : vector<2x8xf32> to vector<2x8x1xf32>
    %cst_32 = arith.constant 0.000000e+00 : f32
    %59 = vector.broadcast %cst_32 : f32 to vector<2x8x1xf32>
    %60 = arith.cmpf ogt, %58, %59 : vector<2x8x1xf32>
    %61 = math.rsqrt %58 : vector<2x8x1xf32>
    %cst_33 = arith.constant 0.000000e+00 : f32
    %62 = vector.broadcast %cst_33 : f32 to vector<2x8x1xf32>
    %63 = arith.select %60, %61, %62 : vector<2x8x1xi1>, vector<2x8x1xf32>
    %64 = tpu.transpose %56, [0, 2, 1] : vector<2x8x8xf32> -> vector<2x8x8xf32>
    %65 = vector.broadcast %63 : vector<2x8x1xf32> to vector<2x8x32xf32>
    %66 = arith.mulf %65, %48 : vector<2x8x32xf32>
    "tpu.trace_start"() <{level = 10 : i32, message = "gds,gsf->gdf"}> : () -> ()
    %cst_34 = arith.constant dense<0.000000e+00> : vector<2x8x32xf32>
    %67 = tpu.matmul %64, %66, %cst_34 {dimension_numbers = #tpu.dot_dimension_numbers<[2], [1], [1], [2], [0, 0, 0, 1, 1, 2], [0], [0]>} : vector<2x8x8xf32>, vector<2x8x32xf32>, vector<2x8x32xf32> -> vector<2x8x32xf32>
    "tpu.trace_stop"() : () -> ()
    %68 = vector.broadcast %63 : vector<2x8x1xf32> to vector<2x8x32xf32>
    %69 = arith.mulf %68, %67 : vector<2x8x32xf32>
    %70 = vector.shape_cast %49 : vector<1x32xf32> to vector<1x1x32xf32>
    %71 = vector.broadcast %70 : vector<1x1x32xf32> to vector<2x8x32xf32>
    %72 = arith.addf %69, %71 : vector<2x8x32xf32>
    %cst_35 = arith.constant 0.000000e+00 : f32
    %73 = vector.broadcast %cst_35 : f32 to vector<2x8x32xf32>
    %74 = arith.maximumf %72, %73 : vector<2x8x32xf32>
    %c0_36 = arith.constant 0 : index
    %c0_37 = arith.constant 0 : index
    %c0_38 = arith.constant 0 : index
    %75 = vector.load %arg8[%c0_36, %c0_37, %c0_38] : memref<2x8x32xf32, #tpu.memory_space<vmem>>, vector<2x8x32xf32>
    tpu.vector_store %arg8[%c0_36, %c0_37, %c0_38], %74 {strides = array<i32>} : memref<2x8x32xf32, #tpu.memory_space<vmem>>, vector<2x8x32xf32>,
    %cst_39 = arith.constant 0.000000e+00 : f32
    %76 = vector.shape_cast %44 : vector<8x8xi1> to vector<1x8x8xi1>
    %77 = vector.broadcast %76 : vector<1x8x8xi1> to vector<2x8x8xi1>
    %78 = vector.broadcast %cst_39 : f32 to vector<2x8x8xf32>
    %79 = arith.select %77, %78, %40 : vector<2x8x8xi1>, vector<2x8x8xf32>
    %cst_40 = arith.constant dense<0.000000e+00> : vector<2x8xf32>
    %80 = vector.multi_reduction <add>, %79, %cst_40 [2] : vector<2x8x8xf32> to vector<2x8xf32>
    %81 = vector.shape_cast %80 : vector<2x8xf32> to vector<2x8x1xf32>
    %cst_41 = arith.constant 0.000000e+00 : f32
    %82 = vector.broadcast %cst_41 : f32 to vector<2x8x1xf32>
    %83 = arith.cmpf ogt, %81, %82 : vector<2x8x1xf32>
    %84 = math.rsqrt %81 : vector<2x8x1xf32>
    %cst_42 = arith.constant 0.000000e+00 : f32
    %85 = vector.broadcast %cst_42 : f32 to vector<2x8x1xf32>
    %86 = arith.select %83, %84, %85 : vector<2x8x1xi1>, vector<2x8x1xf32>
    %87 = tpu.transpose %79, [0, 2, 1] : vector<2x8x8xf32> -> vector<2x8x8xf32>
    %88 = vector.broadcast %86 : vector<2x8x1xf32> to vector<2x8x32xf32>
    %89 = arith.mulf %88, %74 : vector<2x8x32xf32>
    "tpu.trace_start"() <{level = 10 : i32, message = "gds,gsf->gdf"}> : () -> ()
    %cst_43 = arith.constant dense<0.000000e+00> : vector<2x8x32xf32>
    %90 = tpu.matmul %87, %89, %cst_43 {dimension_numbers = #tpu.dot_dimension_numbers<[2], [1], [1], [2], [0, 0, 0, 1, 1, 2], [0], [0]>} : vector<2x8x8xf32>, vector<2x8x32xf32>, vector<2x8x32xf32> -> vector<2x8x32xf32>
    "tpu.trace_stop"() : () -> ()
    %91 = vector.broadcast %86 : vector<2x8x1xf32> to vector<2x8x32xf32>
    %92 = arith.mulf %91, %90 : vector<2x8x32xf32>
    %93 = arith.subf %74, %92 : vector<2x8x32xf32>
    %94 = math.absf %93 : vector<2x8x32xf32>
    %cst_44 = arith.constant dense<0.000000e+00> : vector<2x8xf32>
    %95 = vector.multi_reduction <add>, %94, %cst_44 [2] : vector<2x8x32xf32> to vector<2x8xf32>
    %c0_45 = arith.constant 0 : index
    %c0_46 = arith.constant 0 : index
    %96 = vector.load %arg9[%c0_45, %c0_46] : memref<2x8xf32, #tpu.memory_space<vmem>>, vector<2x8xf32>
    tpu.vector_store %arg9[%c0_45, %c0_46], %95 {strides = array<i32>} : memref<2x8xf32, #tpu.memory_space<vmem>>, vector<2x8xf32>,
    %cst_47 = arith.constant dense<0xFF800000> : vector<2x32xf32>
    %97 = vector.multi_reduction <maximumf>, %2, %cst_47 [1] : vector<2x8x32xf32> to vector<2x32xf32>
    %cst_48 = arith.constant dense<0.000000e+00> : vector<2x32xf32>
    %98 = vector.multi_reduction <add>, %2, %cst_48 [1] : vector<2x8x32xf32> to vector<2x32xf32>
    %cst_49 = arith.constant 1.250000e-01 : f32
    %99 = vector.broadcast %cst_49 : f32 to vector<2x32xf32>
    %100 = arith.mulf %98, %99 : vector<2x32xf32>
    %101 = tpu.concatenate %97, %100 in 1 : vector<2x32xf32>, vector<2x32xf32> -> vector<2x64xf32>
    %c0_50 = arith.constant 0 : index
    %c0_51 = arith.constant 0 : index
    %102 = vector.load %arg10[%c0_50, %c0_51] : memref<2x64xf32, #tpu.memory_space<vmem>>, vector<2x64xf32>
    tpu.vector_store %arg10[%c0_50, %c0_51], %101 {strides = array<i32>} : memref<2x64xf32, #tpu.memory_space<vmem>>, vector<2x64xf32>,
    return
  }
  func.func @transform_0(%arg0: i32) -> (i32, i32, i32) {
    %c0_i32 = arith.constant 0 : i32
    %c0_i32_0 = arith.constant 0 : i32
    %c0_i32_1 = arith.constant 0 : i32
    return %arg0, %c0_i32, %c0_i32_0 : i32, i32, i32
  }
  func.func @transform_1(%arg0: i32) -> (i32, i32, i32) {
    %c0_i32 = arith.constant 0 : i32
    %c0_i32_0 = arith.constant 0 : i32
    %c0_i32_1 = arith.constant 0 : i32
    return %arg0, %c0_i32, %c0_i32_0 : i32, i32, i32
  }
  func.func @transform_2(%arg0: i32) -> (i32, i32, i32) {
    %c0_i32 = arith.constant 0 : i32
    %c0_i32_0 = arith.constant 0 : i32
    %c0_i32_1 = arith.constant 0 : i32
    return %arg0, %c0_i32, %c0_i32_0 : i32, i32, i32
  }
  func.func @transform_3(%arg0: i32) -> (i32, i32) {
    %c0_i32 = arith.constant 0 : i32
    %c0_i32_0 = arith.constant 0 : i32
    %c0_i32_1 = arith.constant 0 : i32
    return %c0_i32, %c0_i32_0 : i32, i32
  }
  func.func @transform_4(%arg0: i32) -> (i32, i32) {
    %c0_i32 = arith.constant 0 : i32
    %c0_i32_0 = arith.constant 0 : i32
    %c0_i32_1 = arith.constant 0 : i32
    return %c0_i32, %c0_i32_0 : i32, i32
  }
  func.func @transform_5(%arg0: i32) -> (i32, i32) {
    %c0_i32 = arith.constant 0 : i32
    %c0_i32_0 = arith.constant 0 : i32
    %c0_i32_1 = arith.constant 0 : i32
    return %c0_i32, %c0_i32_0 : i32, i32
  }
  func.func @transform_6(%arg0: i32) -> (i32, i32, i32) {
    %c0_i32 = arith.constant 0 : i32
    %c0_i32_0 = arith.constant 0 : i32
    %c0_i32_1 = arith.constant 0 : i32
    return %arg0, %c0_i32, %c0_i32_0 : i32, i32, i32
  }
  func.func @transform_7(%arg0: i32) -> (i32, i32, i32) {
    %c0_i32 = arith.constant 0 : i32
    %c0_i32_0 = arith.constant 0 : i32
    %c0_i32_1 = arith.constant 0 : i32
    return %arg0, %c0_i32, %c0_i32_0 : i32, i32, i32
  }
  func.func @transform_8(%arg0: i32) -> (i32, i32) {
    %c0_i32 = arith.constant 0 : i32
    %c0_i32_0 = arith.constant 0 : i32
    return %arg0, %c0_i32 : i32, i32
  }
  func.func @transform_9(%arg0: i32) -> (i32, i32) {
    %c0_i32 = arith.constant 0 : i32
    %c0_i32_0 = arith.constant 0 : i32
    return %arg0, %c0_i32 : i32, i32
  }
}

module attributes {stable_mosaic.version = 11 : i64} {
  func.func @_pool_conv_readout_kernel(%arg0: i32, %arg1: memref<2x4x8xf32, #tpu.memory_space<vmem>>, %arg2: memref<2x8x32xf32, #tpu.memory_space<vmem>>, %arg3: memref<2x8x8xf32, #tpu.memory_space<vmem>>, %arg4: memref<2x32xf32, #tpu.memory_space<vmem>>, %arg5: memref<32x32xf32, #tpu.memory_space<vmem>>, %arg6: memref<1x32xf32, #tpu.memory_space<vmem>>, %arg7: memref<2x64xf32, #tpu.memory_space<vmem>>, %arg8: memref<2x64xf32, #tpu.memory_space<vmem>>) attributes {dimension_semantics = [#tpu.dimension_semantics<parallel>], iteration_bounds = array<i64: 1>, scalar_prefetch = 0 : i64, scratch_operands = 0 : i64, tpu.core_type = #tpu.core_type<tc>, window_params = [{transform_indices = @transform_0, window_bounds = array<i64: 2, 4, 8>}, {transform_indices = @transform_1, window_bounds = array<i64: 2, 8, 32>}, {transform_indices = @transform_2, window_bounds = array<i64: 2, 8, 8>}, {pipeline_mode = #tpu.pipeline_mode<synchronous>, transform_indices = @transform_3, window_bounds = array<i64: 2, 32>}, {pipeline_mode = #tpu.pipeline_mode<synchronous>, transform_indices = @transform_4, window_bounds = array<i64: 32, 32>}, {pipeline_mode = #tpu.pipeline_mode<synchronous>, transform_indices = @transform_5, window_bounds = array<i64: 1, 32>}, {transform_indices = @transform_6, window_bounds = array<i64: 2, 64>}, {transform_indices = @transform_7, window_bounds = array<i64: 2, 64>}]} {
    %c0 = arith.constant 0 : index
    %c0_0 = arith.constant 0 : index
    %c0_1 = arith.constant 0 : index
    %0 = vector.load %arg1[%c0, %c0_0, %c0_1] : memref<2x4x8xf32, #tpu.memory_space<vmem>>, vector<2x4x8xf32>
    %c0_2 = arith.constant 0 : index
    %c0_3 = arith.constant 0 : index
    %c0_4 = arith.constant 0 : index
    %1 = vector.load %arg2[%c0_2, %c0_3, %c0_4] : memref<2x8x32xf32, #tpu.memory_space<vmem>>, vector<2x8x32xf32>
    "tpu.trace_start"() <{level = 10 : i32, message = "gkn,gnh->gkh"}> : () -> ()
    %cst = arith.constant dense<0.000000e+00> : vector<2x4x32xf32>
    %2 = tpu.matmul %0, %1, %cst {dimension_numbers = #tpu.dot_dimension_numbers<[2], [1], [1], [2], [0, 0, 0, 1, 1, 2], [0], [0]>} : vector<2x4x8xf32>, vector<2x8x32xf32>, vector<2x4x32xf32> -> vector<2x4x32xf32>
    "tpu.trace_stop"() : () -> ()
    %c0_5 = arith.constant 0 : index
    %c0_6 = arith.constant 0 : index
    %c0_7 = arith.constant 0 : index
    %3 = vector.load %arg3[%c0_5, %c0_6, %c0_7] : memref<2x8x8xf32, #tpu.memory_space<vmem>>, vector<2x8x8xf32>
    "tpu.trace_start"() <{level = 10 : i32, message = "gkn,gnm->gkm"}> : () -> ()
    %cst_8 = arith.constant dense<0.000000e+00> : vector<2x4x8xf32>
    %4 = tpu.matmul %0, %3, %cst_8 {dimension_numbers = #tpu.dot_dimension_numbers<[2], [1], [1], [2], [0, 0, 0, 1, 1, 2], [0], [0]>} : vector<2x4x8xf32>, vector<2x8x8xf32>, vector<2x4x8xf32> -> vector<2x4x8xf32>
    "tpu.trace_stop"() : () -> ()
    "tpu.trace_start"() <{level = 10 : i32, message = "gkm,gjm->gkj"}> : () -> ()
    %cst_9 = arith.constant dense<0.000000e+00> : vector<2x4x4xf32>
    %5 = tpu.matmul %4, %0, %cst_9 {dimension_numbers = #tpu.dot_dimension_numbers<[2], [2], [1], [1], [0, 0, 0, 1, 1, 1], [0], [0]>} : vector<2x4x8xf32>, vector<2x4x8xf32>, vector<2x4x4xf32> -> vector<2x4x4xf32>
    "tpu.trace_stop"() : () -> ()
    %c0_10 = arith.constant 0 : index
    %c0_11 = arith.constant 0 : index
    %6 = vector.load %arg4[%c0_10, %c0_11] : memref<2x32xf32, #tpu.memory_space<vmem>>, vector<2x32xf32>
    %7 = vector.extract_strided_slice %6 {offsets = [0, 0], sizes = [1, 32], strides = [1, 1]} : vector<2x32xf32> to vector<1x32xf32>
    %8 = vector.shape_cast %7 : vector<1x32xf32> to vector<1x1x32xf32>
    %9 = vector.broadcast %8 : vector<1x1x32xf32> to vector<2x4x32xf32>
    %10 = arith.mulf %2, %9 : vector<2x4x32xf32>
    %cst_12 = arith.constant dense<0.000000e+00> : vector<2x4xf32>
    %11 = vector.multi_reduction <add>, %10, %cst_12 [2] : vector<2x4x32xf32> to vector<2x4xf32>
    %12 = vector.shape_cast %11 : vector<2x4xf32> to vector<2x4x1xf32>
    %13 = vector.extract_strided_slice %6 {offsets = [1, 0], sizes = [1, 32], strides = [1, 1]} : vector<2x32xf32> to vector<1x32xf32>
    %14 = vector.shape_cast %13 : vector<1x32xf32> to vector<1x1x32xf32>
    %15 = vector.broadcast %14 : vector<1x1x32xf32> to vector<2x4x32xf32>
    %16 = arith.mulf %2, %15 : vector<2x4x32xf32>
    %cst_13 = arith.constant dense<0.000000e+00> : vector<2x4xf32>
    %17 = vector.multi_reduction <add>, %16, %cst_13 [2] : vector<2x4x32xf32> to vector<2x4xf32>
    %18 = vector.shape_cast %17 : vector<2x4xf32> to vector<2x4x1xf32>
    %cst_14 = arith.constant 1.000000e+00 : f32
    %19 = vector.broadcast %cst_14 : f32 to vector<2x4x1xf32>
    "tpu.trace_start"() <{level = 10 : i32, message = "gic,gjc->gij"}> : () -> ()
    %cst_15 = arith.constant dense<0.000000e+00> : vector<2x4x4xf32>
    %20 = tpu.matmul %19, %18, %cst_15 {dimension_numbers = #tpu.dot_dimension_numbers<[2], [2], [1], [1], [0, 0, 0, 1, 1, 1], [0], [0]>} : vector<2x4x1xf32>, vector<2x4x1xf32>, vector<2x4x4xf32> -> vector<2x4x4xf32>
    "tpu.trace_stop"() : () -> ()
    %21 = vector.broadcast %12 : vector<2x4x1xf32> to vector<2x4x4xf32>
    %22 = arith.addf %21, %20 : vector<2x4x4xf32>
    %cst_16 = arith.constant 0.000000e+00 : f32
    %23 = vector.broadcast %cst_16 : f32 to vector<2x4x4xf32>
    %24 = arith.cmpf ogt, %22, %23 : vector<2x4x4xf32>
    %cst_17 = arith.constant 2.000000e-01 : f32
    %25 = vector.broadcast %cst_17 : f32 to vector<2x4x4xf32>
    %26 = arith.mulf %25, %22 : vector<2x4x4xf32>
    %27 = arith.select %24, %22, %26 : vector<2x4x4xi1>, vector<2x4x4xf32>
    %cst_18 = arith.constant 1.000000e+00 : f32
    %28 = vector.broadcast %cst_18 : f32 to vector<2x4x4xf32>
    %29 = arith.mulf %28, %5 : vector<2x4x4xf32>
    %30 = arith.addf %27, %29 : vector<2x4x4xf32>
    %cst_19 = arith.constant dense<0xFF800000> : vector<2x4xf32>
    %31 = vector.multi_reduction <maximumf>, %30, %cst_19 [2] : vector<2x4x4xf32> to vector<2x4xf32>
    %32 = vector.shape_cast %31 : vector<2x4xf32> to vector<2x4x1xf32>
    %33 = vector.broadcast %32 : vector<2x4x1xf32> to vector<2x4x4xf32>
    %34 = arith.subf %30, %33 : vector<2x4x4xf32>
    %35 = math.exp %34 : vector<2x4x4xf32>
    %cst_20 = arith.constant dense<0.000000e+00> : vector<2x4xf32>
    %36 = vector.multi_reduction <add>, %35, %cst_20 [2] : vector<2x4x4xf32> to vector<2x4xf32>
    %37 = vector.shape_cast %36 : vector<2x4xf32> to vector<2x4x1xf32>
    %38 = tpu.reciprocal %37 {approx = true} : vector<2x4x1xf32> -> vector<2x4x1xf32>
    %39 = vector.broadcast %38 : vector<2x4x1xf32> to vector<2x4x4xf32>
    %40 = arith.mulf %35, %39 : vector<2x4x4xf32>
    %41 = tpu.iota {dimensions = array<i32: 0>} : vector<4x4xi32>
    %42 = tpu.iota {dimensions = array<i32: 1>} : vector<4x4xi32>
    %43 = arith.cmpi eq, %41, %42 : vector<4x4xi32>
    %c0_21 = arith.constant 0 : index
    %c0_22 = arith.constant 0 : index
    %44 = vector.load %arg5[%c0_21, %c0_22] : memref<32x32xf32, #tpu.memory_space<vmem>>, vector<32x32xf32>
    %45 = vector.shape_cast %44 : vector<32x32xf32> to vector<1x32x32xf32>
    %46 = vector.broadcast %45 : vector<1x32x32xf32> to vector<2x32x32xf32>
    "tpu.trace_start"() <{level = 10 : i32, message = "gnf,gfh->gnh"}> : () -> ()
    %cst_23 = arith.constant dense<0.000000e+00> : vector<2x4x32xf32>
    %47 = tpu.matmul %2, %46, %cst_23 {dimension_numbers = #tpu.dot_dimension_numbers<[2], [1], [1], [2], [0, 0, 0, 1, 1, 2], [0], [0]>} : vector<2x4x32xf32>, vector<2x32x32xf32>, vector<2x4x32xf32> -> vector<2x4x32xf32>
    "tpu.trace_stop"() : () -> ()
    %c0_24 = arith.constant 0 : index
    %c0_25 = arith.constant 0 : index
    %48 = vector.load %arg6[%c0_24, %c0_25] : memref<1x32xf32, #tpu.memory_space<vmem>>, vector<1x32xf32>
    %cst_26 = arith.constant 0.000000e+00 : f32
    %49 = vector.broadcast %cst_26 : f32 to vector<2x4x4xf32>
    %50 = arith.cmpf oeq, %40, %49 : vector<2x4x4xf32>
    %51 = vector.shape_cast %43 : vector<4x4xi1> to vector<1x4x4xi1>
    %52 = vector.broadcast %51 : vector<1x4x4xi1> to vector<2x4x4xi1>
    %53 = arith.andi %52, %50 : vector<2x4x4xi1>
    %cst_27 = arith.constant 1.000000e+00 : f32
    %54 = vector.broadcast %cst_27 : f32 to vector<2x4x4xf32>
    %55 = arith.select %53, %54, %40 : vector<2x4x4xi1>, vector<2x4x4xf32>
    %cst_28 = arith.constant dense<0.000000e+00> : vector<2x4xf32>
    %56 = vector.multi_reduction <add>, %55, %cst_28 [2] : vector<2x4x4xf32> to vector<2x4xf32>
    %57 = vector.shape_cast %56 : vector<2x4xf32> to vector<2x4x1xf32>
    %cst_29 = arith.constant 0.000000e+00 : f32
    %58 = vector.broadcast %cst_29 : f32 to vector<2x4x1xf32>
    %59 = arith.cmpf ogt, %57, %58 : vector<2x4x1xf32>
    %60 = math.rsqrt %57 : vector<2x4x1xf32>
    %cst_30 = arith.constant 0.000000e+00 : f32
    %61 = vector.broadcast %cst_30 : f32 to vector<2x4x1xf32>
    %62 = arith.select %59, %60, %61 : vector<2x4x1xi1>, vector<2x4x1xf32>
    %63 = tpu.transpose %55, [0, 2, 1] : vector<2x4x4xf32> -> vector<2x4x4xf32>
    %64 = vector.broadcast %62 : vector<2x4x1xf32> to vector<2x4x32xf32>
    %65 = arith.mulf %64, %47 : vector<2x4x32xf32>
    "tpu.trace_start"() <{level = 10 : i32, message = "gds,gsf->gdf"}> : () -> ()
    %cst_31 = arith.constant dense<0.000000e+00> : vector<2x4x32xf32>
    %66 = tpu.matmul %63, %65, %cst_31 {dimension_numbers = #tpu.dot_dimension_numbers<[2], [1], [1], [2], [0, 0, 0, 1, 1, 2], [0], [0]>} : vector<2x4x4xf32>, vector<2x4x32xf32>, vector<2x4x32xf32> -> vector<2x4x32xf32>
    "tpu.trace_stop"() : () -> ()
    %67 = vector.broadcast %62 : vector<2x4x1xf32> to vector<2x4x32xf32>
    %68 = arith.mulf %67, %66 : vector<2x4x32xf32>
    %69 = vector.shape_cast %48 : vector<1x32xf32> to vector<1x1x32xf32>
    %70 = vector.broadcast %69 : vector<1x1x32xf32> to vector<2x4x32xf32>
    %71 = arith.addf %68, %70 : vector<2x4x32xf32>
    %cst_32 = arith.constant 0.000000e+00 : f32
    %72 = vector.broadcast %cst_32 : f32 to vector<2x4x32xf32>
    %73 = arith.maximumf %71, %72 : vector<2x4x32xf32>
    %cst_33 = arith.constant dense<0xFF800000> : vector<2x32xf32>
    %74 = vector.multi_reduction <maximumf>, %2, %cst_33 [1] : vector<2x4x32xf32> to vector<2x32xf32>
    %cst_34 = arith.constant dense<0.000000e+00> : vector<2x32xf32>
    %75 = vector.multi_reduction <add>, %2, %cst_34 [1] : vector<2x4x32xf32> to vector<2x32xf32>
    %cst_35 = arith.constant 2.500000e-01 : f32
    %76 = vector.broadcast %cst_35 : f32 to vector<2x32xf32>
    %77 = arith.mulf %75, %76 : vector<2x32xf32>
    %78 = tpu.concatenate %74, %77 in 1 : vector<2x32xf32>, vector<2x32xf32> -> vector<2x64xf32>
    %c0_36 = arith.constant 0 : index
    %c0_37 = arith.constant 0 : index
    %79 = vector.load %arg7[%c0_36, %c0_37] : memref<2x64xf32, #tpu.memory_space<vmem>>, vector<2x64xf32>
    tpu.vector_store %arg7[%c0_36, %c0_37], %78 {strides = array<i32>} : memref<2x64xf32, #tpu.memory_space<vmem>>, vector<2x64xf32>,
    %cst_38 = arith.constant dense<0xFF800000> : vector<2x32xf32>
    %80 = vector.multi_reduction <maximumf>, %73, %cst_38 [1] : vector<2x4x32xf32> to vector<2x32xf32>
    %cst_39 = arith.constant dense<0.000000e+00> : vector<2x32xf32>
    %81 = vector.multi_reduction <add>, %73, %cst_39 [1] : vector<2x4x32xf32> to vector<2x32xf32>
    %cst_40 = arith.constant 2.500000e-01 : f32
    %82 = vector.broadcast %cst_40 : f32 to vector<2x32xf32>
    %83 = arith.mulf %81, %82 : vector<2x32xf32>
    %84 = tpu.concatenate %80, %83 in 1 : vector<2x32xf32>, vector<2x32xf32> -> vector<2x64xf32>
    %c0_41 = arith.constant 0 : index
    %c0_42 = arith.constant 0 : index
    %85 = vector.load %arg8[%c0_41, %c0_42] : memref<2x64xf32, #tpu.memory_space<vmem>>, vector<2x64xf32>
    tpu.vector_store %arg8[%c0_41, %c0_42], %84 {strides = array<i32>} : memref<2x64xf32, #tpu.memory_space<vmem>>, vector<2x64xf32>,
    return
  }
  func.func @transform_0(%arg0: i32) -> (i32, i32, i32) {
    %c0_i32 = arith.constant 0 : i32
    %c0_i32_0 = arith.constant 0 : i32
    %c0_i32_1 = arith.constant 0 : i32
    return %arg0, %c0_i32, %c0_i32_0 : i32, i32, i32
  }
  func.func @transform_1(%arg0: i32) -> (i32, i32, i32) {
    %c0_i32 = arith.constant 0 : i32
    %c0_i32_0 = arith.constant 0 : i32
    %c0_i32_1 = arith.constant 0 : i32
    return %arg0, %c0_i32, %c0_i32_0 : i32, i32, i32
  }
  func.func @transform_2(%arg0: i32) -> (i32, i32, i32) {
    %c0_i32 = arith.constant 0 : i32
    %c0_i32_0 = arith.constant 0 : i32
    %c0_i32_1 = arith.constant 0 : i32
    return %arg0, %c0_i32, %c0_i32_0 : i32, i32, i32
  }
  func.func @transform_3(%arg0: i32) -> (i32, i32) {
    %c0_i32 = arith.constant 0 : i32
    %c0_i32_0 = arith.constant 0 : i32
    %c0_i32_1 = arith.constant 0 : i32
    return %c0_i32, %c0_i32_0 : i32, i32
  }
  func.func @transform_4(%arg0: i32) -> (i32, i32) {
    %c0_i32 = arith.constant 0 : i32
    %c0_i32_0 = arith.constant 0 : i32
    %c0_i32_1 = arith.constant 0 : i32
    return %c0_i32, %c0_i32_0 : i32, i32
  }
  func.func @transform_5(%arg0: i32) -> (i32, i32) {
    %c0_i32 = arith.constant 0 : i32
    %c0_i32_0 = arith.constant 0 : i32
    %c0_i32_1 = arith.constant 0 : i32
    return %c0_i32, %c0_i32_0 : i32, i32
  }
  func.func @transform_6(%arg0: i32) -> (i32, i32) {
    %c0_i32 = arith.constant 0 : i32
    %c0_i32_0 = arith.constant 0 : i32
    return %arg0, %c0_i32 : i32, i32
  }
  func.func @transform_7(%arg0: i32) -> (i32, i32) {
    %c0_i32 = arith.constant 0 : i32
    %c0_i32_0 = arith.constant 0 : i32
    return %arg0, %c0_i32 : i32, i32
  }
}

module attributes {stable_mosaic.version = 11 : i64} {
  func.func @_head_kernel(%arg0: i32, %arg1: memref<2x64xf32, #tpu.memory_space<vmem>>, %arg2: memref<2x64xf32, #tpu.memory_space<vmem>>, %arg3: memref<2x64xf32, #tpu.memory_space<vmem>>, %arg4: memref<64x32xf32, #tpu.memory_space<vmem>>, %arg5: memref<1x32xf32, #tpu.memory_space<vmem>>, %arg6: memref<32x32xf32, #tpu.memory_space<vmem>>, %arg7: memref<1x32xf32, #tpu.memory_space<vmem>>, %arg8: memref<32x4xf32, #tpu.memory_space<vmem>>, %arg9: memref<1x4xf32, #tpu.memory_space<vmem>>, %arg10: memref<2x4xf32, #tpu.memory_space<vmem>>, %arg11: memref<2x64xf32, #tpu.memory_space<vmem>>) attributes {dimension_semantics = [#tpu.dimension_semantics<parallel>], iteration_bounds = array<i64: 1>, scalar_prefetch = 0 : i64, scratch_operands = 0 : i64, tpu.core_type = #tpu.core_type<tc>, window_params = [{transform_indices = @transform_0, window_bounds = array<i64: 2, 64>}, {transform_indices = @transform_1, window_bounds = array<i64: 2, 64>}, {transform_indices = @transform_2, window_bounds = array<i64: 2, 64>}, {pipeline_mode = #tpu.pipeline_mode<synchronous>, transform_indices = @transform_3, window_bounds = array<i64: 64, 32>}, {pipeline_mode = #tpu.pipeline_mode<synchronous>, transform_indices = @transform_4, window_bounds = array<i64: 1, 32>}, {pipeline_mode = #tpu.pipeline_mode<synchronous>, transform_indices = @transform_5, window_bounds = array<i64: 32, 32>}, {pipeline_mode = #tpu.pipeline_mode<synchronous>, transform_indices = @transform_6, window_bounds = array<i64: 1, 32>}, {pipeline_mode = #tpu.pipeline_mode<synchronous>, transform_indices = @transform_7, window_bounds = array<i64: 32, 4>}, {pipeline_mode = #tpu.pipeline_mode<synchronous>, transform_indices = @transform_8, window_bounds = array<i64: 1, 4>}, {transform_indices = @transform_9, window_bounds = array<i64: 2, 4>}, {transform_indices = @transform_10, window_bounds = array<i64: 2, 64>}]} {
    %c0 = arith.constant 0 : index
    %c0_0 = arith.constant 0 : index
    %0 = vector.load %arg1[%c0, %c0_0] : memref<2x64xf32, #tpu.memory_space<vmem>>, vector<2x64xf32>
    %cst = arith.constant 0.000000e+00 : f32
    %1 = vector.broadcast %cst : f32 to vector<2x64xf32>
    %2 = arith.maximumf %0, %1 : vector<2x64xf32>
    %c0_1 = arith.constant 0 : index
    %c0_2 = arith.constant 0 : index
    %3 = vector.load %arg2[%c0_1, %c0_2] : memref<2x64xf32, #tpu.memory_space<vmem>>, vector<2x64xf32>
    %cst_3 = arith.constant 0.000000e+00 : f32
    %4 = vector.broadcast %cst_3 : f32 to vector<2x64xf32>
    %5 = arith.maximumf %3, %4 : vector<2x64xf32>
    %6 = arith.addf %2, %5 : vector<2x64xf32>
    %c0_4 = arith.constant 0 : index
    %c0_5 = arith.constant 0 : index
    %7 = vector.load %arg3[%c0_4, %c0_5] : memref<2x64xf32, #tpu.memory_space<vmem>>, vector<2x64xf32>
    %cst_6 = arith.constant 0.000000e+00 : f32
    %8 = vector.broadcast %cst_6 : f32 to vector<2x64xf32>
    %9 = arith.maximumf %7, %8 : vector<2x64xf32>
    %10 = arith.addf %6, %9 : vector<2x64xf32>
    %c0_7 = arith.constant 0 : index
    %c0_8 = arith.constant 0 : index
    %11 = vector.load %arg11[%c0_7, %c0_8] : memref<2x64xf32, #tpu.memory_space<vmem>>, vector<2x64xf32>
    tpu.vector_store %arg11[%c0_7, %c0_8], %10 {strides = array<i32>} : memref<2x64xf32, #tpu.memory_space<vmem>>, vector<2x64xf32>,
    %c0_9 = arith.constant 0 : index
    %c0_10 = arith.constant 0 : index
    %12 = vector.load %arg4[%c0_9, %c0_10] : memref<64x32xf32, #tpu.memory_space<vmem>>, vector<64x32xf32>
    %cst_11 = arith.constant dense<0.000000e+00> : vector<2x32xf32>
    %13 = tpu.matmul %10, %12, %cst_11 {dimension_numbers = #tpu.dot_dimension_numbers<[1], [0], [0], [1], [0, 0, 1, 1], [], []>} : vector<2x64xf32>, vector<64x32xf32>, vector<2x32xf32> -> vector<2x32xf32>
    %c0_12 = arith.constant 0 : index
    %c0_13 = arith.constant 0 : index
    %14 = vector.load %arg5[%c0_12, %c0_13] : memref<1x32xf32, #tpu.memory_space<vmem>>, vector<1x32xf32>
    %15 = vector.broadcast %14 : vector<1x32xf32> to vector<2x32xf32>
    %16 = arith.addf %13, %15 : vector<2x32xf32>
    %cst_14 = arith.constant 0.000000e+00 : f32
    %17 = vector.broadcast %cst_14 : f32 to vector<2x32xf32>
    %18 = arith.maximumf %16, %17 : vector<2x32xf32>
    %c0_15 = arith.constant 0 : index
    %c0_16 = arith.constant 0 : index
    %19 = vector.load %arg6[%c0_15, %c0_16] : memref<32x32xf32, #tpu.memory_space<vmem>>, vector<32x32xf32>
    %cst_17 = arith.constant dense<0.000000e+00> : vector<2x32xf32>
    %20 = tpu.matmul %18, %19, %cst_17 {dimension_numbers = #tpu.dot_dimension_numbers<[1], [0], [0], [1], [0, 0, 1, 1], [], []>} : vector<2x32xf32>, vector<32x32xf32>, vector<2x32xf32> -> vector<2x32xf32>
    %c0_18 = arith.constant 0 : index
    %c0_19 = arith.constant 0 : index
    %21 = vector.load %arg7[%c0_18, %c0_19] : memref<1x32xf32, #tpu.memory_space<vmem>>, vector<1x32xf32>
    %22 = vector.broadcast %21 : vector<1x32xf32> to vector<2x32xf32>
    %23 = arith.addf %20, %22 : vector<2x32xf32>
    %c0_20 = arith.constant 0 : index
    %c0_21 = arith.constant 0 : index
    %24 = vector.load %arg8[%c0_20, %c0_21] : memref<32x4xf32, #tpu.memory_space<vmem>>, vector<32x4xf32>
    %cst_22 = arith.constant dense<0.000000e+00> : vector<2x4xf32>
    %25 = tpu.matmul %23, %24, %cst_22 {dimension_numbers = #tpu.dot_dimension_numbers<[1], [0], [0], [1], [0, 0, 1, 1], [], []>} : vector<2x32xf32>, vector<32x4xf32>, vector<2x4xf32> -> vector<2x4xf32>
    %c0_23 = arith.constant 0 : index
    %c0_24 = arith.constant 0 : index
    %26 = vector.load %arg9[%c0_23, %c0_24] : memref<1x4xf32, #tpu.memory_space<vmem>>, vector<1x4xf32>
    %27 = vector.broadcast %26 : vector<1x4xf32> to vector<2x4xf32>
    %28 = arith.addf %25, %27 : vector<2x4xf32>
    %cst_25 = arith.constant dense<0xFF800000> : vector<2xf32>
    %29 = vector.multi_reduction <maximumf>, %28, %cst_25 [1] : vector<2x4xf32> to vector<2xf32>
    %30 = vector.shape_cast %29 : vector<2xf32> to vector<2x1xf32>
    %31 = vector.broadcast %30 : vector<2x1xf32> to vector<2x4xf32>
    %32 = arith.subf %28, %31 : vector<2x4xf32>
    %33 = math.exp %32 : vector<2x4xf32>
    %cst_26 = arith.constant dense<0.000000e+00> : vector<2xf32>
    %34 = vector.multi_reduction <add>, %33, %cst_26 [1] : vector<2x4xf32> to vector<2xf32>
    %35 = vector.shape_cast %34 : vector<2xf32> to vector<2x1xf32>
    %36 = math.log %35 : vector<2x1xf32>
    %37 = vector.broadcast %36 : vector<2x1xf32> to vector<2x4xf32>
    %38 = arith.subf %32, %37 : vector<2x4xf32>
    %c0_27 = arith.constant 0 : index
    %c0_28 = arith.constant 0 : index
    %39 = vector.load %arg10[%c0_27, %c0_28] : memref<2x4xf32, #tpu.memory_space<vmem>>, vector<2x4xf32>
    tpu.vector_store %arg10[%c0_27, %c0_28], %38 {strides = array<i32>} : memref<2x4xf32, #tpu.memory_space<vmem>>, vector<2x4xf32>,
    return
  }
  func.func @transform_0(%arg0: i32) -> (i32, i32) {
    %c0_i32 = arith.constant 0 : i32
    %c0_i32_0 = arith.constant 0 : i32
    return %arg0, %c0_i32 : i32, i32
  }
  func.func @transform_1(%arg0: i32) -> (i32, i32) {
    %c0_i32 = arith.constant 0 : i32
    %c0_i32_0 = arith.constant 0 : i32
    return %arg0, %c0_i32 : i32, i32
  }
  func.func @transform_2(%arg0: i32) -> (i32, i32) {
    %c0_i32 = arith.constant 0 : i32
    %c0_i32_0 = arith.constant 0 : i32
    return %arg0, %c0_i32 : i32, i32
  }
  func.func @transform_3(%arg0: i32) -> (i32, i32) {
    %c0_i32 = arith.constant 0 : i32
    %c0_i32_0 = arith.constant 0 : i32
    %c0_i32_1 = arith.constant 0 : i32
    return %c0_i32, %c0_i32_0 : i32, i32
  }
  func.func @transform_4(%arg0: i32) -> (i32, i32) {
    %c0_i32 = arith.constant 0 : i32
    %c0_i32_0 = arith.constant 0 : i32
    %c0_i32_1 = arith.constant 0 : i32
    return %c0_i32, %c0_i32_0 : i32, i32
  }
  func.func @transform_5(%arg0: i32) -> (i32, i32) {
    %c0_i32 = arith.constant 0 : i32
    %c0_i32_0 = arith.constant 0 : i32
    %c0_i32_1 = arith.constant 0 : i32
    return %c0_i32, %c0_i32_0 : i32, i32
  }
  func.func @transform_6(%arg0: i32) -> (i32, i32) {
    %c0_i32 = arith.constant 0 : i32
    %c0_i32_0 = arith.constant 0 : i32
    %c0_i32_1 = arith.constant 0 : i32
    return %c0_i32, %c0_i32_0 : i32, i32
  }
  func.func @transform_7(%arg0: i32) -> (i32, i32) {
    %c0_i32 = arith.constant 0 : i32
    %c0_i32_0 = arith.constant 0 : i32
    %c0_i32_1 = arith.constant 0 : i32
    return %c0_i32, %c0_i32_0 : i32, i32
  }
  func.func @transform_8(%arg0: i32) -> (i32, i32) {
    %c0_i32 = arith.constant 0 : i32
    %c0_i32_0 = arith.constant 0 : i32
    %c0_i32_1 = arith.constant 0 : i32
    return %c0_i32, %c0_i32_0 : i32, i32
  }
  func.func @transform_9(%arg0: i32) -> (i32, i32) {
    %c0_i32 = arith.constant 0 : i32
    %c0_i32_0 = arith.constant 0 : i32
    return %arg0, %c0_i32 : i32, i32
  }
  func.func @transform_10(%arg0: i32) -> (i32, i32) {
    %c0_i32 = arith.constant 0 : i32
    %c0_i32_0 = arith.constant 0 : i32
    return %arg0, %c0_i32 : i32, i32
  }
}

</mosaic_0001>

<llo_original>
// kernel: forward.4
$region0: #{forward.4}
  #allocation0 [shape = 'u32[]', space=smem, size = 0x4, offset = 0x4, fixed_abs, tag = 'smem constant byte address 0x4 - core index']
  #allocation1 [shape = 'u32[144,128]{1,0:T(1,128)}', space=vmem, size = 0x12000, scoped, tag = 'internal scratch']
  %s0 = inlined_call_operand.vmem [shape: f32[2,16,16], index: 0, kind: input, shape index: {}]
  %s1 = inlined_call_operand.hbm [shape: f32[2,16,16], index: 1, kind: input, shape index: {}]
  %s2 = inlined_call_operand.vmem [shape: f32[16,32], index: 2, kind: input, shape index: {}]
  %s3 = inlined_call_operand.vmem [shape: f32[1,32], index: 3, kind: input, shape index: {}]
  %s4 = inlined_call_operand.vmem [shape: f32[2,16,32], index: 4, kind: output, shape index: {0}]
  %s5 = inlined_call_operand.vmem [shape: f32[2,16], index: 5, kind: output, shape index: {1}]
  %6 = xla_tuple %s4, %s5
  %s7 = sld [smem:[#allocation0]]
  $region38: #{forward.4} parent=0
    _
  %s9 = ssub.s32 1, %s7
  %s10 = scalar_select 0, %s9, %s7
  $region1: #{forward.4} parent=0
    #allocation2 [shape = 'u8[16384]{0}', space=vmem, size = 0x4000, scoped, tag = 'input window, operand 1, single buffered']
    #allocation3 [shape = 's32[1]{0}', space=sflag, size = 0x4, scoped, tag = 'scoped memory for forward.4']
    %11 = vsyncpa [#allocation3], 0
    // Predicated region
    $region2: #{forward.4} parent=1 // pred_check
      _
    $region3: #{forward.4} parent=1 // pred_check_branch
      %13 = sbr.rel (0) target = $region5
    $region4: #{forward.4} parent=1 // pred_region
      _
    $region5: #{forward.4} parent=1 // pred_fallthru
      _
    // Predicated region
    $region6: #{forward.4} parent=1 // pred_check
      _
    $region7: #{forward.4} parent=1 // pred_check_branch
      %15 = sbr.rel (0) target = $region9
    $region8: #{forward.4} parent=1 // pred_region
      %s17 = ssub.s32 512, 512
      %18 = vsyncadd [#allocation3], %s17
      %s19 = sshll.u32 [#allocation2], 4
      %s20 = int_to_ptr.vmem [resolvable:$true] %s19
      %25 = dma.hbm_to_vmem [thread:$0]  %s1, 512, %s20, [#allocation3], 128, 128, 8
    $region9: #{forward.4} parent=1 // pred_fallthru
      _
    // Predicated region
    $region10: #{forward.4} parent=1 // pred_check
      _
    $region11: #{forward.4} parent=1 // pred_check_branch
      %27 = sbr.rel (0) target = $region13
    $region12: #{forward.4} parent=1 // pred_region
      _
    $region13: #{forward.4} parent=1 // pred_fallthru
      _
    // Predicated region
    $region14: #{forward.4} parent=1 // pred_check
      _
    $region15: #{forward.4} parent=1 // pred_check_branch
      %29 = sbr.rel (0) target = $region17
    $region16: #{forward.4} parent=1 // pred_region
      _
    $region17: #{forward.4} parent=1 // pred_fallthru
      _
    // Predicated region
    $region18: #{forward.4} parent=1 // pred_check
      _
    $region19: #{forward.4} parent=1 // pred_check_branch
      %31 = sbr.rel (0) target = $region21
    $region20: #{forward.4} parent=1 // pred_region
      %32 = dma.done [#allocation3], 512
    $region21: #{forward.4} parent=1 // pred_fallthru
      _
    %v33 = vld [vmem:[%s0] sm:$0xff]
    %v34 = vld [vmem:[%s0 + $0x8] sm:$0xff]
    %v35 = vld [vmem:[%s0 + $0x10] sm:$0xff]
    %v36 = vld [vmem:[%s0 + $0x18] sm:$0xff]
    %v37 = vlaneseq
    %v38 = vshrl.u32 %v37, 7
    %v39 = vadd.s32 %v38, 8
    %v40 = vlaneseq
    %v41 = vand.u32 %v40, 127
    %vm42 = vcmp.eq.s32.totalorder %v38, %v41
    %vm43 = vcmp.eq.s32.totalorder %v39, %v41
    %v44 = vld [vmem:[#allocation2] sm:$0xff]
    %v45 = vld [vmem:[#allocation2 + $0x8] sm:$0xff]
    %v46 = vld [vmem:[#allocation2 + $0x10] sm:$0xff]
    %v47 = vld [vmem:[#allocation2 + $0x18] sm:$0xff]
    %v48 = vld [vmem:[%s2] sm:$0xff]
    %v49 = vld [vmem:[%s2 + $0x8] sm:$0xff]
    %vm50 = vcmask 130048
    %v52 = vsel %vm50, %v44, 0
    %v55 = vsel %vm50, %v45, 0
    %v58 = vsel %vm50, %v46, 0
    %v61 = vsel %vm50, %v47, 0
    %63 = vmatprep.subr.mxu0 0.0
    %64 = vmatpush1.msra.mxu0 %v48
    %65 = vmatprep.subr.mxu0 0.0
    %66 = vmatpush1.msra.mxu0 %v49
    %67 = vmatprep.subr.mxu0 0.0
    %68 = vmatpush1.msra.mxu0 0.0
    %69 = vmatprep.subr.mxu0 0.0
    %70 = vmatpush1.msra.mxu0 0.0
    %71 = vmatprep.subr.mxu0 0.0
    %72 = vmatpush1.msra.mxu0 0.0
    %73 = vmatprep.subr.mxu0 0.0
    %74 = vmatpush1.msra.mxu0 0.0
    %75 = vmatprep.subr.mxu0 0.0
    %76 = vmatpush1.msra.mxu0 0.0
    %77 = vmatprep.subr.mxu0 0.0
    %78 = vmatpush1.msra.mxu0 0.0
    %79 = vmatprep.subr.mxu0 0.0
    %80 = vmatpush1.msra.mxu0 0.0
    %81 = vmatprep.subr.mxu0 0.0
    %82 = vmatpush1.msra.mxu0 0.0
    %83 = vmatprep.subr.mxu0 0.0
    %84 = vmatpush1.msra.mxu0 0.0
    %85 = vmatprep.subr.mxu0 0.0
    %86 = vmatpush1.msra.mxu0 0.0
    %87 = vmatprep.subr.mxu0 0.0
    %88 = vmatpush1.msra.mxu0 0.0
    %89 = vmatprep.subr.mxu0 0.0
    %90 = vmatpush1.msra.mxu0 0.0
    %91 = vmatprep.subr.mxu0 0.0
    %92 = vmatpush1.msra.mxu0 0.0
    %93 = vmatprep.subr.mxu0 0.0
    %94 = vmatpush1.msra.mxu0 0.0
    %95 = vmatprep.subr.mxu0 0.0
    %96 = vmatpush1.msra.mxu0 0.0
    %97 = vmatprep.subr.mxu0 0.0
    %98 = vmatpush1.msra.mxu0 0.0
    %99 = vmatprep.subr.mxu0 0.0
    %100 = vmatpush1.msra.mxu0 0.0
    %101 = vmatprep.subr.mxu0 0.0
    %102 = vmatpush1.msra.mxu0 0.0
    %103 = vmatprep.subr.mxu0 0.0
    %104 = vmatpush1.msra.mxu0 0.0
    %105 = vmatprep.subr.mxu0 0.0
    %106 = vmatpush1.msra.mxu0 0.0
    %107 = vmatprep.subr.mxu0 0.0
    %108 = vmatpush1.msra.mxu0 0.0
    %109 = vmatprep.subr.mxu0 0.0
    %110 = vmatpush1.msra.mxu0 0.0
    %111 = vmatprep.subr.mxu0 0.0
    %112 = vmatpush1.msra.mxu0 0.0
    %113 = vmatprep.subr.mxu0 0.0
    %114 = vmatpush1.msra.mxu0 0.0
    %115 = vmatprep.subr.mxu0 0.0
    %116 = vmatpush1.msra.mxu0 0.0
    %117 = vmatprep.subr.mxu0 0.0
    %118 = vmatpush1.msra.mxu0 0.0
    %119 = vmatprep.subr.mxu0 0.0
    %120 = vmatpush1.msra.mxu0 0.0
    %121 = vmatprep.subr.mxu0 0.0
    %122 = vmatpush1.msra.mxu0 0.0
    %123 = vmatprep.subr.mxu0 0.0
    %124 = vmatpush1.msra.mxu0 0.0
    %125 = vmatprep.subr.mxu0 0.0
    %126 = vmatpush1.msra.mxu0 0.0
    %127 = vmatprep.mubr.f32.mxu0 0.0
    %128 = vmatmul.mubr.f32.gmra.mrb[0].mxu0 %v52
    %v129 = vpop.f32.mrb[0].mxu0
    %v130 = vadd.f32 0.0, %v129
    %v131 = vpop.f32.mrb[0].mxu0
    %132 = vmatprep.mubr.f32.mxu0 0.0
    %133 = vmatmul.mubr.f32.gmra.mrb[0].mxu0 %v55
    %v134 = vpop.f32.mrb[0].mxu0
    %v135 = vadd.f32 0.0, %v134
    %v136 = vpop.f32.mrb[0].mxu0
    %137 = vmatprep.mubr.f32.mxu0 0.0
    %138 = vmatmul.mubr.f32.gmra.mrb[0].mxu0 %v58
    %v139 = vpop.f32.mrb[0].mxu0
    %v140 = vadd.f32 0.0, %v139
    %v141 = vpop.f32.mrb[0].mxu0
    %142 = vmatprep.mubr.f32.mxu0 0.0
    %143 = vmatmul.mubr.f32.gmra.mrb[0].mxu0 %v61
    %v144 = vpop.f32.mrb[0].mxu0
    %v145 = vadd.f32 0.0, %v144
    %v146 = vpop.f32.mrb[0].mxu0
    %147 = vdwg.mxu0
    %v148 = vld [vmem:[%s3] sm:$0x1]
    %vm149 = vcmp.eq.f32.partialorder %v33, 0.0
    %vm150 = vcmp.eq.f32.partialorder %v34, 0.0
    %vm151 = vcmp.eq.f32.partialorder %v35, 0.0
    %vm152 = vcmp.eq.f32.partialorder %v36, 0.0
    %v153 = vsel %vm42, 1, 0
    %v154 = vsel %vm43, 1, 0
    %vm155 = vcmp.eq.s32.totalorder %v153, 1
    %vm156 = vcmp.eq.s32.totalorder %v154, 1
    %vm157 = vmand %vm155, %vm149
    %vm158 = vmand %vm156, %vm150
    %vm159 = vmand %vm155, %vm151
    %vm160 = vmand %vm156, %vm152
    %v161 = vsel %vm157, 1.0, %v33
    %v162 = vsel %vm158, 1.0, %v34
    %v163 = vsel %vm159, 1.0, %v35
    %v164 = vsel %vm160, 1.0, %v36
    %v165 = vsel %vm50, %v161, 0.0
    %166 = vadd.xlane.f32.xlu0 %v165
    %v167 = vpop.xlane.xlu0 %166
    %v168 = vsel %vm50, %v162, 0.0
    %169 = vadd.xlane.f32.xlu0 %v168
    %v170 = vpop.xlane.xlu0 %169
    %v171 = vsel %vm50, %v163, 0.0
    %172 = vadd.xlane.f32.xlu0 %v171
    %v173 = vpop.xlane.xlu0 %172
    %v174 = vsel %vm50, %v164, 0.0
    %175 = vadd.xlane.f32.xlu0 %v174
    %v176 = vpop.xlane.xlu0 %175
    %vm177 = vcmp.gt.f32.partialorder %v167, 0.0
    %vm178 = vcmp.gt.f32.partialorder %v170, 0.0
    %vm179 = vcmp.gt.f32.partialorder %v173, 0.0
    %vm180 = vcmp.gt.f32.partialorder %v176, 0.0
    %v181 = vrsqrt.pop %v167
    %v182 = vrsqrt.pop %v170
    %v183 = vrsqrt.pop %v173
    %v184 = vrsqrt.pop %v176
    %v185 = vsel %vm177, %v181, 0.0
    %v186 = vsel %vm178, %v182, 0.0
    %v187 = vsel %vm179, %v183, 0.0
    %v188 = vsel %vm180, %v184, 0.0
    %189 = vxpose.xlu0.b32.start [1/16] %v161, 128
    %190 = vxpose.xlu0.b32.cont [2/16] %v162, 128
    %191 = vxpose.xlu0.b32.cont [3/16] 0.0, 128
    %192 = vxpose.xlu0.b32.cont [4/16] 0.0, 128
    %193 = vxpose.xlu0.b32.cont [5/16] 0.0, 128
    %194 = vxpose.xlu0.b32.cont [6/16] 0.0, 128
    %195 = vxpose.xlu0.b32.cont [7/16] 0.0, 128
    %196 = vxpose.xlu0.b32.cont [8/16] 0.0, 128
    %197 = vxpose.xlu0.b32.cont [9/16] 0.0, 128
    %198 = vxpose.xlu0.b32.cont [10/16] 0.0, 128
    %199 = vxpose.xlu0.b32.cont [11/16] 0.0, 128
    %200 = vxpose.xlu0.b32.cont [12/16] 0.0, 128
    %201 = vxpose.xlu0.b32.cont [13/16] 0.0, 128
    %202 = vxpose.xlu0.b32.cont [14/16] 0.0, 128
    %203 = vxpose.xlu0.b32.cont [15/16] 0.0, 128
    %204 = vxpose.xlu0.b32.end [16/16] 0.0, 128
    %v205 = vpop.trf.xlu0
    %v206 = vpop.trf.xlu0
    %v207 = vpop.trf.xlu0
    %v208 = vpop.trf.xlu0
    %v209 = vpop.trf.xlu0
    %v210 = vpop.trf.xlu0
    %v211 = vpop.trf.xlu0
    %v212 = vpop.trf.xlu0
    %v213 = vpop.trf.xlu0
    %v214 = vpop.trf.xlu0
    %v215 = vpop.trf.xlu0
    %v216 = vpop.trf.xlu0
    %v217 = vpop.trf.xlu0
    %v218 = vpop.trf.xlu0
    %v219 = vpop.trf.xlu0
    %v220 = vpop.trf.xlu0
    %221 = vxpose.xlu0.b32.start [1/16] %v163, 128
    %222 = vxpose.xlu0.b32.cont [2/16] %v164, 128
    %223 = vxpose.xlu0.b32.cont [3/16] 0.0, 128
    %224 = vxpose.xlu0.b32.cont [4/16] 0.0, 128
    %225 = vxpose.xlu0.b32.cont [5/16] 0.0, 128
    %226 = vxpose.xlu0.b32.cont [6/16] 0.0, 128
    %227 = vxpose.xlu0.b32.cont [7/16] 0.0, 128
    %228 = vxpose.xlu0.b32.cont [8/16] 0.0, 128
    %229 = vxpose.xlu0.b32.cont [9/16] 0.0, 128
    %230 = vxpose.xlu0.b32.cont [10/16] 0.0, 128
    %231 = vxpose.xlu0.b32.cont [11/16] 0.0, 128
    %232 = vxpose.xlu0.b32.cont [12/16] 0.0, 128
    %233 = vxpose.xlu0.b32.cont [13/16] 0.0, 128
    %234 = vxpose.xlu0.b32.cont [14/16] 0.0, 128
    %235 = vxpose.xlu0.b32.cont [15/16] 0.0, 128
    %236 = vxpose.xlu0.b32.end [16/16] 0.0, 128
    %v237 = vpop.trf.xlu0
    %v238 = vpop.trf.xlu0
    %v239 = vpop.trf.xlu0
    %v240 = vpop.trf.xlu0
    %v241 = vpop.trf.xlu0
    %v242 = vpop.trf.xlu0
    %v243 = vpop.trf.xlu0
    %v244 = vpop.trf.xlu0
    %v245 = vpop.trf.xlu0
    %v246 = vpop.trf.xlu0
    %v247 = vpop.trf.xlu0
    %v248 = vpop.trf.xlu0
    %v249 = vpop.trf.xlu0
    %v250 = vpop.trf.xlu0
    %v251 = vpop.trf.xlu0
    %v252 = vpop.trf.xlu0
    %v253 = vmul.f32 %v185, %v130
    %v254 = vmul.f32 %v186, %v135
    %v255 = vmul.f32 %v187, %v140
    %v256 = vmul.f32 %v188, %v145
    %v258 = vsel %vm50, %v205, 0
    %v261 = vsel %vm50, %v206, 0
    %263 = vmatprep.subr.mxu0 0.0
    %264 = vmatpush1.msra.mxu0 %v253
    %265 = vmatprep.subr.mxu0 0.0
    %266 = vmatpush1.msra.mxu0 %v254
    %267 = vmatprep.subr.mxu0 0.0
    %268 = vmatpush1.msra.mxu0 0.0
    %269 = vmatprep.subr.mxu0 0.0
    %270 = vmatpush1.msra.mxu0 0.0
    %271 = vmatprep.subr.mxu0 0.0
    %272 = vmatpush1.msra.mxu0 0.0
    %273 = vmatprep.subr.mxu0 0.0
    %274 = vmatpush1.msra.mxu0 0.0
    %275 = vmatprep.subr.mxu0 0.0
    %276 = vmatpush1.msra.mxu0 0.0
    %277 = vmatprep.subr.mxu0 0.0
    %278 = vmatpush1.msra.mxu0 0.0
    %279 = vmatprep.subr.mxu0 0.0
    %280 = vmatpush1.msra.mxu0 0.0
    %281 = vmatprep.subr.mxu0 0.0
    %282 = vmatpush1.msra.mxu0 0.0
    %283 = vmatprep.subr.mxu0 0.0
    %284 = vmatpush1.msra.mxu0 0.0
    %285 = vmatprep.subr.mxu0 0.0
    %286 = vmatpush1.msra.mxu0 0.0
    %287 = vmatprep.subr.mxu0 0.0
    %288 = vmatpush1.msra.mxu0 0.0
    %289 = vmatprep.subr.mxu0 0.0
    %290 = vmatpush1.msra.mxu0 0.0
    %291 = vmatprep.subr.mxu0 0.0
    %292 = vmatpush1.msra.mxu0 0.0
    %293 = vmatprep.subr.mxu0 0.0
    %294 = vmatpush1.msra.mxu0 0.0
    %295 = vmatprep.subr.mxu0 0.0
    %296 = vmatpush1.msra.mxu0 0.0
    %297 = vmatprep.subr.mxu0 0.0
    %298 = vmatpush1.msra.mxu0 0.0
    %299 = vmatprep.subr.mxu0 0.0
    %300 = vmatpush1.msra.mxu0 0.0
    %301 = vmatprep.subr.mxu0 0.0
    %302 = vmatpush1.msra.mxu0 0.0
    %303 = vmatprep.subr.mxu0 0.0
    %304 = vmatpush1.msra.mxu0 0.0
    %305 = vmatprep.subr.mxu0 0.0
    %306 = vmatpush1.msra.mxu0 0.0
    %307 = vmatprep.subr.mxu0 0.0
    %308 = vmatpush1.msra.mxu0 0.0
    %309 = vmatprep.subr.mxu0 0.0
    %310 = vmatpush1.msra.mxu0 0.0
    %311 = vmatprep.subr.mxu0 0.0
    %312 = vmatpush1.msra.mxu0 0.0
    %313 = vmatprep.subr.mxu0 0.0
    %314 = vmatpush1.msra.mxu0 0.0
    %315 = vmatprep.subr.mxu0 0.0
    %316 = vmatpush1.msra.mxu0 0.0
    %317 = vmatprep.subr.mxu0 0.0
    %318 = vmatpush1.msra.mxu0 0.0
    %319 = vmatprep.subr.mxu0 0.0
    %320 = vmatpush1.msra.mxu0 0.0
    %321 = vmatprep.subr.mxu0 0.0
    %322 = vmatpush1.msra.mxu0 0.0
    %323 = vmatprep.subr.mxu0 0.0
    %324 = vmatpush1.msra.mxu0 0.0
    %325 = vmatprep.subr.mxu0 0.0
    %326 = vmatpush1.msra.mxu0 0.0
    %327 = vmatprep.mubr.f32.mxu0 0.0
    %328 = vmatmul.mubr.f32.gmra.mrb[0].mxu0 %v258
    %v329 = vpop.f32.mrb[0].mxu0
    %v330 = vadd.f32 0.0, %v329
    %v331 = vpop.f32.mrb[0].mxu0
    %332 = vmatprep.mubr.f32.mxu0 0.0
    %333 = vmatmul.mubr.f32.gmra.mrb[0].mxu0 %v261
    %v334 = vpop.f32.mrb[0].mxu0
    %v335 = vadd.f32 0.0, %v334
    %v336 = vpop.f32.mrb[0].mxu0
    %337 = vdwg.mxu0
    %v339 = vsel %vm50, %v237, 0
    %v342 = vsel %vm50, %v238, 0
    %344 = vmatprep.subr.mxu0 0.0
    %345 = vmatpush1.msra.mxu0 %v255
    %346 = vmatprep.subr.mxu0 0.0
    %347 = vmatpush1.msra.mxu0 %v256
    %348 = vmatprep.subr.mxu0 0.0
    %349 = vmatpush1.msra.mxu0 0.0
    %350 = vmatprep.subr.mxu0 0.0
    %351 = vmatpush1.msra.mxu0 0.0
    %352 = vmatprep.subr.mxu0 0.0
    %353 = vmatpush1.msra.mxu0 0.0
    %354 = vmatprep.subr.mxu0 0.0
    %355 = vmatpush1.msra.mxu0 0.0
    %356 = vmatprep.subr.mxu0 0.0
    %357 = vmatpush1.msra.mxu0 0.0
    %358 = vmatprep.subr.mxu0 0.0
    %359 = vmatpush1.msra.mxu0 0.0
    %360 = vmatprep.subr.mxu0 0.0
    %361 = vmatpush1.msra.mxu0 0.0
    %362 = vmatprep.subr.mxu0 0.0
    %363 = vmatpush1.msra.mxu0 0.0
    %364 = vmatprep.subr.mxu0 0.0
    %365 = vmatpush1.msra.mxu0 0.0
    %366 = vmatprep.subr.mxu0 0.0
    %367 = vmatpush1.msra.mxu0 0.0
    %368 = vmatprep.subr.mxu0 0.0
    %369 = vmatpush1.msra.mxu0 0.0
    %370 = vmatprep.subr.mxu0 0.0
    %371 = vmatpush1.msra.mxu0 0.0
    %372 = vmatprep.subr.mxu0 0.0
    %373 = vmatpush1.msra.mxu0 0.0
    %374 = vmatprep.subr.mxu0 0.0
    %375 = vmatpush1.msra.mxu0 0.0
    %376 = vmatprep.subr.mxu0 0.0
    %377 = vmatpush1.msra.mxu0 0.0
    %378 = vmatprep.subr.mxu0 0.0
    %379 = vmatpush1.msra.mxu0 0.0
    %380 = vmatprep.subr.mxu0 0.0
    %381 = vmatpush1.msra.mxu0 0.0
    %382 = vmatprep.subr.mxu0 0.0
    %383 = vmatpush1.msra.mxu0 0.0
    %384 = vmatprep.subr.mxu0 0.0
    %385 = vmatpush1.msra.mxu0 0.0
    %386 = vmatprep.subr.mxu0 0.0
    %387 = vmatpush1.msra.mxu0 0.0
    %388 = vmatprep.subr.mxu0 0.0
    %389 = vmatpush1.msra.mxu0 0.0
    %390 = vmatprep.subr.mxu0 0.0
    %391 = vmatpush1.msra.mxu0 0.0
    %392 = vmatprep.subr.mxu0 0.0
    %393 = vmatpush1.msra.mxu0 0.0
    %394 = vmatprep.subr.mxu0 0.0
    %395 = vmatpush1.msra.mxu0 0.0
    %396 = vmatprep.subr.mxu0 0.0
    %397 = vmatpush1.msra.mxu0 0.0
    %398 = vmatprep.subr.mxu0 0.0
    %399 = vmatpush1.msra.mxu0 0.0
    %400 = vmatprep.subr.mxu0 0.0
    %401 = vmatpush1.msra.mxu0 0.0
    %402 = vmatprep.subr.mxu0 0.0
    %403 = vmatpush1.msra.mxu0 0.0
    %404 = vmatprep.subr.mxu0 0.0
    %405 = vmatpush1.msra.mxu0 0.0
    %406 = vmatprep.subr.mxu0 0.0
    %407 = vmatpush1.msra.mxu0 0.0
    %408 = vmatprep.mubr.f32.mxu0 0.0
    %409 = vmatmul.mubr.f32.gmra.mrb[0].mxu0 %v339
    %v410 = vpop.f32.mrb[0].mxu0
    %v411 = vadd.f32 0.0, %v410
    %v412 = vpop.f32.mrb[0].mxu0
    %413 = vmatprep.mubr.f32.mxu0 0.0
    %414 = vmatmul.mubr.f32.gmra.mrb[0].mxu0 %v342
    %v415 = vpop.f32.mrb[0].mxu0
    %v416 = vadd.f32 0.0, %v415
    %v417 = vpop.f32.mrb[0].mxu0
    %418 = vdwg.mxu0
    %v419 = vmul.f32 %v185, %v330
    %v420 = vmul.f32 %v186, %v335
    %v421 = vmul.f32 %v187, %v411
    %v422 = vmul.f32 %v188, %v416
    %v424 = vlaneseq
    %v425 = vshrl.u32 %v424, 7
    %v426 = vsub.s32 0, %v425
    %v427 = vrot.slane %v148, %v426
    %v429 = vadd.f32 %v419, %v427
    %v430 = vadd.f32 %v420, %v427
    %v431 = vadd.f32 %v421, %v427
    %v432 = vadd.f32 %v422, %v427
    %v433 = vmax.f32 %v429, 0.0
    %v434 = vmax.f32 %v430, 0.0
    %v435 = vmax.f32 %v431, 0.0
    %v436 = vmax.f32 %v432, 0.0
    %vm437 = vcmask 261120
    %438 = vst.msk [vmem:[%s4] sm:$0xff] %vm437, %v433
    %439 = vst.msk [vmem:[%s4 + $0x8] sm:$0xff] %vm437, %v434
    %440 = vst.msk [vmem:[%s4 + $0x10] sm:$0xff] %vm437, %v435
    %441 = vst.msk [vmem:[%s4 + $0x18] sm:$0xff] %vm437, %v436
    %v442 = vsel %vm155, 0.0, %v33
    %v443 = vsel %vm156, 0.0, %v34
    %v444 = vsel %vm155, 0.0, %v35
    %v445 = vsel %vm156, 0.0, %v36
    %v446 = vsel %vm50, %v442, 0.0
    %447 = vadd.xlane.f32.xlu0 %v446
    %v448 = vpop.xlane.xlu0 %447
    %v449 = vsel %vm50, %v443, 0.0
    %450 = vadd.xlane.f32.xlu0 %v449
    %v451 = vpop.xlane.xlu0 %450
    %v452 = vsel %vm50, %v444, 0.0
    %453 = vadd.xlane.f32.xlu0 %v452
    %v454 = vpop.xlane.xlu0 %453
    %v455 = vsel %vm50, %v445, 0.0
    %456 = vadd.xlane.f32.xlu0 %v455
    %v457 = vpop.xlane.xlu0 %456
    %vm458 = vcmp.gt.f32.partialorder %v448, 0.0
    %vm459 = vcmp.gt.f32.partialorder %v451, 0.0
    %vm460 = vcmp.gt.f32.partialorder %v454, 0.0
    %vm461 = vcmp.gt.f32.partialorder %v457, 0.0
    %v462 = vrsqrt.pop %v448
    %v463 = vrsqrt.pop %v451
    %v464 = vrsqrt.pop %v454
    %v465 = vrsqrt.pop %v457
    %v466 = vsel %vm458, %v462, 0.0
    %v467 = vsel %vm459, %v463, 0.0
    %v468 = vsel %vm460, %v464, 0.0
    %v469 = vsel %vm461, %v465, 0.0
    %470 = vxpose.xlu0.b32.start [1/16] %v442, 128
    %471 = vxpose.xlu0.b32.cont [2/16] %v443, 128
    %472 = vxpose.xlu0.b32.cont [3/16] 0.0, 128
    %473 = vxpose.xlu0.b32.cont [4/16] 0.0, 128
    %474 = vxpose.xlu0.b32.cont [5/16] 0.0, 128
    %475 = vxpose.xlu0.b32.cont [6/16] 0.0, 128
    %476 = vxpose.xlu0.b32.cont [7/16] 0.0, 128
    %477 = vxpose.xlu0.b32.cont [8/16] 0.0, 128
    %478 = vxpose.xlu0.b32.cont [9/16] 0.0, 128
    %479 = vxpose.xlu0.b32.cont [10/16] 0.0, 128
    %480 = vxpose.xlu0.b32.cont [11/16] 0.0, 128
    %481 = vxpose.xlu0.b32.cont [12/16] 0.0, 128
    %482 = vxpose.xlu0.b32.cont [13/16] 0.0, 128
    %483 = vxpose.xlu0.b32.cont [14/16] 0.0, 128
    %484 = vxpose.xlu0.b32.cont [15/16] 0.0, 128
    %485 = vxpose.xlu0.b32.end [16/16] 0.0, 128
    %v486 = vpop.trf.xlu0
    %v487 = vpop.trf.xlu0
    %v488 = vpop.trf.xlu0
    %v489 = vpop.trf.xlu0
    %v490 = vpop.trf.xlu0
    %v491 = vpop.trf.xlu0
    %v492 = vpop.trf.xlu0
    %v493 = vpop.trf.xlu0
    %v494 = vpop.trf.xlu0
    %v495 = vpop.trf.xlu0
    %v496 = vpop.trf.xlu0
    %v497 = vpop.trf.xlu0
    %v498 = vpop.trf.xlu0
    %v499 = vpop.trf.xlu0
    %v500 = vpop.trf.xlu0
    %v501 = vpop.trf.xlu0
    %502 = vxpose.xlu0.b32.start [1/16] %v444, 128
    %503 = vxpose.xlu0.b32.cont [2/16] %v445, 128
    %504 = vxpose.xlu0.b32.cont [3/16] 0.0, 128
    %505 = vxpose.xlu0.b32.cont [4/16] 0.0, 128
    %506 = vxpose.xlu0.b32.cont [5/16] 0.0, 128
    %507 = vxpose.xlu0.b32.cont [6/16] 0.0, 128
    %508 = vxpose.xlu0.b32.cont [7/16] 0.0, 128
    %509 = vxpose.xlu0.b32.cont [8/16] 0.0, 128
    %510 = vxpose.xlu0.b32.cont [9/16] 0.0, 128
    %511 = vxpose.xlu0.b32.cont [10/16] 0.0, 128
    %512 = vxpose.xlu0.b32.cont [11/16] 0.0, 128
    %513 = vxpose.xlu0.b32.cont [12/16] 0.0, 128
    %514 = vxpose.xlu0.b32.cont [13/16] 0.0, 128
    %515 = vxpose.xlu0.b32.cont [14/16] 0.0, 128
    %516 = vxpose.xlu0.b32.cont [15/16] 0.0, 128
    %517 = vxpose.xlu0.b32.end [16/16] 0.0, 128
    %v518 = vpop.trf.xlu0
    %v519 = vpop.trf.xlu0
    %v520 = vpop.trf.xlu0
    %v521 = vpop.trf.xlu0
    %v522 = vpop.trf.xlu0
    %v523 = vpop.trf.xlu0
    %v524 = vpop.trf.xlu0
    %v525 = vpop.trf.xlu0
    %v526 = vpop.trf.xlu0
    %v527 = vpop.trf.xlu0
    %v528 = vpop.trf.xlu0
    %v529 = vpop.trf.xlu0
    %v530 = vpop.trf.xlu0
    %v531 = vpop.trf.xlu0
    %v532 = vpop.trf.xlu0
    %v533 = vpop.trf.xlu0
    %v534 = vmul.f32 %v466, %v433
    %v535 = vmul.f32 %v467, %v434
    %v536 = vmul.f32 %v468, %v435
    %v537 = vmul.f32 %v469, %v436
    %v539 = vsel %vm50, %v486, 0
    %v542 = vsel %vm50, %v487, 0
    %544 = vmatprep.subr.mxu0 0.0
    %545 = vmatpush1.msra.mxu0 %v534
    %546 = vmatprep.subr.mxu0 0.0
    %547 = vmatpush1.msra.mxu0 %v535
    %548 = vmatprep.subr.mxu0 0.0
    %549 = vmatpush1.msra.mxu0 0.0
    %550 = vmatprep.subr.mxu0 0.0
    %551 = vmatpush1.msra.mxu0 0.0
    %552 = vmatprep.subr.mxu0 0.0
    %553 = vmatpush1.msra.mxu0 0.0
    %554 = vmatprep.subr.mxu0 0.0
    %555 = vmatpush1.msra.mxu0 0.0
    %556 = vmatprep.subr.mxu0 0.0
    %557 = vmatpush1.msra.mxu0 0.0
    %558 = vmatprep.subr.mxu0 0.0
    %559 = vmatpush1.msra.mxu0 0.0
    %560 = vmatprep.subr.mxu0 0.0
    %561 = vmatpush1.msra.mxu0 0.0
    %562 = vmatprep.subr.mxu0 0.0
    %563 = vmatpush1.msra.mxu0 0.0
    %564 = vmatprep.subr.mxu0 0.0
    %565 = vmatpush1.msra.mxu0 0.0
    %566 = vmatprep.subr.mxu0 0.0
    %567 = vmatpush1.msra.mxu0 0.0
    %568 = vmatprep.subr.mxu0 0.0
    %569 = vmatpush1.msra.mxu0 0.0
    %570 = vmatprep.subr.mxu0 0.0
    %571 = vmatpush1.msra.mxu0 0.0
    %572 = vmatprep.subr.mxu0 0.0
    %573 = vmatpush1.msra.mxu0 0.0
    %574 = vmatprep.subr.mxu0 0.0
    %575 = vmatpush1.msra.mxu0 0.0
    %576 = vmatprep.subr.mxu0 0.0
    %577 = vmatpush1.msra.mxu0 0.0
    %578 = vmatprep.subr.mxu0 0.0
    %579 = vmatpush1.msra.mxu0 0.0
    %580 = vmatprep.subr.mxu0 0.0
    %581 = vmatpush1.msra.mxu0 0.0
    %582 = vmatprep.subr.mxu0 0.0
    %583 = vmatpush1.msra.mxu0 0.0
    %584 = vmatprep.subr.mxu0 0.0
    %585 = vmatpush1.msra.mxu0 0.0
    %586 = vmatprep.subr.mxu0 0.0
    %587 = vmatpush1.msra.mxu0 0.0
    %588 = vmatprep.subr.mxu0 0.0
    %589 = vmatpush1.msra.mxu0 0.0
    %590 = vmatprep.subr.mxu0 0.0
    %591 = vmatpush1.msra.mxu0 0.0
    %592 = vmatprep.subr.mxu0 0.0
    %593 = vmatpush1.msra.mxu0 0.0
    %594 = vmatprep.subr.mxu0 0.0
    %595 = vmatpush1.msra.mxu0 0.0
    %596 = vmatprep.subr.mxu0 0.0
    %597 = vmatpush1.msra.mxu0 0.0
    %598 = vmatprep.subr.mxu0 0.0
    %599 = vmatpush1.msra.mxu0 0.0
    %600 = vmatprep.subr.mxu0 0.0
    %601 = vmatpush1.msra.mxu0 0.0
    %602 = vmatprep.subr.mxu0 0.0
    %603 = vmatpush1.msra.mxu0 0.0
    %604 = vmatprep.subr.mxu0 0.0
    %605 = vmatpush1.msra.mxu0 0.0
    %606 = vmatprep.subr.mxu0 0.0
    %607 = vmatpush1.msra.mxu0 0.0
    %608 = vmatprep.mubr.f32.mxu0 0.0
    %609 = vmatmul.mubr.f32.gmra.mrb[0].mxu0 %v539
    %v610 = vpop.f32.mrb[0].mxu0
    %v611 = vadd.f32 0.0, %v610
    %v612 = vpop.f32.mrb[0].mxu0
    %613 = vmatprep.mubr.f32.mxu0 0.0
    %614 = vmatmul.mubr.f32.gmra.mrb[0].mxu0 %v542
    %v615 = vpop.f32.mrb[0].mxu0
    %v616 = vadd.f32 0.0, %v615
    %v617 = vpop.f32.mrb[0].mxu0
    %618 = vdwg.mxu0
    %v620 = vsel %vm50, %v518, 0
    %v623 = vsel %vm50, %v519, 0
    %625 = vmatprep.subr.mxu0 0.0
    %626 = vmatpush1.msra.mxu0 %v536
    %627 = vmatprep.subr.mxu0 0.0
    %628 = vmatpush1.msra.mxu0 %v537
    %629 = vmatprep.subr.mxu0 0.0
    %630 = vmatpush1.msra.mxu0 0.0
    %631 = vmatprep.subr.mxu0 0.0
    %632 = vmatpush1.msra.mxu0 0.0
    %633 = vmatprep.subr.mxu0 0.0
    %634 = vmatpush1.msra.mxu0 0.0
    %635 = vmatprep.subr.mxu0 0.0
    %636 = vmatpush1.msra.mxu0 0.0
    %637 = vmatprep.subr.mxu0 0.0
    %638 = vmatpush1.msra.mxu0 0.0
    %639 = vmatprep.subr.mxu0 0.0
    %640 = vmatpush1.msra.mxu0 0.0
    %641 = vmatprep.subr.mxu0 0.0
    %642 = vmatpush1.msra.mxu0 0.0
    %643 = vmatprep.subr.mxu0 0.0
    %644 = vmatpush1.msra.mxu0 0.0
    %645 = vmatprep.subr.mxu0 0.0
    %646 = vmatpush1.msra.mxu0 0.0
    %647 = vmatprep.subr.mxu0 0.0
    %648 = vmatpush1.msra.mxu0 0.0
    %649 = vmatprep.subr.mxu0 0.0
    %650 = vmatpush1.msra.mxu0 0.0
    %651 = vmatprep.subr.mxu0 0.0
    %652 = vmatpush1.msra.mxu0 0.0
    %653 = vmatprep.subr.mxu0 0.0
    %654 = vmatpush1.msra.mxu0 0.0
    %655 = vmatprep.subr.mxu0 0.0
    %656 = vmatpush1.msra.mxu0 0.0
    %657 = vmatprep.subr.mxu0 0.0
    %658 = vmatpush1.msra.mxu0 0.0
    %659 = vmatprep.subr.mxu0 0.0
    %660 = vmatpush1.msra.mxu0 0.0
    %661 = vmatprep.subr.mxu0 0.0
    %662 = vmatpush1.msra.mxu0 0.0
    %663 = vmatprep.subr.mxu0 0.0
    %664 = vmatpush1.msra.mxu0 0.0
    %665 = vmatprep.subr.mxu0 0.0
    %666 = vmatpush1.msra.mxu0 0.0
    %667 = vmatprep.subr.mxu0 0.0
    %668 = vmatpush1.msra.mxu0 0.0
    %669 = vmatprep.subr.mxu0 0.0
    %670 = vmatpush1.msra.mxu0 0.0
    %671 = vmatprep.subr.mxu0 0.0
    %672 = vmatpush1.msra.mxu0 0.0
    %673 = vmatprep.subr.mxu0 0.0
    %674 = vmatpush1.msra.mxu0 0.0
    %675 = vmatprep.subr.mxu0 0.0
    %676 = vmatpush1.msra.mxu0 0.0
    %677 = vmatprep.subr.mxu0 0.0
    %678 = vmatpush1.msra.mxu0 0.0
    %679 = vmatprep.subr.mxu0 0.0
    %680 = vmatpush1.msra.mxu0 0.0
    %681 = vmatprep.subr.mxu0 0.0
    %682 = vmatpush1.msra.mxu0 0.0
    %683 = vmatprep.subr.mxu0 0.0
    %684 = vmatpush1.msra.mxu0 0.0
    %685 = vmatprep.subr.mxu0 0.0
    %686 = vmatpush1.msra.mxu0 0.0
    %687 = vmatprep.subr.mxu0 0.0
    %688 = vmatpush1.msra.mxu0 0.0
    %689 = vmatprep.mubr.f32.mxu0 0.0
    %690 = vmatmul.mubr.f32.gmra.mrb[0].mxu0 %v620
    %v691 = vpop.f32.mrb[0].mxu0
    %v692 = vadd.f32 0.0, %v691
    %v693 = vpop.f32.mrb[0].mxu0
    %694 = vmatprep.mubr.f32.mxu0 0.0
    %695 = vmatmul.mubr.f32.gmra.mrb[0].mxu0 %v623
    %v696 = vpop.f32.mrb[0].mxu0
    %v697 = vadd.f32 0.0, %v696
    %v698 = vpop.f32.mrb[0].mxu0
    %699 = vdwg.mxu0
    %v700 = vmul.f32 %v466, %v611
    %v701 = vmul.f32 %v467, %v616
    %v702 = vmul.f32 %v468, %v692
    %v703 = vmul.f32 %v469, %v697
    %v704 = vsub.f32 %v433, %v700
    %v705 = vsub.f32 %v434, %v701
    %v706 = vsub.f32 %v435, %v702
    %v707 = vsub.f32 %v436, %v703
    %v708 = vand.u32 2147483647, %v704
    %v709 = vand.u32 2147483647, %v705
    %v710 = vand.u32 2147483647, %v706
    %v711 = vand.u32 2147483647, %v707
    %v712 = vsel %vm437, %v708, 0.0
    %713 = vadd.xlane.f32.xlu0 %v712
    %v714 = vpop.xlane.xlu0 %713
    %v715 = vsel %vm437, %v709, 0.0
    %716 = vadd.xlane.f32.xlu0 %v715
    %v717 = vpop.xlane.xlu0 %716
    %v718 = vsel %vm437, %v710, 0.0
    %719 = vadd.xlane.f32.xlu0 %v718
    %v720 = vpop.xlane.xlu0 %719
    %v721 = vsel %vm437, %v711, 0.0
    %722 = vadd.xlane.f32.xlu0 %v721
    %v723 = vpop.xlane.xlu0 %722
    %v728 = vlaneseq
    %v729 = vshrl.u32 %v728, 7
    %v730 = vsub.s32 %v41, %v729
    %v731 = vrot.slane %v714, %v730
    %v732 = vadd.s32 %v41, 4294967288
    %v733 = vlaneseq
    %v734 = vshrl.u32 %v733, 7
    %v735 = vsub.s32 %v732, %v734
    %v736 = vrot.slane %v717, %v735
    %vm737 = vcmask 130112
    %v738 = vsel %vm737, %v736, %v731
    %v739 = vlaneseq
    %v740 = vshrl.u32 %v739, 7
    %v741 = vsub.s32 %v41, %v740
    %v742 = vrot.slane %v720, %v741
    %v743 = vlaneseq
    %v744 = vshrl.u32 %v743, 7
    %v745 = vsub.s32 %v732, %v744
    %v746 = vrot.slane %v723, %v745
    %v747 = vsel %vm737, %v746, %v742
    %vm748 = vcmask 1041409
    %v749 = vsel %vm748, %v747, %v738
    %vm751 = vcmask 123904
    %752 = vst.msk [vmem:[%s5] sm:$0x3] %vm751, %v749
    // Predicated region
    $region22: #{forward.4} parent=1 // pred_check
      _
    $region23: #{forward.4} parent=1 // pred_check_branch
      %754 = sbr.rel (0) target = $region25
    $region24: #{forward.4} parent=1 // pred_region
      _
    $region25: #{forward.4} parent=1 // pred_fallthru
      _
    // Predicated region
    $region26: #{forward.4} parent=1 // pred_check
      _
    $region27: #{forward.4} parent=1 // pred_check_branch
      %756 = sbr.rel (0) target = $region29
    $region28: #{forward.4} parent=1 // pred_region
      _
    $region29: #{forward.4} parent=1 // pred_fallthru
      _
    // Predicated region
    $region30: #{forward.4} parent=1 // pred_check
      _
    $region31: #{forward.4} parent=1 // pred_check_branch
      %758 = sbr.rel (0) target = $region33
    $region32: #{forward.4} parent=1 // pred_region
      _
    $region33: #{forward.4} parent=1 // pred_fallthru
      _
    // Predicated region
    $region34: #{forward.4} parent=1 // pred_check
      _
    $region35: #{forward.4} parent=1 // pred_check_branch
      %760 = sbr.rel (0) target = $region37
    $region36: #{forward.4} parent=1 // pred_region
      _
    $region37: #{forward.4} parent=1 // pred_fallthru
      _
    %761 = vsyncpa [#allocation3], 1

// kernel: forward.5
$region0: #{forward.5}
  #allocation0 [shape = 'u32[]', space=smem, size = 0x4, offset = 0x4, fixed_abs, tag = 'smem constant byte address 0x4 - core index']
  #allocation1 [shape = 'u32[144,128]{1,0:T(1,128)}', space=vmem, size = 0x12000, scoped, tag = 'internal scratch']
  %s0 = inlined_call_operand.vmem [shape: f32[2,8,16], index: 0, kind: input, shape index: {}]
  %s1 = inlined_call_operand.vmem [shape: f32[2,16,32], index: 1, kind: input, shape index: {}]
  %s2 = inlined_call_operand.vmem [shape: f32[2,16,16], index: 2, kind: input, shape index: {}]
  %s3 = inlined_call_operand.vmem [shape: f32[2,32], index: 3, kind: input, shape index: {}]
  %s4 = inlined_call_operand.vmem [shape: f32[32,32], index: 4, kind: input, shape index: {}]
  %s5 = inlined_call_operand.vmem [shape: f32[1,32], index: 5, kind: input, shape index: {}]
  %s6 = inlined_call_operand.vmem [shape: f32[2,8,8], index: 6, kind: output, shape index: {0}]
  %s7 = inlined_call_operand.vmem [shape: f32[2,8,32], index: 7, kind: output, shape index: {1}]
  %s8 = inlined_call_operand.vmem [shape: f32[2,8], index: 8, kind: output, shape index: {2}]
  %s9 = inlined_call_operand.vmem [shape: f32[2,64], index: 9, kind: output, shape index: {3}]
  %10 = xla_tuple %s6, %s7, %s8, %s9
  %s11 = sld [smem:[#allocation0]]
  $region58: #{forward.5} parent=0
    _
  %s13 = ssub.s32 1, %s11
  %s14 = scalar_select 0, %s13, %s11
  // Predicated region
  $region2: #{forward.5} parent=0 // pred_check
    _
  $region3: #{forward.5} parent=0 // pred_check_branch
    %16 = sbr.rel (0) target = $region5
  $region4: #{forward.5} parent=0 // pred_region
    _
  $region5: #{forward.5} parent=0 // pred_fallthru
    _
  // Predicated region
  $region6: #{forward.5} parent=0 // pred_check
    _
  $region7: #{forward.5} parent=0 // pred_check_branch
    %18 = sbr.rel (0) target = $region9
  $region8: #{forward.5} parent=0 // pred_region
    _
  $region9: #{forward.5} parent=0 // pred_fallthru
    _
  // Predicated region
  $region10: #{forward.5} parent=0 // pred_check
    _
  $region11: #{forward.5} parent=0 // pred_check_branch
    %20 = sbr.rel (0) target = $region13
  $region12: #{forward.5} parent=0 // pred_region
    _
  $region13: #{forward.5} parent=0 // pred_fallthru
    _
  // Predicated region
  $region14: #{forward.5} parent=0 // pred_check
    _
  $region15: #{forward.5} parent=0 // pred_check_branch
    %22 = sbr.rel (0) target = $region17
  $region16: #{forward.5} parent=0 // pred_region
    _
  $region17: #{forward.5} parent=0 // pred_fallthru
    _
  // Predicated region
  $region18: #{forward.5} parent=0 // pred_check
    _
  $region19: #{forward.5} parent=0 // pred_check_branch
    %24 = sbr.rel (0) target = $region21
  $region20: #{forward.5} parent=0 // pred_region
    _
  $region21: #{forward.5} parent=0 // pred_fallthru
    _
  // Predicated region
  $region22: #{forward.5} parent=0 // pred_check
    _
  $region23: #{forward.5} parent=0 // pred_check_branch
    %26 = sbr.rel (0) target = $region25
  $region24: #{forward.5} parent=0 // pred_region
    _
  $region25: #{forward.5} parent=0 // pred_fallthru
    _
  %v27 = vld [vmem:[%s0] sm:$0xff]
  %v28 = vld [vmem:[%s0 + $0x8] sm:$0xff]
  %v29 = vld [vmem:[%s1] sm:$0xff]
  %v30 = vld [vmem:[%s1 + $0x8] sm:$0xff]
  %v31 = vld [vmem:[%s1 + $0x10] sm:$0xff]
  %v32 = vld [vmem:[%s1 + $0x18] sm:$0xff]
  %vm33 = vcmask 130048
  %v35 = vsel %vm33, %v27, 0
  %37 = vmatprep.subr.mxu0 0.0
  %38 = vmatpush1.msra.mxu0 %v29
  %39 = vmatprep.subr.mxu0 0.0
  %40 = vmatpush1.msra.mxu0 %v30
  %41 = vmatprep.subr.mxu0 0.0
  %42 = vmatpush1.msra.mxu0 0.0
  %43 = vmatprep.subr.mxu0 0.0
  %44 = vmatpush1.msra.mxu0 0.0
  %45 = vmatprep.subr.mxu0 0.0
  %46 = vmatpush1.msra.mxu0 0.0
  %47 = vmatprep.subr.mxu0 0.0
  %48 = vmatpush1.msra.mxu0 0.0
  %49 = vmatprep.subr.mxu0 0.0
  %50 = vmatpush1.msra.mxu0 0.0
  %51 = vmatprep.subr.mxu0 0.0
  %52 = vmatpush1.msra.mxu0 0.0
  %53 = vmatprep.subr.mxu0 0.0
  %54 = vmatpush1.msra.mxu0 0.0
  %55 = vmatprep.subr.mxu0 0.0
  %56 = vmatpush1.msra.mxu0 0.0
  %57 = vmatprep.subr.mxu0 0.0
  %58 = vmatpush1.msra.mxu0 0.0
  %59 = vmatprep.subr.mxu0 0.0
  %60 = vmatpush1.msra.mxu0 0.0
  %61 = vmatprep.subr.mxu0 0.0
  %62 = vmatpush1.msra.mxu0 0.0
  %63 = vmatprep.subr.mxu0 0.0
  %64 = vmatpush1.msra.mxu0 0.0
  %65 = vmatprep.subr.mxu0 0.0
  %66 = vmatpush1.msra.mxu0 0.0
  %67 = vmatprep.subr.mxu0 0.0
  %68 = vmatpush1.msra.mxu0 0.0
  %69 = vmatprep.subr.mxu0 0.0
  %70 = vmatpush1.msra.mxu0 0.0
  %71 = vmatprep.subr.mxu0 0.0
  %72 = vmatpush1.msra.mxu0 0.0
  %73 = vmatprep.subr.mxu0 0.0
  %74 = vmatpush1.msra.mxu0 0.0
  %75 = vmatprep.subr.mxu0 0.0
  %76 = vmatpush1.msra.mxu0 0.0
  %77 = vmatprep.subr.mxu0 0.0
  %78 = vmatpush1.msra.mxu0 0.0
  %79 = vmatprep.subr.mxu0 0.0
  %80 = vmatpush1.msra.mxu0 0.0
  %81 = vmatprep.subr.mxu0 0.0
  %82 = vmatpush1.msra.mxu0 0.0
  %83 = vmatprep.subr.mxu0 0.0
  %84 = vmatpush1.msra.mxu0 0.0
  %85 = vmatprep.subr.mxu0 0.0
  %86 = vmatpush1.msra.mxu0 0.0
  %87 = vmatprep.subr.mxu0 0.0
  %88 = vmatpush1.msra.mxu0 0.0
  %89 = vmatprep.subr.mxu0 0.0
  %90 = vmatpush1.msra.mxu0 0.0
  %91 = vmatprep.subr.mxu0 0.0
  %92 = vmatpush1.msra.mxu0 0.0
  %93 = vmatprep.subr.mxu0 0.0
  %94 = vmatpush1.msra.mxu0 0.0
  %95 = vmatprep.subr.mxu0 0.0
  %96 = vmatpush1.msra.mxu0 0.0
  %97 = vmatprep.subr.mxu0 0.0
  %98 = vmatpush1.msra.mxu0 0.0
  %99 = vmatprep.subr.mxu0 0.0
  %100 = vmatpush1.msra.mxu0 0.0
  %101 = vmatprep.mubr.f32.mxu0 0.0
  %102 = vmatmul.mubr.f32.gmra.mrb[0].mxu0 %v35
  %v103 = vpop.f32.mrb[0].mxu0
  %v104 = vadd.f32 0.0, %v103
  %v105 = vpop.f32.mrb[0].mxu0
  %106 = vdwg.mxu0
  %v108 = vsel %vm33, %v28, 0
  %110 = vmatprep.subr.mxu0 0.0
  %111 = vmatpush1.msra.mxu0 %v31
  %112 = vmatprep.subr.mxu0 0.0
  %113 = vmatpush1.msra.mxu0 %v32
  %114 = vmatprep.subr.mxu0 0.0
  %115 = vmatpush1.msra.mxu0 0.0
  %116 = vmatprep.subr.mxu0 0.0
  %117 = vmatpush1.msra.mxu0 0.0
  %118 = vmatprep.subr.mxu0 0.0
  %119 = vmatpush1.msra.mxu0 0.0
  %120 = vmatprep.subr.mxu0 0.0
  %121 = vmatpush1.msra.mxu0 0.0
  %122 = vmatprep.subr.mxu0 0.0
  %123 = vmatpush1.msra.mxu0 0.0
  %124 = vmatprep.subr.mxu0 0.0
  %125 = vmatpush1.msra.mxu0 0.0
  %126 = vmatprep.subr.mxu0 0.0
  %127 = vmatpush1.msra.mxu0 0.0
  %128 = vmatprep.subr.mxu0 0.0
  %129 = vmatpush1.msra.mxu0 0.0
  %130 = vmatprep.subr.mxu0 0.0
  %131 = vmatpush1.msra.mxu0 0.0
  %132 = vmatprep.subr.mxu0 0.0
  %133 = vmatpush1.msra.mxu0 0.0
  %134 = vmatprep.subr.mxu0 0.0
  %135 = vmatpush1.msra.mxu0 0.0
  %136 = vmatprep.subr.mxu0 0.0
  %137 = vmatpush1.msra.mxu0 0.0
  %138 = vmatprep.subr.mxu0 0.0
  %139 = vmatpush1.msra.mxu0 0.0
  %140 = vmatprep.subr.mxu0 0.0
  %141 = vmatpush1.msra.mxu0 0.0
  %142 = vmatprep.subr.mxu0 0.0
  %143 = vmatpush1.msra.mxu0 0.0
  %144 = vmatprep.subr.mxu0 0.0
  %145 = vmatpush1.msra.mxu0 0.0
  %146 = vmatprep.subr.mxu0 0.0
  %147 = vmatpush1.msra.mxu0 0.0
  %148 = vmatprep.subr.mxu0 0.0
  %149 = vmatpush1.msra.mxu0 0.0
  %150 = vmatprep.subr.mxu0 0.0
  %151 = vmatpush1.msra.mxu0 0.0
  %152 = vmatprep.subr.mxu0 0.0
  %153 = vmatpush1.msra.mxu0 0.0
  %154 = vmatprep.subr.mxu0 0.0
  %155 = vmatpush1.msra.mxu0 0.0
  %156 = vmatprep.subr.mxu0 0.0
  %157 = vmatpush1.msra.mxu0 0.0
  %158 = vmatprep.subr.mxu0 0.0
  %159 = vmatpush1.msra.mxu0 0.0
  %160 = vmatprep.subr.mxu0 0.0
  %161 = vmatpush1.msra.mxu0 0.0
  %162 = vmatprep.subr.mxu0 0.0
  %163 = vmatpush1.msra.mxu0 0.0
  %164 = vmatprep.subr.mxu0 0.0
  %165 = vmatpush1.msra.mxu0 0.0
  %166 = vmatprep.subr.mxu0 0.0
  %167 = vmatpush1.msra.mxu0 0.0
  %168 = vmatprep.subr.mxu0 0.0
  %169 = vmatpush1.msra.mxu0 0.0
  %170 = vmatprep.subr.mxu0 0.0
  %171 = vmatpush1.msra.mxu0 0.0
  %172 = vmatprep.subr.mxu0 0.0
  %173 = vmatpush1.msra.mxu0 0.0
  %174 = vmatprep.mubr.f32.mxu0 0.0
  %175 = vmatmul.mubr.f32.gmra.mrb[0].mxu0 %v108
  %v176 = vpop.f32.mrb[0].mxu0
  %v177 = vadd.f32 0.0, %v176
  %v178 = vpop.f32.mrb[0].mxu0
  %179 = vdwg.mxu0
  %v180 = vld [vmem:[%s2] sm:$0xff]
  %v181 = vld [vmem:[%s2 + $0x8] sm:$0xff]
  %v182 = vld [vmem:[%s2 + $0x10] sm:$0xff]
  %v183 = vld [vmem:[%s2 + $0x18] sm:$0xff]
  %184 = vmatprep.subr.mxu0 0.0
  %185 = vmatpush1.msra.mxu0 %v180
  %186 = vmatprep.subr.mxu0 0.0
  %187 = vmatpush1.msra.mxu0 %v181
  %188 = vmatprep.subr.mxu0 0.0
  %189 = vmatpush1.msra.mxu0 0.0
  %190 = vmatprep.subr.mxu0 0.0
  %191 = vmatpush1.msra.mxu0 0.0
  %192 = vmatprep.subr.mxu0 0.0
  %193 = vmatpush1.msra.mxu0 0.0
  %194 = vmatprep.subr.mxu0 0.0
  %195 = vmatpush1.msra.mxu0 0.0
  %196 = vmatprep.subr.mxu0 0.0
  %197 = vmatpush1.msra.mxu0 0.0
  %198 = vmatprep.subr.mxu0 0.0
  %199 = vmatpush1.msra.mxu0 0.0
  %200 = vmatprep.subr.mxu0 0.0
  %201 = vmatpush1.msra.mxu0 0.0
  %202 = vmatprep.subr.mxu0 0.0
  %203 = vmatpush1.msra.mxu0 0.0
  %204 = vmatprep.subr.mxu0 0.0
  %205 = vmatpush1.msra.mxu0 0.0
  %206 = vmatprep.subr.mxu0 0.0
  %207 = vmatpush1.msra.mxu0 0.0
  %208 = vmatprep.subr.mxu0 0.0
  %209 = vmatpush1.msra.mxu0 0.0
  %210 = vmatprep.subr.mxu0 0.0
  %211 = vmatpush1.msra.mxu0 0.0
  %212 = vmatprep.subr.mxu0 0.0
  %213 = vmatpush1.msra.mxu0 0.0
  %214 = vmatprep.subr.mxu0 0.0
  %215 = vmatpush1.msra.mxu0 0.0
  %216 = vmatprep.subr.mxu0 0.0
  %217 = vmatpush1.msra.mxu0 0.0
  %218 = vmatprep.subr.mxu0 0.0
  %219 = vmatpush1.msra.mxu0 0.0
  %220 = vmatprep.subr.mxu0 0.0
  %221 = vmatpush1.msra.mxu0 0.0
  %222 = vmatprep.subr.mxu0 0.0
  %223 = vmatpush1.msra.mxu0 0.0
  %224 = vmatprep.subr.mxu0 0.0
  %225 = vmatpush1.msra.mxu0 0.0
  %226 = vmatprep.subr.mxu0 0.0
  %227 = vmatpush1.msra.mxu0 0.0
  %228 = vmatprep.subr.mxu0 0.0
  %229 = vmatpush1.msra.mxu0 0.0
  %230 = vmatprep.subr.mxu0 0.0
  %231 = vmatpush1.msra.mxu0 0.0
  %232 = vmatprep.subr.mxu0 0.0
  %233 = vmatpush1.msra.mxu0 0.0
  %234 = vmatprep.subr.mxu0 0.0
  %235 = vmatpush1.msra.mxu0 0.0
  %236 = vmatprep.subr.mxu0 0.0
  %237 = vmatpush1.msra.mxu0 0.0
  %238 = vmatprep.subr.mxu0 0.0
  %239 = vmatpush1.msra.mxu0 0.0
  %240 = vmatprep.subr.mxu0 0.0
  %241 = vmatpush1.msra.mxu0 0.0
  %242 = vmatprep.subr.mxu0 0.0
  %243 = vmatpush1.msra.mxu0 0.0
  %244 = vmatprep.subr.mxu0 0.0
  %245 = vmatpush1.msra.mxu0 0.0
  %246 = vmatprep.subr.mxu0 0.0
  %247 = vmatpush1.msra.mxu0 0.0
  %248 = vmatprep.mubr.f32.mxu0 0.0
  %249 = vmatmul.mubr.f32.gmra.mrb[0].mxu0 %v35
  %v250 = vpop.f32.mrb[0].mxu0
  %v251 = vadd.f32 0.0, %v250
  %v252 = vpop.f32.mrb[0].mxu0
  %253 = vdwg.mxu0
  %254 = vmatprep.subr.mxu0 0.0
  %255 = vmatpush1.msra.mxu0 %v182
  %256 = vmatprep.subr.mxu0 0.0
  %257 = vmatpush1.msra.mxu0 %v183
  %258 = vmatprep.subr.mxu0 0.0
  %259 = vmatpush1.msra.mxu0 0.0
  %260 = vmatprep.subr.mxu0 0.0
  %261 = vmatpush1.msra.mxu0 0.0
  %262 = vmatprep.subr.mxu0 0.0
  %263 = vmatpush1.msra.mxu0 0.0
  %264 = vmatprep.subr.mxu0 0.0
  %265 = vmatpush1.msra.mxu0 0.0
  %266 = vmatprep.subr.mxu0 0.0
  %267 = vmatpush1.msra.mxu0 0.0
  %268 = vmatprep.subr.mxu0 0.0
  %269 = vmatpush1.msra.mxu0 0.0
  %270 = vmatprep.subr.mxu0 0.0
  %271 = vmatpush1.msra.mxu0 0.0
  %272 = vmatprep.subr.mxu0 0.0
  %273 = vmatpush1.msra.mxu0 0.0
  %274 = vmatprep.subr.mxu0 0.0
  %275 = vmatpush1.msra.mxu0 0.0
  %276 = vmatprep.subr.mxu0 0.0
  %277 = vmatpush1.msra.mxu0 0.0
  %278 = vmatprep.subr.mxu0 0.0
  %279 = vmatpush1.msra.mxu0 0.0
  %280 = vmatprep.subr.mxu0 0.0
  %281 = vmatpush1.msra.mxu0 0.0
  %282 = vmatprep.subr.mxu0 0.0
  %283 = vmatpush1.msra.mxu0 0.0
  %284 = vmatprep.subr.mxu0 0.0
  %285 = vmatpush1.msra.mxu0 0.0
  %286 = vmatprep.subr.mxu0 0.0
  %287 = vmatpush1.msra.mxu0 0.0
  %288 = vmatprep.subr.mxu0 0.0
  %289 = vmatpush1.msra.mxu0 0.0
  %290 = vmatprep.subr.mxu0 0.0
  %291 = vmatpush1.msra.mxu0 0.0
  %292 = vmatprep.subr.mxu0 0.0
  %293 = vmatpush1.msra.mxu0 0.0
  %294 = vmatprep.subr.mxu0 0.0
  %295 = vmatpush1.msra.mxu0 0.0
  %296 = vmatprep.subr.mxu0 0.0
  %297 = vmatpush1.msra.mxu0 0.0
  %298 = vmatprep.subr.mxu0 0.0
  %299 = vmatpush1.msra.mxu0 0.0
  %300 = vmatprep.subr.mxu0 0.0
  %301 = vmatpush1.msra.mxu0 0.0
  %302 = vmatprep.subr.mxu0 0.0
  %303 = vmatpush1.msra.mxu0 0.0
  %304 = vmatprep.subr.mxu0 0.0
  %305 = vmatpush1.msra.mxu0 0.0
  %306 = vmatprep.subr.mxu0 0.0
  %307 = vmatpush1.msra.mxu0 0.0
  %308 = vmatprep.subr.mxu0 0.0
  %309 = vmatpush1.msra.mxu0 0.0
  %310 = vmatprep.subr.mxu0 0.0
  %311 = vmatpush1.msra.mxu0 0.0
  %312 = vmatprep.subr.mxu0 0.0
  %313 = vmatpush1.msra.mxu0 0.0
  %314 = vmatprep.subr.mxu0 0.0
  %315 = vmatpush1.msra.mxu0 0.0
  %316 = vmatprep.subr.mxu0 0.0
  %317 = vmatpush1.msra.mxu0 0.0
  %318 = vmatprep.mubr.f32.mxu0 0.0
  %319 = vmatmul.mubr.f32.gmra.mrb[0].mxu0 %v108
  %v320 = vpop.f32.mrb[0].mxu0
  %v321 = vadd.f32 0.0, %v320
  %v322 = vpop.f32.mrb[0].mxu0
  %323 = vdwg.mxu0
  %v325 = vsel %vm33, %v251, 0
  %327 = vmatprep.subr.mxu0 0.0
  %328 = vmatpush1.xpose.msra.mxu0 %v35
  %329 = vmatprep.subr.mxu0 0.0
  %330 = vmatpush1.xpose.msra.mxu0 0.0
  %331 = vmatprep.subr.mxu0 0.0
  %332 = vmatpush1.xpose.msra.mxu0 0.0
  %333 = vmatprep.subr.mxu0 0.0
  %334 = vmatpush1.xpose.msra.mxu0 0.0
  %335 = vmatprep.subr.mxu0 0.0
  %336 = vmatpush1.xpose.msra.mxu0 0.0
  %337 = vmatprep.subr.mxu0 0.0
  %338 = vmatpush1.xpose.msra.mxu0 0.0
  %339 = vmatprep.subr.mxu0 0.0
  %340 = vmatpush1.xpose.msra.mxu0 0.0
  %341 = vmatprep.subr.mxu0 0.0
  %342 = vmatpush1.xpose.msra.mxu0 0.0
  %343 = vmatprep.subr.mxu0 0.0
  %344 = vmatpush1.xpose.msra.mxu0 0.0
  %345 = vmatprep.subr.mxu0 0.0
  %346 = vmatpush1.xpose.msra.mxu0 0.0
  %347 = vmatprep.subr.mxu0 0.0
  %348 = vmatpush1.xpose.msra.mxu0 0.0
  %349 = vmatprep.subr.mxu0 0.0
  %350 = vmatpush1.xpose.msra.mxu0 0.0
  %351 = vmatprep.subr.mxu0 0.0
  %352 = vmatpush1.xpose.msra.mxu0 0.0
  %353 = vmatprep.subr.mxu0 0.0
  %354 = vmatpush1.xpose.msra.mxu0 0.0
  %355 = vmatprep.subr.mxu0 0.0
  %356 = vmatpush1.xpose.msra.mxu0 0.0
  %357 = vmatprep.subr.mxu0 0.0
  %358 = vmatpush1.xpose.msra.mxu0 0.0
  %359 = vmatprep.subr.mxu0 0.0
  %360 = vmatpush1.xpose.msra.mxu0 0.0
  %361 = vmatprep.subr.mxu0 0.0
  %362 = vmatpush1.xpose.msra.mxu0 0.0
  %363 = vmatprep.subr.mxu0 0.0
  %364 = vmatpush1.xpose.msra.mxu0 0.0
  %365 = vmatprep.subr.mxu0 0.0
  %366 = vmatpush1.xpose.msra.mxu0 0.0
  %367 = vmatprep.subr.mxu0 0.0
  %368 = vmatpush1.xpose.msra.mxu0 0.0
  %369 = vmatprep.subr.mxu0 0.0
  %370 = vmatpush1.xpose.msra.mxu0 0.0
  %371 = vmatprep.subr.mxu0 0.0
  %372 = vmatpush1.xpose.msra.mxu0 0.0
  %373 = vmatprep.subr.mxu0 0.0
  %374 = vmatpush1.xpose.msra.mxu0 0.0
  %375 = vmatprep.subr.mxu0 0.0
  %376 = vmatpush1.xpose.msra.mxu0 0.0
  %377 = vmatprep.subr.mxu0 0.0
  %378 = vmatpush1.xpose.msra.mxu0 0.0
  %379 = vmatprep.subr.mxu0 0.0
  %380 = vmatpush1.xpose.msra.mxu0 0.0
  %381 = vmatprep.subr.mxu0 0.0
  %382 = vmatpush1.xpose.msra.mxu0 0.0
  %383 = vmatprep.subr.mxu0 0.0
  %384 = vmatpush1.xpose.msra.mxu0 0.0
  %385 = vmatprep.subr.mxu0 0.0
  %386 = vmatpush1.xpose.msra.mxu0 0.0
  %387 = vmatprep.subr.mxu0 0.0
  %388 = vmatpush1.xpose.msra.mxu0 0.0
  %389 = vmatprep.subr.mxu0 0.0
  %390 = vmatpush1.xpose.msra.mxu0 0.0
  %391 = vmatprep.mubr.f32.mxu0 0.0
  %392 = vmatmul.mubr.f32.gmra.mrb[0].mxu0 %v325
  %v393 = vpop.f32.mrb[0].mxu0
  %v394 = vadd.f32 0.0, %v393
  %v395 = vpop.f32.mrb[0].mxu0
  %396 = vdwg.mxu0
  %v398 = vsel %vm33, %v321, 0
  %400 = vmatprep.subr.mxu0 0.0
  %401 = vmatpush1.xpose.msra.mxu0 %v108
  %402 = vmatprep.subr.mxu0 0.0
  %403 = vmatpush1.xpose.msra.mxu0 0.0
  %404 = vmatprep.subr.mxu0 0.0
  %405 = vmatpush1.xpose.msra.mxu0 0.0
  %406 = vmatprep.subr.mxu0 0.0
  %407 = vmatpush1.xpose.msra.mxu0 0.0
  %408 = vmatprep.subr.mxu0 0.0
  %409 = vmatpush1.xpose.msra.mxu0 0.0
  %410 = vmatprep.subr.mxu0 0.0
  %411 = vmatpush1.xpose.msra.mxu0 0.0
  %412 = vmatprep.subr.mxu0 0.0
  %413 = vmatpush1.xpose.msra.mxu0 0.0
  %414 = vmatprep.subr.mxu0 0.0
  %415 = vmatpush1.xpose.msra.mxu0 0.0
  %416 = vmatprep.subr.mxu0 0.0
  %417 = vmatpush1.xpose.msra.mxu0 0.0
  %418 = vmatprep.subr.mxu0 0.0
  %419 = vmatpush1.xpose.msra.mxu0 0.0
  %420 = vmatprep.subr.mxu0 0.0
  %421 = vmatpush1.xpose.msra.mxu0 0.0
  %422 = vmatprep.subr.mxu0 0.0
  %423 = vmatpush1.xpose.msra.mxu0 0.0
  %424 = vmatprep.subr.mxu0 0.0
  %425 = vmatpush1.xpose.msra.mxu0 0.0
  %426 = vmatprep.subr.mxu0 0.0
  %427 = vmatpush1.xpose.msra.mxu0 0.0
  %428 = vmatprep.subr.mxu0 0.0
  %429 = vmatpush1.xpose.msra.mxu0 0.0
  %430 = vmatprep.subr.mxu0 0.0
  %431 = vmatpush1.xpose.msra.mxu0 0.0
  %432 = vmatprep.subr.mxu0 0.0
  %433 = vmatpush1.xpose.msra.mxu0 0.0
  %434 = vmatprep.subr.mxu0 0.0
  %435 = vmatpush1.xpose.msra.mxu0 0.0
  %436 = vmatprep.subr.mxu0 0.0
  %437 = vmatpush1.xpose.msra.mxu0 0.0
  %438 = vmatprep.subr.mxu0 0.0
  %439 = vmatpush1.xpose.msra.mxu0 0.0
  %440 = vmatprep.subr.mxu0 0.0
  %441 = vmatpush1.xpose.msra.mxu0 0.0
  %442 = vmatprep.subr.mxu0 0.0
  %443 = vmatpush1.xpose.msra.mxu0 0.0
  %444 = vmatprep.subr.mxu0 0.0
  %445 = vmatpush1.xpose.msra.mxu0 0.0
  %446 = vmatprep.subr.mxu0 0.0
  %447 = vmatpush1.xpose.msra.mxu0 0.0
  %448 = vmatprep.subr.mxu0 0.0
  %449 = vmatpush1.xpose.msra.mxu0 0.0
  %450 = vmatprep.subr.mxu0 0.0
  %451 = vmatpush1.xpose.msra.mxu0 0.0
  %452 = vmatprep.subr.mxu0 0.0
  %453 = vmatpush1.xpose.msra.mxu0 0.0
  %454 = vmatprep.subr.mxu0 0.0
  %455 = vmatpush1.xpose.msra.mxu0 0.0
  %456 = vmatprep.subr.mxu0 0.0
  %457 = vmatpush1.xpose.msra.mxu0 0.0
  %458 = vmatprep.subr.mxu0 0.0
  %459 = vmatpush1.xpose.msra.mxu0 0.0
  %460 = vmatprep.subr.mxu0 0.0
  %461 = vmatpush1.xpose.msra.mxu0 0.0
  %462 = vmatprep.subr.mxu0 0.0
  %463 = vmatpush1.xpose.msra.mxu0 0.0
  %464 = vmatprep.mubr.f32.mxu0 0.0
  %465 = vmatmul.mubr.f32.gmra.mrb[0].mxu0 %v398
  %v466 = vpop.f32.mrb[0].mxu0
  %v467 = vadd.f32 0.0, %v466
  %v468 = vpop.f32.mrb[0].mxu0
  %469 = vdwg.mxu0
  %v470 = vld [vmem:[%s3] sm:$0x3]
  %v471 = vlaneseq
  %v472 = vshrl.u32 %v471, 7
  %v473 = vsub.s32 0, %v472
  %v474 = vrot.slane %v470, %v473
  %v475 = vmul.f32 %v104, %v474
  %v476 = vmul.f32 %v177, %v474
  %vm477 = vcmask 261120
  %v478 = vsel %vm477, %v475, 0.0
  %479 = vadd.xlane.f32.xlu0 %v478
  %v480 = vpop.xlane.xlu0 %479
  %v481 = vsel %vm477, %v476, 0.0
  %482 = vadd.xlane.f32.xlu0 %v481
  %v483 = vpop.xlane.xlu0 %482
  %v484 = vlaneseq
  %v485 = vshrl.u32 %v484, 7
  %v486 = vsub.s32 1, %v485
  %v487 = vrot.slane %v470, %v486
  %v488 = vmul.f32 %v104, %v487
  %v489 = vmul.f32 %v177, %v487
  %v490 = vsel %vm477, %v488, 0.0
  %491 = vadd.xlane.f32.xlu0 %v490
  %v492 = vpop.xlane.xlu0 %491
  %v493 = vsel %vm477, %v489, 0.0
  %494 = vadd.xlane.f32.xlu0 %v493
  %v495 = vpop.xlane.xlu0 %494
  %vm496 = vcmask 7168
  %v498 = vsel %vm496, 1.0, 0
  %v501 = vsel %vm496, %v492, 0
  %503 = vmatprep.subr.mxu0 0.0
  %504 = vmatpush1.xpose.msra.mxu0 %v501
  %505 = vmatprep.subr.mxu0 0.0
  %506 = vmatpush1.xpose.msra.mxu0 0.0
  %507 = vmatprep.subr.mxu0 0.0
  %508 = vmatpush1.xpose.msra.mxu0 0.0
  %509 = vmatprep.subr.mxu0 0.0
  %510 = vmatpush1.xpose.msra.mxu0 0.0
  %511 = vmatprep.subr.mxu0 0.0
  %512 = vmatpush1.xpose.msra.mxu0 0.0
  %513 = vmatprep.subr.mxu0 0.0
  %514 = vmatpush1.xpose.msra.mxu0 0.0
  %515 = vmatprep.subr.mxu0 0.0
  %516 = vmatpush1.xpose.msra.mxu0 0.0
  %517 = vmatprep.subr.mxu0 0.0
  %518 = vmatpush1.xpose.msra.mxu0 0.0
  %519 = vmatprep.subr.mxu0 0.0
  %520 = vmatpush1.xpose.msra.mxu0 0.0
  %521 = vmatprep.subr.mxu0 0.0
  %522 = vmatpush1.xpose.msra.mxu0 0.0
  %523 = vmatprep.subr.mxu0 0.0
  %524 = vmatpush1.xpose.msra.mxu0 0.0
  %525 = vmatprep.subr.mxu0 0.0
  %526 = vmatpush1.xpose.msra.mxu0 0.0
  %527 = vmatprep.subr.mxu0 0.0
  %528 = vmatpush1.xpose.msra.mxu0 0.0
  %529 = vmatprep.subr.mxu0 0.0
  %530 = vmatpush1.xpose.msra.mxu0 0.0
  %531 = vmatprep.subr.mxu0 0.0
  %532 = vmatpush1.xpose.msra.mxu0 0.0
  %533 = vmatprep.subr.mxu0 0.0
  %534 = vmatpush1.xpose.msra.mxu0 0.0
  %535 = vmatprep.subr.mxu0 0.0
  %536 = vmatpush1.xpose.msra.mxu0 0.0
  %537 = vmatprep.subr.mxu0 0.0
  %538 = vmatpush1.xpose.msra.mxu0 0.0
  %539 = vmatprep.subr.mxu0 0.0
  %540 = vmatpush1.xpose.msra.mxu0 0.0
  %541 = vmatprep.subr.mxu0 0.0
  %542 = vmatpush1.xpose.msra.mxu0 0.0
  %543 = vmatprep.subr.mxu0 0.0
  %544 = vmatpush1.xpose.msra.mxu0 0.0
  %545 = vmatprep.subr.mxu0 0.0
  %546 = vmatpush1.xpose.msra.mxu0 0.0
  %547 = vmatprep.subr.mxu0 0.0
  %548 = vmatpush1.xpose.msra.mxu0 0.0
  %549 = vmatprep.subr.mxu0 0.0
  %550 = vmatpush1.xpose.msra.mxu0 0.0
  %551 = vmatprep.subr.mxu0 0.0
  %552 = vmatpush1.xpose.msra.mxu0 0.0
  %553 = vmatprep.subr.mxu0 0.0
  %554 = vmatpush1.xpose.msra.mxu0 0.0
  %555 = vmatprep.subr.mxu0 0.0
  %556 = vmatpush1.xpose.msra.mxu0 0.0
  %557 = vmatprep.subr.mxu0 0.0
  %558 = vmatpush1.xpose.msra.mxu0 0.0
  %559 = vmatprep.subr.mxu0 0.0
  %560 = vmatpush1.xpose.msra.mxu0 0.0
  %561 = vmatprep.subr.mxu0 0.0
  %562 = vmatpush1.xpose.msra.mxu0 0.0
  %563 = vmatprep.subr.mxu0 0.0
  %564 = vmatpush1.xpose.msra.mxu0 0.0
  %565 = vmatprep.subr.mxu0 0.0
  %566 = vmatpush1.xpose.msra.mxu0 0.0
  %567 = vmatprep.mubr.f32.mxu0 0.0
  %568 = vmatmul.mubr.f32.gmra.mrb[0].mxu0 %v498
  %v569 = vpop.f32.mrb[0].mxu0
  %v570 = vadd.f32 0.0, %v569
  %v571 = vpop.f32.mrb[0].mxu0
  %572 = vdwg.mxu0
  %v574 = vsel %vm496, %v495, 0
  %576 = vmatprep.subr.mxu0 0.0
  %577 = vmatpush1.xpose.msra.mxu0 %v574
  %578 = vmatprep.subr.mxu0 0.0
  %579 = vmatpush1.xpose.msra.mxu0 0.0
  %580 = vmatprep.subr.mxu0 0.0
  %581 = vmatpush1.xpose.msra.mxu0 0.0
  %582 = vmatprep.subr.mxu0 0.0
  %583 = vmatpush1.xpose.msra.mxu0 0.0
  %584 = vmatprep.subr.mxu0 0.0
  %585 = vmatpush1.xpose.msra.mxu0 0.0
  %586 = vmatprep.subr.mxu0 0.0
  %587 = vmatpush1.xpose.msra.mxu0 0.0
  %588 = vmatprep.subr.mxu0 0.0
  %589 = vmatpush1.xpose.msra.mxu0 0.0
  %590 = vmatprep.subr.mxu0 0.0
  %591 = vmatpush1.xpose.msra.mxu0 0.0
  %592 = vmatprep.subr.mxu0 0.0
  %593 = vmatpush1.xpose.msra.mxu0 0.0
  %594 = vmatprep.subr.mxu0 0.0
  %595 = vmatpush1.xpose.msra.mxu0 0.0
  %596 = vmatprep.subr.mxu0 0.0
  %597 = vmatpush1.xpose.msra.mxu0 0.0
  %598 = vmatprep.subr.mxu0 0.0
  %599 = vmatpush1.xpose.msra.mxu0 0.0
  %600 = vmatprep.subr.mxu0 0.0
  %601 = vmatpush1.xpose.msra.mxu0 0.0
  %602 = vmatprep.subr.mxu0 0.0
  %603 = vmatpush1.xpose.msra.mxu0 0.0
  %604 = vmatprep.subr.mxu0 0.0
  %605 = vmatpush1.xpose.msra.mxu0 0.0
  %606 = vmatprep.subr.mxu0 0.0
  %607 = vmatpush1.xpose.msra.mxu0 0.0
  %608 = vmatprep.subr.mxu0 0.0
  %609 = vmatpush1.xpose.msra.mxu0 0.0
  %610 = vmatprep.subr.mxu0 0.0
  %611 = vmatpush1.xpose.msra.mxu0 0.0
  %612 = vmatprep.subr.mxu0 0.0
  %613 = vmatpush1.xpose.msra.mxu0 0.0
  %614 = vmatprep.subr.mxu0 0.0
  %615 = vmatpush1.xpose.msra.mxu0 0.0
  %616 = vmatprep.subr.mxu0 0.0
  %617 = vmatpush1.xpose.msra.mxu0 0.0
  %618 = vmatprep.subr.mxu0 0.0
  %619 = vmatpush1.xpose.msra.mxu0 0.0
  %620 = vmatprep.subr.mxu0 0.0
  %621 = vmatpush1.xpose.msra.mxu0 0.0
  %622 = vmatprep.subr.mxu0 0.0
  %623 = vmatpush1.xpose.msra.mxu0 0.0
  %624 = vmatprep.subr.mxu0 0.0
  %625 = vmatpush1.xpose.msra.mxu0 0.0
  %626 = vmatprep.subr.mxu0 0.0
  %627 = vmatpush1.xpose.msra.mxu0 0.0
  %628 = vmatprep.subr.mxu0 0.0
  %629 = vmatpush1.xpose.msra.mxu0 0.0
  %630 = vmatprep.subr.mxu0 0.0
  %631 = vmatpush1.xpose.msra.mxu0 0.0
  %632 = vmatprep.subr.mxu0 0.0
  %633 = vmatpush1.xpose.msra.mxu0 0.0
  %634 = vmatprep.subr.mxu0 0.0
  %635 = vmatpush1.xpose.msra.mxu0 0.0
  %636 = vmatprep.subr.mxu0 0.0
  %637 = vmatpush1.xpose.msra.mxu0 0.0
  %638 = vmatprep.subr.mxu0 0.0
  %639 = vmatpush1.xpose.msra.mxu0 0.0
  %640 = vmatprep.mubr.f32.mxu0 0.0
  %641 = vmatmul.mubr.f32.gmra.mrb[0].mxu0 %v498
  %v642 = vpop.f32.mrb[0].mxu0
  %v643 = vadd.f32 0.0, %v642
  %v644 = vpop.f32.mrb[0].mxu0
  %645 = vdwg.mxu0
  %v646 = vadd.f32 %v480, %v570
  %v647 = vadd.f32 %v483, %v643
  %vm648 = vcmp.gt.f32.partialorder %v646, 0.0
  %vm649 = vcmp.gt.f32.partialorder %v647, 0.0
  %v650 = vmul.f32 %v646, 0.2
  %v651 = vmul.f32 %v647, 0.2
  %v652 = vsel %vm648, %v646, %v650
  %v653 = vsel %vm649, %v647, %v651
  %v654 = vadd.f32 %v652, %v394
  %v655 = vadd.f32 %v653, %v467
  %vm656 = vcmask 64512
  %v657 = vsel %vm656, %v654, -inf
  %658 = vmax.xlane.f32.xlu0 %v657
  %v659 = vpop.xlane.xlu0 %658
  %v660 = vsel %vm656, %v655, -inf
  %661 = vmax.xlane.f32.xlu0 %v660
  %v662 = vpop.xlane.xlu0 %661
  %v663 = vsub.f32 %v654, %v659
  %v664 = vsub.f32 %v655, %v662
  %v665 = vmul.f32 %v663, 1.442695
  %v666 = vpow.pop %v665
  %v667 = vmul.f32 %v664, 1.442695
  %v668 = vpow.pop %v667
  %v669 = vsel %vm656, %v666, 0.0
  %670 = vadd.xlane.f32.xlu0 %v669
  %v671 = vpop.xlane.xlu0 %670
  %v672 = vsel %vm656, %v668, 0.0
  %673 = vadd.xlane.f32.xlu0 %v672
  %v674 = vpop.xlane.xlu0 %673
  %v675 = vrcp.pop %v671
  %v676 = vrcp.pop %v674
  %v677 = vmul.f32 %v666, %v675
  %v678 = vmul.f32 %v668, %v676
  %679 = vst.msk [vmem:[%s6] sm:$0xff] %vm656, %v677
  %680 = vst.msk [vmem:[%s6 + $0x8] sm:$0xff] %vm656, %v678
  %v681 = vlaneseq
  %v682 = vshrl.u32 %v681, 7
  %v683 = vlaneseq
  %v684 = vand.u32 %v683, 127
  %vm685 = vcmp.eq.s32.totalorder %v682, %v684
  %v686 = vld [vmem:[%s4] sm:$0xff]
  %v687 = vld [vmem:[%s4 + $0x8] sm:$0xff]
  %v688 = vld [vmem:[%s4 + $0x10] sm:$0xff]
  %v689 = vld [vmem:[%s4 + $0x18] sm:$0xff]
  %v691 = vsel %vm477, %v104, 0
  %v694 = vsel %vm477, %v177, 0
  %696 = vmatprep.subr.mxu0 0.0
  %697 = vmatpush1.msra.mxu0 %v686
  %698 = vmatprep.subr.mxu0 0.0
  %699 = vmatpush1.msra.mxu0 %v687
  %700 = vmatprep.subr.mxu0 0.0
  %701 = vmatpush1.msra.mxu0 %v688
  %702 = vmatprep.subr.mxu0 0.0
  %703 = vmatpush1.msra.mxu0 %v689
  %704 = vmatprep.subr.mxu0 0.0
  %705 = vmatpush1.msra.mxu0 0.0
  %706 = vmatprep.subr.mxu0 0.0
  %707 = vmatpush1.msra.mxu0 0.0
  %708 = vmatprep.subr.mxu0 0.0
  %709 = vmatpush1.msra.mxu0 0.0
  %710 = vmatprep.subr.mxu0 0.0
  %711 = vmatpush1.msra.mxu0 0.0
  %712 = vmatprep.subr.mxu0 0.0
  %713 = vmatpush1.msra.mxu0 0.0
  %714 = vmatprep.subr.mxu0 0.0
  %715 = vmatpush1.msra.mxu0 0.0
  %716 = vmatprep.subr.mxu0 0.0
  %717 = vmatpush1.msra.mxu0 0.0
  %718 = vmatprep.subr.mxu0 0.0
  %719 = vmatpush1.msra.mxu0 0.0
  %720 = vmatprep.subr.mxu0 0.0
  %721 = vmatpush1.msra.mxu0 0.0
  %722 = vmatprep.subr.mxu0 0.0
  %723 = vmatpush1.msra.mxu0 0.0
  %724 = vmatprep.subr.mxu0 0.0
  %725 = vmatpush1.msra.mxu0 0.0
  %726 = vmatprep.subr.mxu0 0.0
  %727 = vmatpush1.msra.mxu0 0.0
  %728 = vmatprep.subr.mxu0 0.0
  %729 = vmatpush1.msra.mxu0 0.0
  %730 = vmatprep.subr.mxu0 0.0
  %731 = vmatpush1.msra.mxu0 0.0
  %732 = vmatprep.subr.mxu0 0.0
  %733 = vmatpush1.msra.mxu0 0.0
  %734 = vmatprep.subr.mxu0 0.0
  %735 = vmatpush1.msra.mxu0 0.0
  %736 = vmatprep.subr.mxu0 0.0
  %737 = vmatpush1.msra.mxu0 0.0
  %738 = vmatprep.subr.mxu0 0.0
  %739 = vmatpush1.msra.mxu0 0.0
  %740 = vmatprep.subr.mxu0 0.0
  %741 = vmatpush1.msra.mxu0 0.0
  %742 = vmatprep.subr.mxu0 0.0
  %743 = vmatpush1.msra.mxu0 0.0
  %744 = vmatprep.subr.mxu0 0.0
  %745 = vmatpush1.msra.mxu0 0.0
  %746 = vmatprep.subr.mxu0 0.0
  %747 = vmatpush1.msra.mxu0 0.0
  %748 = vmatprep.subr.mxu0 0.0
  %749 = vmatpush1.msra.mxu0 0.0
  %750 = vmatprep.subr.mxu0 0.0
  %751 = vmatpush1.msra.mxu0 0.0
  %752 = vmatprep.subr.mxu0 0.0
  %753 = vmatpush1.msra.mxu0 0.0
  %754 = vmatprep.subr.mxu0 0.0
  %755 = vmatpush1.msra.mxu0 0.0
  %756 = vmatprep.subr.mxu0 0.0
  %757 = vmatpush1.msra.mxu0 0.0
  %758 = vmatprep.subr.mxu0 0.0
  %759 = vmatpush1.msra.mxu0 0.0
  %760 = vmatprep.mubr.f32.mxu0 0.0
  %761 = vmatmul.mubr.f32.gmra.mrb[0].mxu0 %v691
  %v762 = vpop.f32.mrb[0].mxu0
  %v763 = vadd.f32 0.0, %v762
  %v764 = vpop.f32.mrb[0].mxu0
  %765 = vmatprep.mubr.f32.mxu0 0.0
  %766 = vmatmul.mubr.f32.gmra.mrb[0].mxu0 %v694
  %v767 = vpop.f32.mrb[0].mxu0
  %v768 = vadd.f32 0.0, %v767
  %v769 = vpop.f32.mrb[0].mxu0
  %770 = vdwg.mxu0
  %v771 = vld [vmem:[%s5] sm:$0x1]
  %vm772 = vcmp.eq.f32.partialorder %v677, 0.0
  %vm773 = vcmp.eq.f32.partialorder %v678, 0.0
  %v774 = vsel %vm685, 1, 0
  %vm775 = vcmp.eq.s32.totalorder %v774, 1
  %vm776 = vmand %vm775, %vm772
  %vm777 = vmand %vm775, %vm773
  %v778 = vsel %vm776, 1.0, %v677
  %v779 = vsel %vm777, 1.0, %v678
  %v780 = vsel %vm656, %v778, 0.0
  %781 = vadd.xlane.f32.xlu0 %v780
  %v782 = vpop.xlane.xlu0 %781
  %v783 = vsel %vm656, %v779, 0.0
  %784 = vadd.xlane.f32.xlu0 %v783
  %v785 = vpop.xlane.xlu0 %784
  %vm786 = vcmp.gt.f32.partialorder %v782, 0.0
  %vm787 = vcmp.gt.f32.partialorder %v785, 0.0
  %v788 = vrsqrt.pop %v782
  %v789 = vrsqrt.pop %v785
  %v790 = vsel %vm786, %v788, 0.0
  %v791 = vsel %vm787, %v789, 0.0
  %792 = vxpose.xlu0.b32.start [1/16] %v778, 128
  %793 = vxpose.xlu0.b32.cont [2/16] 0.0, 128
  %794 = vxpose.xlu0.b32.cont [3/16] 0.0, 128
  %795 = vxpose.xlu0.b32.cont [4/16] 0.0, 128
  %796 = vxpose.xlu0.b32.cont [5/16] 0.0, 128
  %797 = vxpose.xlu0.b32.cont [6/16] 0.0, 128
  %798 = vxpose.xlu0.b32.cont [7/16] 0.0, 128
  %799 = vxpose.xlu0.b32.cont [8/16] 0.0, 128
  %800 = vxpose.xlu0.b32.cont [9/16] 0.0, 128
  %801 = vxpose.xlu0.b32.cont [10/16] 0.0, 128
  %802 = vxpose.xlu0.b32.cont [11/16] 0.0, 128
  %803 = vxpose.xlu0.b32.cont [12/16] 0.0, 128
  %804 = vxpose.xlu0.b32.cont [13/16] 0.0, 128
  %805 = vxpose.xlu0.b32.cont [14/16] 0.0, 128
  %806 = vxpose.xlu0.b32.cont [15/16] 0.0, 128
  %807 = vxpose.xlu0.b32.end [16/16] 0.0, 128
  %v808 = vpop.trf.xlu0
  %v809 = vpop.trf.xlu0
  %v810 = vpop.trf.xlu0
  %v811 = vpop.trf.xlu0
  %v812 = vpop.trf.xlu0
  %v813 = vpop.trf.xlu0
  %v814 = vpop.trf.xlu0
  %v815 = vpop.trf.xlu0
  %v816 = vpop.trf.xlu0
  %v817 = vpop.trf.xlu0
  %v818 = vpop.trf.xlu0
  %v819 = vpop.trf.xlu0
  %v820 = vpop.trf.xlu0
  %v821 = vpop.trf.xlu0
  %v822 = vpop.trf.xlu0
  %v823 = vpop.trf.xlu0
  %824 = vxpose.xlu0.b32.start [1/16] %v779, 128
  %825 = vxpose.xlu0.b32.cont [2/16] 0.0, 128
  %826 = vxpose.xlu0.b32.cont [3/16] 0.0, 128
  %827 = vxpose.xlu0.b32.cont [4/16] 0.0, 128
  %828 = vxpose.xlu0.b32.cont [5/16] 0.0, 128
  %829 = vxpose.xlu0.b32.cont [6/16] 0.0, 128
  %830 = vxpose.xlu0.b32.cont [7/16] 0.0, 128
  %831 = vxpose.xlu0.b32.cont [8/16] 0.0, 128
  %832 = vxpose.xlu0.b32.cont [9/16] 0.0, 128
  %833 = vxpose.xlu0.b32.cont [10/16] 0.0, 128
  %834 = vxpose.xlu0.b32.cont [11/16] 0.0, 128
  %835 = vxpose.xlu0.b32.cont [12/16] 0.0, 128
  %836 = vxpose.xlu0.b32.cont [13/16] 0.0, 128
  %837 = vxpose.xlu0.b32.cont [14/16] 0.0, 128
  %838 = vxpose.xlu0.b32.cont [15/16] 0.0, 128
  %839 = vxpose.xlu0.b32.end [16/16] 0.0, 128
  %v840 = vpop.trf.xlu0
  %v841 = vpop.trf.xlu0
  %v842 = vpop.trf.xlu0
  %v843 = vpop.trf.xlu0
  %v844 = vpop.trf.xlu0
  %v845 = vpop.trf.xlu0
  %v846 = vpop.trf.xlu0
  %v847 = vpop.trf.xlu0
  %v848 = vpop.trf.xlu0
  %v849 = vpop.trf.xlu0
  %v850 = vpop.trf.xlu0
  %v851 = vpop.trf.xlu0
  %v852 = vpop.trf.xlu0
  %v853 = vpop.trf.xlu0
  %v854 = vpop.trf.xlu0
  %v855 = vpop.trf.xlu0
  %v856 = vmul.f32 %v790, %v763
  %v857 = vmul.f32 %v791, %v768
  %v859 = vsel %vm656, %v808, 0
  %861 = vmatprep.subr.mxu0 0.0
  %862 = vmatpush1.msra.mxu0 %v856
  %863 = vmatprep.subr.mxu0 0.0
  %864 = vmatpush1.msra.mxu0 0.0
  %865 = vmatprep.subr.mxu0 0.0
  %866 = vmatpush1.msra.mxu0 0.0
  %867 = vmatprep.subr.mxu0 0.0
  %868 = vmatpush1.msra.mxu0 0.0
  %869 = vmatprep.subr.mxu0 0.0
  %870 = vmatpush1.msra.mxu0 0.0
  %871 = vmatprep.subr.mxu0 0.0
  %872 = vmatpush1.msra.mxu0 0.0
  %873 = vmatprep.subr.mxu0 0.0
  %874 = vmatpush1.msra.mxu0 0.0
  %875 = vmatprep.subr.mxu0 0.0
  %876 = vmatpush1.msra.mxu0 0.0
  %877 = vmatprep.subr.mxu0 0.0
  %878 = vmatpush1.msra.mxu0 0.0
  %879 = vmatprep.subr.mxu0 0.0
  %880 = vmatpush1.msra.mxu0 0.0
  %881 = vmatprep.subr.mxu0 0.0
  %882 = vmatpush1.msra.mxu0 0.0
  %883 = vmatprep.subr.mxu0 0.0
  %884 = vmatpush1.msra.mxu0 0.0
  %885 = vmatprep.subr.mxu0 0.0
  %886 = vmatpush1.msra.mxu0 0.0
  %887 = vmatprep.subr.mxu0 0.0
  %888 = vmatpush1.msra.mxu0 0.0
  %889 = vmatprep.subr.mxu0 0.0
  %890 = vmatpush1.msra.mxu0 0.0
  %891 = vmatprep.subr.mxu0 0.0
  %892 = vmatpush1.msra.mxu0 0.0
  %893 = vmatprep.subr.mxu0 0.0
  %894 = vmatpush1.msra.mxu0 0.0
  %895 = vmatprep.subr.mxu0 0.0
  %896 = vmatpush1.msra.mxu0 0.0
  %897 = vmatprep.subr.mxu0 0.0
  %898 = vmatpush1.msra.mxu0 0.0
  %899 = vmatprep.subr.mxu0 0.0
  %900 = vmatpush1.msra.mxu0 0.0
  %901 = vmatprep.subr.mxu0 0.0
  %902 = vmatpush1.msra.mxu0 0.0
  %903 = vmatprep.subr.mxu0 0.0
  %904 = vmatpush1.msra.mxu0 0.0
  %905 = vmatprep.subr.mxu0 0.0
  %906 = vmatpush1.msra.mxu0 0.0
  %907 = vmatprep.subr.mxu0 0.0
  %908 = vmatpush1.msra.mxu0 0.0
  %909 = vmatprep.subr.mxu0 0.0
  %910 = vmatpush1.msra.mxu0 0.0
  %911 = vmatprep.subr.mxu0 0.0
  %912 = vmatpush1.msra.mxu0 0.0
  %913 = vmatprep.subr.mxu0 0.0
  %914 = vmatpush1.msra.mxu0 0.0
  %915 = vmatprep.subr.mxu0 0.0
  %916 = vmatpush1.msra.mxu0 0.0
  %917 = vmatprep.subr.mxu0 0.0
  %918 = vmatpush1.msra.mxu0 0.0
  %919 = vmatprep.subr.mxu0 0.0
  %920 = vmatpush1.msra.mxu0 0.0
  %921 = vmatprep.subr.mxu0 0.0
  %922 = vmatpush1.msra.mxu0 0.0
  %923 = vmatprep.subr.mxu0 0.0
  %924 = vmatpush1.msra.mxu0 0.0
  %925 = vmatprep.mubr.f32.mxu0 0.0
  %926 = vmatmul.mubr.f32.gmra.mrb[0].mxu0 %v859
  %v927 = vpop.f32.mrb[0].mxu0
  %v928 = vadd.f32 0.0, %v927
  %v929 = vpop.f32.mrb[0].mxu0
  %930 = vdwg.mxu0
  %v932 = vsel %vm656, %v840, 0
  %934 = vmatprep.subr.mxu0 0.0
  %935 = vmatpush1.msra.mxu0 %v857
  %936 = vmatprep.subr.mxu0 0.0
  %937 = vmatpush1.msra.mxu0 0.0
  %938 = vmatprep.subr.mxu0 0.0
  %939 = vmatpush1.msra.mxu0 0.0
  %940 = vmatprep.subr.mxu0 0.0
  %941 = vmatpush1.msra.mxu0 0.0
  %942 = vmatprep.subr.mxu0 0.0
  %943 = vmatpush1.msra.mxu0 0.0
  %944 = vmatprep.subr.mxu0 0.0
  %945 = vmatpush1.msra.mxu0 0.0
  %946 = vmatprep.subr.mxu0 0.0
  %947 = vmatpush1.msra.mxu0 0.0
  %948 = vmatprep.subr.mxu0 0.0
  %949 = vmatpush1.msra.mxu0 0.0
  %950 = vmatprep.subr.mxu0 0.0
  %951 = vmatpush1.msra.mxu0 0.0
  %952 = vmatprep.subr.mxu0 0.0
  %953 = vmatpush1.msra.mxu0 0.0
  %954 = vmatprep.subr.mxu0 0.0
  %955 = vmatpush1.msra.mxu0 0.0
  %956 = vmatprep.subr.mxu0 0.0
  %957 = vmatpush1.msra.mxu0 0.0
  %958 = vmatprep.subr.mxu0 0.0
  %959 = vmatpush1.msra.mxu0 0.0
  %960 = vmatprep.subr.mxu0 0.0
  %961 = vmatpush1.msra.mxu0 0.0
  %962 = vmatprep.subr.mxu0 0.0
  %963 = vmatpush1.msra.mxu0 0.0
  %964 = vmatprep.subr.mxu0 0.0
  %965 = vmatpush1.msra.mxu0 0.0
  %966 = vmatprep.subr.mxu0 0.0
  %967 = vmatpush1.msra.mxu0 0.0
  %968 = vmatprep.subr.mxu0 0.0
  %969 = vmatpush1.msra.mxu0 0.0
  %970 = vmatprep.subr.mxu0 0.0
  %971 = vmatpush1.msra.mxu0 0.0
  %972 = vmatprep.subr.mxu0 0.0
  %973 = vmatpush1.msra.mxu0 0.0
  %974 = vmatprep.subr.mxu0 0.0
  %975 = vmatpush1.msra.mxu0 0.0
  %976 = vmatprep.subr.mxu0 0.0
  %977 = vmatpush1.msra.mxu0 0.0
  %978 = vmatprep.subr.mxu0 0.0
  %979 = vmatpush1.msra.mxu0 0.0
  %980 = vmatprep.subr.mxu0 0.0
  %981 = vmatpush1.msra.mxu0 0.0
  %982 = vmatprep.subr.mxu0 0.0
  %983 = vmatpush1.msra.mxu0 0.0
  %984 = vmatprep.subr.mxu0 0.0
  %985 = vmatpush1.msra.mxu0 0.0
  %986 = vmatprep.subr.mxu0 0.0
  %987 = vmatpush1.msra.mxu0 0.0
  %988 = vmatprep.subr.mxu0 0.0
  %989 = vmatpush1.msra.mxu0 0.0
  %990 = vmatprep.subr.mxu0 0.0
  %991 = vmatpush1.msra.mxu0 0.0
  %992 = vmatprep.subr.mxu0 0.0
  %993 = vmatpush1.msra.mxu0 0.0
  %994 = vmatprep.subr.mxu0 0.0
  %995 = vmatpush1.msra.mxu0 0.0
  %996 = vmatprep.subr.mxu0 0.0
  %997 = vmatpush1.msra.mxu0 0.0
  %998 = vmatprep.mubr.f32.mxu0 0.0
  %999 = vmatmul.mubr.f32.gmra.mrb[0].mxu0 %v932
  %v1000 = vpop.f32.mrb[0].mxu0
  %v1001 = vadd.f32 0.0, %v1000
  %v1002 = vpop.f32.mrb[0].mxu0
  %1003 = vdwg.mxu0
  %v1004 = vmul.f32 %v790, %v928
  %v1005 = vmul.f32 %v791, %v1001
  %v1007 = vlaneseq
  %v1008 = vshrl.u32 %v1007, 7
  %v1009 = vsub.s32 0, %v1008
  %v1010 = vrot.slane %v771, %v1009
  %v1012 = vadd.f32 %v1004, %v1010
  %v1013 = vadd.f32 %v1005, %v1010
  %v1014 = vmax.f32 %v1012, 0.0
  %v1015 = vmax.f32 %v1013, 0.0
  %1016 = vst.msk [vmem:[%s7] sm:$0xff] %vm477, %v1014
  %1017 = vst.msk [vmem:[%s7 + $0x8] sm:$0xff] %vm477, %v1015
  %v1018 = vsel %vm775, 0.0, %v677
  %v1019 = vsel %vm775, 0.0, %v678
  %v1020 = vsel %vm656, %v1018, 0.0
  %1021 = vadd.xlane.f32.xlu0 %v1020
  %v1022 = vpop.xlane.xlu0 %1021
  %v1023 = vsel %vm656, %v1019, 0.0
  %1024 = vadd.xlane.f32.xlu0 %v1023
  %v1025 = vpop.xlane.xlu0 %1024
  %vm1026 = vcmp.gt.f32.partialorder %v1022, 0.0
  %vm1027 = vcmp.gt.f32.partialorder %v1025, 0.0
  %v1028 = vrsqrt.pop %v1022
  %v1029 = vrsqrt.pop %v1025
  %v1030 = vsel %vm1026, %v1028, 0.0
  %v1031 = vsel %vm1027, %v1029, 0.0
  %1032 = vxpose.xlu0.b32.start [1/16] %v1018, 128
  %1033 = vxpose.xlu0.b32.cont [2/16] 0.0, 128
  %1034 = vxpose.xlu0.b32.cont [3/16] 0.0, 128
  %1035 = vxpose.xlu0.b32.cont [4/16] 0.0, 128
  %1036 = vxpose.xlu0.b32.cont [5/16] 0.0, 128
  %1037 = vxpose.xlu0.b32.cont [6/16] 0.0, 128
  %1038 = vxpose.xlu0.b32.cont [7/16] 0.0, 128
  %1039 = vxpose.xlu0.b32.cont [8/16] 0.0, 128
  %1040 = vxpose.xlu0.b32.cont [9/16] 0.0, 128
  %1041 = vxpose.xlu0.b32.cont [10/16] 0.0, 128
  %1042 = vxpose.xlu0.b32.cont [11/16] 0.0, 128
  %1043 = vxpose.xlu0.b32.cont [12/16] 0.0, 128
  %1044 = vxpose.xlu0.b32.cont [13/16] 0.0, 128
  %1045 = vxpose.xlu0.b32.cont [14/16] 0.0, 128
  %1046 = vxpose.xlu0.b32.cont [15/16] 0.0, 128
  %1047 = vxpose.xlu0.b32.end [16/16] 0.0, 128
  %v1048 = vpop.trf.xlu0
  %v1049 = vpop.trf.xlu0
  %v1050 = vpop.trf.xlu0
  %v1051 = vpop.trf.xlu0
  %v1052 = vpop.trf.xlu0
  %v1053 = vpop.trf.xlu0
  %v1054 = vpop.trf.xlu0
  %v1055 = vpop.trf.xlu0
  %v1056 = vpop.trf.xlu0
  %v1057 = vpop.trf.xlu0
  %v1058 = vpop.trf.xlu0
  %v1059 = vpop.trf.xlu0
  %v1060 = vpop.trf.xlu0
  %v1061 = vpop.trf.xlu0
  %v1062 = vpop.trf.xlu0
  %v1063 = vpop.trf.xlu0
  %1064 = vxpose.xlu0.b32.start [1/16] %v1019, 128
  %1065 = vxpose.xlu0.b32.cont [2/16] 0.0, 128
  %1066 = vxpose.xlu0.b32.cont [3/16] 0.0, 128
  %1067 = vxpose.xlu0.b32.cont [4/16] 0.0, 128
  %1068 = vxpose.xlu0.b32.cont [5/16] 0.0, 128
  %1069 = vxpose.xlu0.b32.cont [6/16] 0.0, 128
  %1070 = vxpose.xlu0.b32.cont [7/16] 0.0, 128
  %1071 = vxpose.xlu0.b32.cont [8/16] 0.0, 128
  %1072 = vxpose.xlu0.b32.cont [9/16] 0.0, 128
  %1073 = vxpose.xlu0.b32.cont [10/16] 0.0, 128
  %1074 = vxpose.xlu0.b32.cont [11/16] 0.0, 128
  %1075 = vxpose.xlu0.b32.cont [12/16] 0.0, 128
  %1076 = vxpose.xlu0.b32.cont [13/16] 0.0, 128
  %1077 = vxpose.xlu0.b32.cont [14/16] 0.0, 128
  %1078 = vxpose.xlu0.b32.cont [15/16] 0.0, 128
  %1079 = vxpose.xlu0.b32.end [16/16] 0.0, 128
  %v1080 = vpop.trf.xlu0
  %v1081 = vpop.trf.xlu0
  %v1082 = vpop.trf.xlu0
  %v1083 = vpop.trf.xlu0
  %v1084 = vpop.trf.xlu0
  %v1085 = vpop.trf.xlu0
  %v1086 = vpop.trf.xlu0
  %v1087 = vpop.trf.xlu0
  %v1088 = vpop.trf.xlu0
  %v1089 = vpop.trf.xlu0
  %v1090 = vpop.trf.xlu0
  %v1091 = vpop.trf.xlu0
  %v1092 = vpop.trf.xlu0
  %v1093 = vpop.trf.xlu0
  %v1094 = vpop.trf.xlu0
  %v1095 = vpop.trf.xlu0
  %v1096 = vmul.f32 %v1030, %v1014
  %v1097 = vmul.f32 %v1031, %v1015
  %v1099 = vsel %vm656, %v1048, 0
  %1101 = vmatprep.subr.mxu0 0.0
  %1102 = vmatpush1.msra.mxu0 %v1096
  %1103 = vmatprep.subr.mxu0 0.0
  %1104 = vmatpush1.msra.mxu0 0.0
  %1105 = vmatprep.subr.mxu0 0.0
  %1106 = vmatpush1.msra.mxu0 0.0
  %1107 = vmatprep.subr.mxu0 0.0
  %1108 = vmatpush1.msra.mxu0 0.0
  %1109 = vmatprep.subr.mxu0 0.0
  %1110 = vmatpush1.msra.mxu0 0.0
  %1111 = vmatprep.subr.mxu0 0.0
  %1112 = vmatpush1.msra.mxu0 0.0
  %1113 = vmatprep.subr.mxu0 0.0
  %1114 = vmatpush1.msra.mxu0 0.0
  %1115 = vmatprep.subr.mxu0 0.0
  %1116 = vmatpush1.msra.mxu0 0.0
  %1117 = vmatprep.subr.mxu0 0.0
  %1118 = vmatpush1.msra.mxu0 0.0
  %1119 = vmatprep.subr.mxu0 0.0
  %1120 = vmatpush1.msra.mxu0 0.0
  %1121 = vmatprep.subr.mxu0 0.0
  %1122 = vmatpush1.msra.mxu0 0.0
  %1123 = vmatprep.subr.mxu0 0.0
  %1124 = vmatpush1.msra.mxu0 0.0
  %1125 = vmatprep.subr.mxu0 0.0
  %1126 = vmatpush1.msra.mxu0 0.0
  %1127 = vmatprep.subr.mxu0 0.0
  %1128 = vmatpush1.msra.mxu0 0.0
  %1129 = vmatprep.subr.mxu0 0.0
  %1130 = vmatpush1.msra.mxu0 0.0
  %1131 = vmatprep.subr.mxu0 0.0
  %1132 = vmatpush1.msra.mxu0 0.0
  %1133 = vmatprep.subr.mxu0 0.0
  %1134 = vmatpush1.msra.mxu0 0.0
  %1135 = vmatprep.subr.mxu0 0.0
  %1136 = vmatpush1.msra.mxu0 0.0
  %1137 = vmatprep.subr.mxu0 0.0
  %1138 = vmatpush1.msra.mxu0 0.0
  %1139 = vmatprep.subr.mxu0 0.0
  %1140 = vmatpush1.msra.mxu0 0.0
  %1141 = vmatprep.subr.mxu0 0.0
  %1142 = vmatpush1.msra.mxu0 0.0
  %1143 = vmatprep.subr.mxu0 0.0
  %1144 = vmatpush1.msra.mxu0 0.0
  %1145 = vmatprep.subr.mxu0 0.0
  %1146 = vmatpush1.msra.mxu0 0.0
  %1147 = vmatprep.subr.mxu0 0.0
  %1148 = vmatpush1.msra.mxu0 0.0
  %1149 = vmatprep.subr.mxu0 0.0
  %1150 = vmatpush1.msra.mxu0 0.0
  %1151 = vmatprep.subr.mxu0 0.0
  %1152 = vmatpush1.msra.mxu0 0.0
  %1153 = vmatprep.subr.mxu0 0.0
  %1154 = vmatpush1.msra.mxu0 0.0
  %1155 = vmatprep.subr.mxu0 0.0
  %1156 = vmatpush1.msra.mxu0 0.0
  %1157 = vmatprep.subr.mxu0 0.0
  %1158 = vmatpush1.msra.mxu0 0.0
  %1159 = vmatprep.subr.mxu0 0.0
  %1160 = vmatpush1.msra.mxu0 0.0
  %1161 = vmatprep.subr.mxu0 0.0
  %1162 = vmatpush1.msra.mxu0 0.0
  %1163 = vmatprep.subr.mxu0 0.0
  %1164 = vmatpush1.msra.mxu0 0.0
  %1165 = vmatprep.mubr.f32.mxu0 0.0
  %1166 = vmatmul.mubr.f32.gmra.mrb[0].mxu0 %v1099
  %v1167 = vpop.f32.mrb[0].mxu0
  %v1168 = vadd.f32 0.0, %v1167
  %v1169 = vpop.f32.mrb[0].mxu0
  %1170 = vdwg.mxu0
  %v1172 = vsel %vm656, %v1080, 0
  %1174 = vmatprep.subr.mxu0 0.0
  %1175 = vmatpush1.msra.mxu0 %v1097
  %1176 = vmatprep.subr.mxu0 0.0
  %1177 = vmatpush1.msra.mxu0 0.0
  %1178 = vmatprep.subr.mxu0 0.0
  %1179 = vmatpush1.msra.mxu0 0.0
  %1180 = vmatprep.subr.mxu0 0.0
  %1181 = vmatpush1.msra.mxu0 0.0
  %1182 = vmatprep.subr.mxu0 0.0
  %1183 = vmatpush1.msra.mxu0 0.0
  %1184 = vmatprep.subr.mxu0 0.0
  %1185 = vmatpush1.msra.mxu0 0.0
  %1186 = vmatprep.subr.mxu0 0.0
  %1187 = vmatpush1.msra.mxu0 0.0
  %1188 = vmatprep.subr.mxu0 0.0
  %1189 = vmatpush1.msra.mxu0 0.0
  %1190 = vmatprep.subr.mxu0 0.0
  %1191 = vmatpush1.msra.mxu0 0.0
  %1192 = vmatprep.subr.mxu0 0.0
  %1193 = vmatpush1.msra.mxu0 0.0
  %1194 = vmatprep.subr.mxu0 0.0
  %1195 = vmatpush1.msra.mxu0 0.0
  %1196 = vmatprep.subr.mxu0 0.0
  %1197 = vmatpush1.msra.mxu0 0.0
  %1198 = vmatprep.subr.mxu0 0.0
  %1199 = vmatpush1.msra.mxu0 0.0
  %1200 = vmatprep.subr.mxu0 0.0
  %1201 = vmatpush1.msra.mxu0 0.0
  %1202 = vmatprep.subr.mxu0 0.0
  %1203 = vmatpush1.msra.mxu0 0.0
  %1204 = vmatprep.subr.mxu0 0.0
  %1205 = vmatpush1.msra.mxu0 0.0
  %1206 = vmatprep.subr.mxu0 0.0
  %1207 = vmatpush1.msra.mxu0 0.0
  %1208 = vmatprep.subr.mxu0 0.0
  %1209 = vmatpush1.msra.mxu0 0.0
  %1210 = vmatprep.subr.mxu0 0.0
  %1211 = vmatpush1.msra.mxu0 0.0
  %1212 = vmatprep.subr.mxu0 0.0
  %1213 = vmatpush1.msra.mxu0 0.0
  %1214 = vmatprep.subr.mxu0 0.0
  %1215 = vmatpush1.msra.mxu0 0.0
  %1216 = vmatprep.subr.mxu0 0.0
  %1217 = vmatpush1.msra.mxu0 0.0
  %1218 = vmatprep.subr.mxu0 0.0
  %1219 = vmatpush1.msra.mxu0 0.0
  %1220 = vmatprep.subr.mxu0 0.0
  %1221 = vmatpush1.msra.mxu0 0.0
  %1222 = vmatprep.subr.mxu0 0.0
  %1223 = vmatpush1.msra.mxu0 0.0
  %1224 = vmatprep.subr.mxu0 0.0
  %1225 = vmatpush1.msra.mxu0 0.0
  %1226 = vmatprep.subr.mxu0 0.0
  %1227 = vmatpush1.msra.mxu0 0.0
  %1228 = vmatprep.subr.mxu0 0.0
  %1229 = vmatpush1.msra.mxu0 0.0
  %1230 = vmatprep.subr.mxu0 0.0
  %1231 = vmatpush1.msra.mxu0 0.0
  %1232 = vmatprep.subr.mxu0 0.0
  %1233 = vmatpush1.msra.mxu0 0.0
  %1234 = vmatprep.subr.mxu0 0.0
  %1235 = vmatpush1.msra.mxu0 0.0
  %1236 = vmatprep.subr.mxu0 0.0
  %1237 = vmatpush1.msra.mxu0 0.0
  %1238 = vmatprep.mubr.f32.mxu0 0.0
  %1239 = vmatmul.mubr.f32.gmra.mrb[0].mxu0 %v1172
  %v1240 = vpop.f32.mrb[0].mxu0
  %v1241 = vadd.f32 0.0, %v1240
  %v1242 = vpop.f32.mrb[0].mxu0
  %1243 = vdwg.mxu0
  %v1244 = vmul.f32 %v1030, %v1168
  %v1245 = vmul.f32 %v1031, %v1241
  %v1246 = vsub.f32 %v1014, %v1244
  %v1247 = vsub.f32 %v1015, %v1245
  %v1248 = vand.u32 2147483647, %v1246
  %v1249 = vand.u32 2147483647, %v1247
  %v1250 = vsel %vm477, %v1248, 0.0
  %1251 = vadd.xlane.f32.xlu0 %v1250
  %v1252 = vpop.xlane.xlu0 %1251
  %v1253 = vsel %vm477, %v1249, 0.0
  %1254 = vadd.xlane.f32.xlu0 %v1253
  %v1255 = vpop.xlane.xlu0 %1254
  %v1258 = vlaneseq
  %v1259 = vshrl.u32 %v1258, 7
  %v1260 = vsub.s32 %v684, %v1259
  %v1261 = vrot.slane %v1252, %v1260
  %v1262 = vlaneseq
  %v1263 = vshrl.u32 %v1262, 7
  %v1264 = vsub.s32 %v684, %v1263
  %v1265 = vrot.slane %v1255, %v1264
  %vm1266 = vcmask 1041409
  %v1267 = vsel %vm1266, %v1265, %v1261
  %vm1269 = vcmask 58368
  %1270 = vst.msk [vmem:[%s8] sm:$0x3] %vm1269, %v1267
  %v1271 = vsel %vm477, %v104, -inf
  %v1272 = vrot.slane %v1271, 4
  %v1273 = vmax.f32 %v1271, %v1272
  %v1274 = vrot.slane %v1273, 2
  %v1275 = vmax.f32 %v1273, %v1274
  %v1276 = vrot.slane %v1275, 1
  %v1277 = vmax.f32 %v1275, %v1276
  %v1278 = vsel %vm477, %v177, -inf
  %v1279 = vrot.slane %v1278, 4
  %v1280 = vmax.f32 %v1278, %v1279
  %v1281 = vrot.slane %v1280, 2
  %v1282 = vmax.f32 %v1280, %v1281
  %v1283 = vrot.slane %v1282, 1
  %v1284 = vmax.f32 %v1282, %v1283
  %v1285 = vsel %vm477, %v104, 0.0
  %v1286 = vrot.slane %v1285, 4
  %v1287 = vadd.f32 %v1285, %v1286
  %v1288 = vrot.slane %v1287, 2
  %v1289 = vadd.f32 %v1287, %v1288
  %v1290 = vrot.slane %v1289, 1
  %v1291 = vadd.f32 %v1289, %v1290
  %v1292 = vsel %vm477, %v177, 0.0
  %v1293 = vrot.slane %v1292, 4
  %v1294 = vadd.f32 %v1292, %v1293
  %v1295 = vrot.slane %v1294, 2
  %v1296 = vadd.f32 %v1294, %v1295
  %v1297 = vrot.slane %v1296, 1
  %v1298 = vadd.f32 %v1296, %v1297
  %v1299 = vmul.f32 %v1291, 0.125
  %v1300 = vmul.f32 %v1298, 0.125
  %v1303 = vsel %vm1266, %v1284, %v1277
  %v1307 = vsel %vm1266, %v1300, %v1299
  %1308 = vrot.lane.b32.xlu0 %v1307, 32
  %v1309 = vpop.permute.xlu0 %1308
  %v1311 = vsel %vm477, %v1303, %v1309
  %vm1312 = vcmask 517120
  %1313 = vst.msk [vmem:[%s9] sm:$0x3] %vm1312, %v1311
  // Predicated region
  $region26: #{forward.5} parent=0 // pred_check
    _
  $region27: #{forward.5} parent=0 // pred_check_branch
    %1315 = sbr.rel (0) target = $region29
  $region28: #{forward.5} parent=0 // pred_region
    _
  $region29: #{forward.5} parent=0 // pred_fallthru
    _
  // Predicated region
  $region30: #{forward.5} parent=0 // pred_check
    _
  $region31: #{forward.5} parent=0 // pred_check_branch
    %1317 = sbr.rel (0) target = $region33
  $region32: #{forward.5} parent=0 // pred_region
    _
  $region33: #{forward.5} parent=0 // pred_fallthru
    _
  // Predicated region
  $region34: #{forward.5} parent=0 // pred_check
    _
  $region35: #{forward.5} parent=0 // pred_check_branch
    %1319 = sbr.rel (0) target = $region37
  $region36: #{forward.5} parent=0 // pred_region
    _
  $region37: #{forward.5} parent=0 // pred_fallthru
    _
  // Predicated region
  $region38: #{forward.5} parent=0 // pred_check
    _
  $region39: #{forward.5} parent=0 // pred_check_branch
    %1321 = sbr.rel (0) target = $region41
  $region40: #{forward.5} parent=0 // pred_region
    _
  $region41: #{forward.5} parent=0 // pred_fallthru
    _
  // Predicated region
  $region42: #{forward.5} parent=0 // pred_check
    _
  $region43: #{forward.5} parent=0 // pred_check_branch
    %1323 = sbr.rel (0) target = $region45
  $region44: #{forward.5} parent=0 // pred_region
    _
  $region45: #{forward.5} parent=0 // pred_fallthru
    _
  // Predicated region
  $region46: #{forward.5} parent=0 // pred_check
    _
  $region47: #{forward.5} parent=0 // pred_check_branch
    %1325 = sbr.rel (0) target = $region49
  $region48: #{forward.5} parent=0 // pred_region
    _
  $region49: #{forward.5} parent=0 // pred_fallthru
    _
  // Predicated region
  $region50: #{forward.5} parent=0 // pred_check
    _
  $region51: #{forward.5} parent=0 // pred_check_branch
    %1327 = sbr.rel (0) target = $region53
  $region52: #{forward.5} parent=0 // pred_region
    _
  $region53: #{forward.5} parent=0 // pred_fallthru
    _
  // Predicated region
  $region54: #{forward.5} parent=0 // pred_check
    _
  $region55: #{forward.5} parent=0 // pred_check_branch
    %1329 = sbr.rel (0) target = $region57
  $region56: #{forward.5} parent=0 // pred_region
    _
  $region57: #{forward.5} parent=0 // pred_fallthru
    _

// kernel: forward.7
$region0: #{forward.7}
  #allocation0 [shape = 'u32[]', space=smem, size = 0x4, offset = 0x4, fixed_abs, tag = 'smem constant byte address 0x4 - core index']
  #allocation1 [shape = 'u32[144,128]{1,0:T(1,128)}', space=vmem, size = 0x12000, scoped, tag = 'internal scratch']
  %s0 = inlined_call_operand.vmem [shape: f32[2,64], index: 0, kind: input, shape index: {}]
  %s1 = inlined_call_operand.vmem [shape: f32[2,64], index: 1, kind: input, shape index: {}]
  %s2 = inlined_call_operand.vmem [shape: f32[2,64], index: 2, kind: input, shape index: {}]
  %s3 = inlined_call_operand.vmem [shape: f32[64,32], index: 3, kind: input, shape index: {}]
  %s4 = inlined_call_operand.vmem [shape: f32[1,32], index: 4, kind: input, shape index: {}]
  %s5 = inlined_call_operand.vmem [shape: f32[32,32], index: 5, kind: input, shape index: {}]
  %s6 = inlined_call_operand.vmem [shape: f32[1,32], index: 6, kind: input, shape index: {}]
  %s7 = inlined_call_operand.vmem [shape: f32[32,4], index: 7, kind: input, shape index: {}]
  %s8 = inlined_call_operand.vmem [shape: f32[1,4], index: 8, kind: input, shape index: {}]
  %s9 = inlined_call_operand.hbm [shape: f32[2,4], index: 9, kind: output, shape index: {0}]
  %s10 = inlined_call_operand.hbm [shape: f32[2,64], index: 10, kind: output, shape index: {1}]
  %11 = xla_tuple %s9, %s10
  %s12 = sld [smem:[#allocation0]]
  $region54: #{forward.7} parent=0
    _
  %s14 = ssub.s32 1, %s12
  %s15 = scalar_select 0, %s14, %s12
  $region1: #{forward.7} parent=0
    #allocation2 [shape = 'u8[1024]{0}', space=vmem, size = 0x400, scoped, tag = 'output window, operand 0, single buffered']
    #allocation3 [shape = 's32[1]{0}', space=sflag, size = 0x4, scoped, tag = 'scoped memory for forward.7']
    #allocation4 [shape = 'u8[1024]{0}', space=vmem, size = 0x400, scoped, tag = 'output window, operand 1, single buffered']
    #allocation5 [shape = 's32[1]{0}', space=sflag, size = 0x4, scoped, tag = 'scoped memory for forward.7']
    %16 = vsyncpa [#allocation3], 0
    %17 = vsyncpa [#allocation5], 0
    // Predicated region
    $region2: #{forward.7} parent=1 // pred_check
      _
    $region3: #{forward.7} parent=1 // pred_check_branch
      %19 = sbr.rel (0) target = $region5
    $region4: #{forward.7} parent=1 // pred_region
      _
    $region5: #{forward.7} parent=1 // pred_fallthru
      _
    // Predicated region
    $region6: #{forward.7} parent=1 // pred_check
      _
    $region7: #{forward.7} parent=1 // pred_check_branch
      %21 = sbr.rel (0) target = $region9
    $region8: #{forward.7} parent=1 // pred_region
      _
    $region9: #{forward.7} parent=1 // pred_fallthru
      _
    // Predicated region
    $region10: #{forward.7} parent=1 // pred_check
      _
    $region11: #{forward.7} parent=1 // pred_check_branch
      %23 = sbr.rel (0) target = $region13
    $region12: #{forward.7} parent=1 // pred_region
      _
    $region13: #{forward.7} parent=1 // pred_fallthru
      _
    // Predicated region
    $region14: #{forward.7} parent=1 // pred_check
      _
    $region15: #{forward.7} parent=1 // pred_check_branch
      %25 = sbr.rel (0) target = $region17
    $region16: #{forward.7} parent=1 // pred_region
      _
    $region17: #{forward.7} parent=1 // pred_fallthru
      _
    // Predicated region
    $region18: #{forward.7} parent=1 // pred_check
      _
    $region19: #{forward.7} parent=1 // pred_check_branch
      %27 = sbr.rel (0) target = $region21
    $region20: #{forward.7} parent=1 // pred_region
      _
    $region21: #{forward.7} parent=1 // pred_fallthru
      _
    // Predicated region
    $region22: #{forward.7} parent=1 // pred_check
      _
    $region23: #{forward.7} parent=1 // pred_check_branch
      %29 = sbr.rel (0) target = $region25
    $region24: #{forward.7} parent=1 // pred_region
      _
    $region25: #{forward.7} parent=1 // pred_fallthru
      _
    // Predicated region
    $region26: #{forward.7} parent=1 // pred_check
      _
    $region27: #{forward.7} parent=1 // pred_check_branch
      %31 = sbr.rel (0) target = $region29
    $region28: #{forward.7} parent=1 // pred_region
      _
    $region29: #{forward.7} parent=1 // pred_fallthru
      _
    // Predicated region
    $region30: #{forward.7} parent=1 // pred_check
      _
    $region31: #{forward.7} parent=1 // pred_check_branch
      %33 = sbr.rel (0) target = $region33
    $region32: #{forward.7} parent=1 // pred_region
      _
    $region33: #{forward.7} parent=1 // pred_fallthru
      _
    // Predicated region
    $region34: #{forward.7} parent=1 // pred_check
      _
    $region35: #{forward.7} parent=1 // pred_check_branch
      %35 = sbr.rel (0) target = $region37
    $region36: #{forward.7} parent=1 // pred_region
      _
    $region37: #{forward.7} parent=1 // pred_fallthru
      _
    %v36 = vld [vmem:[%s0] sm:$0x3]
    %v37 = vmax.f32 %v36, 0.0
    %v38 = vld [vmem:[%s1] sm:$0x3]
    %v39 = vmax.f32 %v38, 0.0
    %v40 = vadd.f32 %v37, %v39
    %v41 = vld [vmem:[%s2] sm:$0x3]
    %v42 = vmax.f32 %v41, 0.0
    %v43 = vadd.f32 %v40, %v42
    %vm44 = vcmask 517120
    %45 = vst.msk [vmem:[#allocation4] sm:$0x3] %vm44, %v43
    %v46 = vld [vmem:[%s3] sm:$0xff]
    %v47 = vld [vmem:[%s3 + $0x8] sm:$0xff]
    %v48 = vld [vmem:[%s3 + $0x10] sm:$0xff]
    %v49 = vld [vmem:[%s3 + $0x18] sm:$0xff]
    %v50 = vld [vmem:[%s3 + $0x20] sm:$0xff]
    %v51 = vld [vmem:[%s3 + $0x28] sm:$0xff]
    %v52 = vld [vmem:[%s3 + $0x30] sm:$0xff]
    %v53 = vld [vmem:[%s3 + $0x38] sm:$0xff]
    %v54 = vld [vmem:[%s4] sm:$0x1]
    %v56 = vlaneseq
    %v57 = vshrl.u32 %v56, 7
    %v58 = vsub.s32 0, %v57
    %v59 = vrot.slane %v54, %v58
    %vm61 = vcmask 523264
    %v63 = vsel %vm61, %v43, 0
    %65 = vmatprep.subr.mxu0 0.0
    %66 = vmatpush1.msra.mxu0 %v46
    %67 = vmatprep.subr.mxu0 0.0
    %68 = vmatpush1.msra.mxu0 %v47
    %69 = vmatprep.subr.mxu0 0.0
    %70 = vmatpush1.msra.mxu0 %v48
    %71 = vmatprep.subr.mxu0 0.0
    %72 = vmatpush1.msra.mxu0 %v49
    %73 = vmatprep.subr.mxu0 0.0
    %74 = vmatpush1.msra.mxu0 %v50
    %75 = vmatprep.subr.mxu0 0.0
    %76 = vmatpush1.msra.mxu0 %v51
    %77 = vmatprep.subr.mxu0 0.0
    %78 = vmatpush1.msra.mxu0 %v52
    %79 = vmatprep.subr.mxu0 0.0
    %80 = vmatpush1.msra.mxu0 %v53
    %81 = vmatprep.subr.mxu0 0.0
    %82 = vmatpush1.msra.mxu0 0.0
    %83 = vmatprep.subr.mxu0 0.0
    %84 = vmatpush1.msra.mxu0 0.0
    %85 = vmatprep.subr.mxu0 0.0
    %86 = vmatpush1.msra.mxu0 0.0
    %87 = vmatprep.subr.mxu0 0.0
    %88 = vmatpush1.msra.mxu0 0.0
    %89 = vmatprep.subr.mxu0 0.0
    %90 = vmatpush1.msra.mxu0 0.0
    %91 = vmatprep.subr.mxu0 0.0
    %92 = vmatpush1.msra.mxu0 0.0
    %93 = vmatprep.subr.mxu0 0.0
    %94 = vmatpush1.msra.mxu0 0.0
    %95 = vmatprep.subr.mxu0 0.0
    %96 = vmatpush1.msra.mxu0 0.0
    %97 = vmatprep.subr.mxu0 0.0
    %98 = vmatpush1.msra.mxu0 0.0
    %99 = vmatprep.subr.mxu0 0.0
    %100 = vmatpush1.msra.mxu0 0.0
    %101 = vmatprep.subr.mxu0 0.0
    %102 = vmatpush1.msra.mxu0 0.0
    %103 = vmatprep.subr.mxu0 0.0
    %104 = vmatpush1.msra.mxu0 0.0
    %105 = vmatprep.subr.mxu0 0.0
    %106 = vmatpush1.msra.mxu0 0.0
    %107 = vmatprep.subr.mxu0 0.0
    %108 = vmatpush1.msra.mxu0 0.0
    %109 = vmatprep.subr.mxu0 0.0
    %110 = vmatpush1.msra.mxu0 0.0
    %111 = vmatprep.subr.mxu0 0.0
    %112 = vmatpush1.msra.mxu0 0.0
    %113 = vmatprep.subr.mxu0 0.0
    %114 = vmatpush1.msra.mxu0 0.0
    %115 = vmatprep.subr.mxu0 0.0
    %116 = vmatpush1.msra.mxu0 0.0
    %117 = vmatprep.subr.mxu0 0.0
    %118 = vmatpush1.msra.mxu0 0.0
    %119 = vmatprep.subr.mxu0 0.0
    %120 = vmatpush1.msra.mxu0 0.0
    %121 = vmatprep.subr.mxu0 0.0
    %122 = vmatpush1.msra.mxu0 0.0
    %123 = vmatprep.subr.mxu0 0.0
    %124 = vmatpush1.msra.mxu0 0.0
    %125 = vmatprep.subr.mxu0 0.0
    %126 = vmatpush1.msra.mxu0 0.0
    %127 = vmatprep.subr.mxu0 0.0
    %128 = vmatpush1.msra.mxu0 0.0
    %129 = vmatprep.mubr.f32.mxu0 0.0
    %130 = vmatmul.mubr.f32.gmra.mrb[0].mxu0 %v63
    %v131 = vpop.f32.mrb[0].mxu0
    %v132 = vadd.f32 %v59, %v131
    %v133 = vpop.f32.mrb[0].mxu0
    %134 = vdwg.mxu0
    %v135 = vmax.f32 %v132, 0.0
    %v136 = vld [vmem:[%s5] sm:$0xff]
    %v137 = vld [vmem:[%s5 + $0x8] sm:$0xff]
    %v138 = vld [vmem:[%s5 + $0x10] sm:$0xff]
    %v139 = vld [vmem:[%s5 + $0x18] sm:$0xff]
    %v140 = vld [vmem:[%s6] sm:$0x1]
    %v142 = vlaneseq
    %v143 = vshrl.u32 %v142, 7
    %v144 = vsub.s32 0, %v143
    %v145 = vrot.slane %v140, %v144
    %vm147 = vcmask 261120
    %v149 = vsel %vm147, %v135, 0
    %151 = vmatprep.subr.mxu0 0.0
    %152 = vmatpush1.msra.mxu0 %v136
    %153 = vmatprep.subr.mxu0 0.0
    %154 = vmatpush1.msra.mxu0 %v137
    %155 = vmatprep.subr.mxu0 0.0
    %156 = vmatpush1.msra.mxu0 %v138
    %157 = vmatprep.subr.mxu0 0.0
    %158 = vmatpush1.msra.mxu0 %v139
    %159 = vmatprep.subr.mxu0 0.0
    %160 = vmatpush1.msra.mxu0 0.0
    %161 = vmatprep.subr.mxu0 0.0
    %162 = vmatpush1.msra.mxu0 0.0
    %163 = vmatprep.subr.mxu0 0.0
    %164 = vmatpush1.msra.mxu0 0.0
    %165 = vmatprep.subr.mxu0 0.0
    %166 = vmatpush1.msra.mxu0 0.0
    %167 = vmatprep.subr.mxu0 0.0
    %168 = vmatpush1.msra.mxu0 0.0
    %169 = vmatprep.subr.mxu0 0.0
    %170 = vmatpush1.msra.mxu0 0.0
    %171 = vmatprep.subr.mxu0 0.0
    %172 = vmatpush1.msra.mxu0 0.0
    %173 = vmatprep.subr.mxu0 0.0
    %174 = vmatpush1.msra.mxu0 0.0
    %175 = vmatprep.subr.mxu0 0.0
    %176 = vmatpush1.msra.mxu0 0.0
    %177 = vmatprep.subr.mxu0 0.0
    %178 = vmatpush1.msra.mxu0 0.0
    %179 = vmatprep.subr.mxu0 0.0
    %180 = vmatpush1.msra.mxu0 0.0
    %181 = vmatprep.subr.mxu0 0.0
    %182 = vmatpush1.msra.mxu0 0.0
    %183 = vmatprep.subr.mxu0 0.0
    %184 = vmatpush1.msra.mxu0 0.0
    %185 = vmatprep.subr.mxu0 0.0
    %186 = vmatpush1.msra.mxu0 0.0
    %187 = vmatprep.subr.mxu0 0.0
    %188 = vmatpush1.msra.mxu0 0.0
    %189 = vmatprep.subr.mxu0 0.0
    %190 = vmatpush1.msra.mxu0 0.0
    %191 = vmatprep.subr.mxu0 0.0
    %192 = vmatpush1.msra.mxu0 0.0
    %193 = vmatprep.subr.mxu0 0.0
    %194 = vmatpush1.msra.mxu0 0.0
    %195 = vmatprep.subr.mxu0 0.0
    %196 = vmatpush1.msra.mxu0 0.0
    %197 = vmatprep.subr.mxu0 0.0
    %198 = vmatpush1.msra.mxu0 0.0
    %199 = vmatprep.subr.mxu0 0.0
    %200 = vmatpush1.msra.mxu0 0.0
    %201 = vmatprep.subr.mxu0 0.0
    %202 = vmatpush1.msra.mxu0 0.0
    %203 = vmatprep.subr.mxu0 0.0
    %204 = vmatpush1.msra.mxu0 0.0
    %205 = vmatprep.subr.mxu0 0.0
    %206 = vmatpush1.msra.mxu0 0.0
    %207 = vmatprep.subr.mxu0 0.0
    %208 = vmatpush1.msra.mxu0 0.0
    %209 = vmatprep.subr.mxu0 0.0
    %210 = vmatpush1.msra.mxu0 0.0
    %211 = vmatprep.subr.mxu0 0.0
    %212 = vmatpush1.msra.mxu0 0.0
    %213 = vmatprep.subr.mxu0 0.0
    %214 = vmatpush1.msra.mxu0 0.0
    %215 = vmatprep.mubr.f32.mxu0 0.0
    %216 = vmatmul.mubr.f32.gmra.mrb[0].mxu0 %v149
    %v217 = vpop.f32.mrb[0].mxu0
    %v218 = vadd.f32 %v145, %v217
    %v219 = vpop.f32.mrb[0].mxu0
    %220 = vdwg.mxu0
    %v221 = vld [vmem:[%s7] sm:$0xff]
    %v222 = vld [vmem:[%s7 + $0x8] sm:$0xff]
    %v223 = vld [vmem:[%s7 + $0x10] sm:$0xff]
    %v224 = vld [vmem:[%s7 + $0x18] sm:$0xff]
    %v225 = vld [vmem:[%s8] sm:$0x1]
    %v227 = vlaneseq
    %v228 = vshrl.u32 %v227, 7
    %v229 = vsub.s32 0, %v228
    %v230 = vrot.slane %v225, %v229
    %v233 = vsel %vm147, %v218, 0
    %235 = vmatprep.subr.mxu0 0.0
    %236 = vmatpush1.msra.mxu0 %v221
    %237 = vmatprep.subr.mxu0 0.0
    %238 = vmatpush1.msra.mxu0 %v222
    %239 = vmatprep.subr.mxu0 0.0
    %240 = vmatpush1.msra.mxu0 %v223
    %241 = vmatprep.subr.mxu0 0.0
    %242 = vmatpush1.msra.mxu0 %v224
    %243 = vmatprep.subr.mxu0 0.0
    %244 = vmatpush1.msra.mxu0 0.0
    %245 = vmatprep.subr.mxu0 0.0
    %246 = vmatpush1.msra.mxu0 0.0
    %247 = vmatprep.subr.mxu0 0.0
    %248 = vmatpush1.msra.mxu0 0.0
    %249 = vmatprep.subr.mxu0 0.0
    %250 = vmatpush1.msra.mxu0 0.0
    %251 = vmatprep.subr.mxu0 0.0
    %252 = vmatpush1.msra.mxu0 0.0
    %253 = vmatprep.subr.mxu0 0.0
    %254 = vmatpush1.msra.mxu0 0.0
    %255 = vmatprep.subr.mxu0 0.0
    %256 = vmatpush1.msra.mxu0 0.0
    %257 = vmatprep.subr.mxu0 0.0
    %258 = vmatpush1.msra.mxu0 0.0
    %259 = vmatprep.subr.mxu0 0.0
    %260 = vmatpush1.msra.mxu0 0.0
    %261 = vmatprep.subr.mxu0 0.0
    %262 = vmatpush1.msra.mxu0 0.0
    %263 = vmatprep.subr.mxu0 0.0
    %264 = vmatpush1.msra.mxu0 0.0
    %265 = vmatprep.subr.mxu0 0.0
    %266 = vmatpush1.msra.mxu0 0.0
    %267 = vmatprep.subr.mxu0 0.0
    %268 = vmatpush1.msra.mxu0 0.0
    %269 = vmatprep.subr.mxu0 0.0
    %270 = vmatpush1.msra.mxu0 0.0
    %271 = vmatprep.subr.mxu0 0.0
    %272 = vmatpush1.msra.mxu0 0.0
    %273 = vmatprep.subr.mxu0 0.0
    %274 = vmatpush1.msra.mxu0 0.0
    %275 = vmatprep.subr.mxu0 0.0
    %276 = vmatpush1.msra.mxu0 0.0
    %277 = vmatprep.subr.mxu0 0.0
    %278 = vmatpush1.msra.mxu0 0.0
    %279 = vmatprep.subr.mxu0 0.0
    %280 = vmatpush1.msra.mxu0 0.0
    %281 = vmatprep.subr.mxu0 0.0
    %282 = vmatpush1.msra.mxu0 0.0
    %283 = vmatprep.subr.mxu0 0.0
    %284 = vmatpush1.msra.mxu0 0.0
    %285 = vmatprep.subr.mxu0 0.0
    %286 = vmatpush1.msra.mxu0 0.0
    %287 = vmatprep.subr.mxu0 0.0
    %288 = vmatpush1.msra.mxu0 0.0
    %289 = vmatprep.subr.mxu0 0.0
    %290 = vmatpush1.msra.mxu0 0.0
    %291 = vmatprep.subr.mxu0 0.0
    %292 = vmatpush1.msra.mxu0 0.0
    %293 = vmatprep.subr.mxu0 0.0
    %294 = vmatpush1.msra.mxu0 0.0
    %295 = vmatprep.subr.mxu0 0.0
    %296 = vmatpush1.msra.mxu0 0.0
    %297 = vmatprep.subr.mxu0 0.0
    %298 = vmatpush1.msra.mxu0 0.0
    %299 = vmatprep.mubr.f32.mxu0 0.0
    %300 = vmatmul.mubr.f32.gmra.mrb[0].mxu0 %v233
    %v301 = vpop.f32.mrb[0].mxu0
    %v302 = vadd.f32 %v230, %v301
    %v303 = vpop.f32.mrb[0].mxu0
    %304 = vdwg.mxu0
    %vm305 = vcmask 25600
    %v306 = vsel %vm305, %v302, -inf
    %307 = vmax.xlane.f32.xlu0 %v306
    %v308 = vpop.xlane.xlu0 %307
    %v309 = vsub.f32 %v302, %v308
    %v310 = vmul.f32 %v309, 1.442695
    %v311 = vpow.pop %v310
    %v312 = vsel %vm305, %v311, 0.0
    %313 = vadd.xlane.f32.xlu0 %v312
    %v314 = vpop.xlane.xlu0 %313
    %v315 = vlog2.pop %v314
    %v316 = vmul.f32 %v315, 0.6931472
    %v317 = vsub.f32 %v309, %v316
    %318 = vst.msk [vmem:[#allocation2] sm:$0x3] %vm305, %v317
    // Predicated region
    $region38: #{forward.7} parent=1 // pred_check
      _
    $region39: #{forward.7} parent=1 // pred_check_branch
      %320 = sbr.rel (0) target = $region41
    $region40: #{forward.7} parent=1 // pred_region
      %s322 = ssub.s32 32, 32
      %323 = vsyncadd [#allocation3], %s322
      %s325 = sshll.u32 [#allocation2], 4
      %s326 = int_to_ptr.vmem [resolvable:$true] %s325
      %328 = dma.vmem_to_hbm [thread:$0]  %s326, 32, %s9, [#allocation3]
    $region41: #{forward.7} parent=1 // pred_fallthru
      _
    // Predicated region
    $region42: #{forward.7} parent=1 // pred_check
      _
    $region43: #{forward.7} parent=1 // pred_check_branch
      %330 = sbr.rel (0) target = $region45
    $region44: #{forward.7} parent=1 // pred_region
      %s332 = ssub.s32 32, 32
      %333 = vsyncadd [#allocation5], %s332
      %s335 = sshll.u32 [#allocation4], 4
      %s336 = int_to_ptr.vmem [resolvable:$true] %s335
      %338 = dma.vmem_to_hbm [thread:$0]  %s336, 32, %s10, [#allocation5]
    $region45: #{forward.7} parent=1 // pred_fallthru
      _
    // Predicated region
    $region46: #{forward.7} parent=1 // pred_check
      _
    $region47: #{forward.7} parent=1 // pred_check_branch
      %340 = sbr.rel (0) target = $region49
    $region48: #{forward.7} parent=1 // pred_region
      %341 = dma.done [#allocation3], 32
    $region49: #{forward.7} parent=1 // pred_fallthru
      _
    // Predicated region
    $region50: #{forward.7} parent=1 // pred_check
      _
    $region51: #{forward.7} parent=1 // pred_check_branch
      %343 = sbr.rel (0) target = $region53
    $region52: #{forward.7} parent=1 // pred_region
      %344 = dma.done [#allocation5], 32
    $region53: #{forward.7} parent=1 // pred_fallthru
      _
    %345 = vsyncpa [#allocation3], 1
    %346 = vsyncpa [#allocation5], 1

// kernel: forward.6
$region0: #{forward.6}
  #allocation0 [shape = 'u32[]', space=smem, size = 0x4, offset = 0x4, fixed_abs, tag = 'smem constant byte address 0x4 - core index']
  #allocation1 [shape = 'u32[144,128]{1,0:T(1,128)}', space=vmem, size = 0x12000, scoped, tag = 'internal scratch']
  %s0 = inlined_call_operand.vmem [shape: f32[2,4,8], index: 0, kind: input, shape index: {}]
  %s1 = inlined_call_operand.vmem [shape: f32[2,8,32], index: 1, kind: input, shape index: {}]
  %s2 = inlined_call_operand.vmem [shape: f32[2,8,8], index: 2, kind: input, shape index: {}]
  %s3 = inlined_call_operand.vmem [shape: f32[2,32], index: 3, kind: input, shape index: {}]
  %s4 = inlined_call_operand.vmem [shape: f32[32,32], index: 4, kind: input, shape index: {}]
  %s5 = inlined_call_operand.vmem [shape: f32[1,32], index: 5, kind: input, shape index: {}]
  %s6 = inlined_call_operand.vmem [shape: f32[2,64], index: 6, kind: output, shape index: {0}]
  %s7 = inlined_call_operand.vmem [shape: f32[2,64], index: 7, kind: output, shape index: {1}]
  %8 = xla_tuple %s6, %s7
  %s9 = sld [smem:[#allocation0]]
  $region42: #{forward.6} parent=0
    _
  %s11 = ssub.s32 1, %s9
  %s12 = scalar_select 0, %s11, %s9
  // Predicated region
  $region2: #{forward.6} parent=0 // pred_check
    _
  $region3: #{forward.6} parent=0 // pred_check_branch
    %14 = sbr.rel (0) target = $region5
  $region4: #{forward.6} parent=0 // pred_region
    _
  $region5: #{forward.6} parent=0 // pred_fallthru
    _
  // Predicated region
  $region6: #{forward.6} parent=0 // pred_check
    _
  $region7: #{forward.6} parent=0 // pred_check_branch
    %16 = sbr.rel (0) target = $region9
  $region8: #{forward.6} parent=0 // pred_region
    _
  $region9: #{forward.6} parent=0 // pred_fallthru
    _
  // Predicated region
  $region10: #{forward.6} parent=0 // pred_check
    _
  $region11: #{forward.6} parent=0 // pred_check_branch
    %18 = sbr.rel (0) target = $region13
  $region12: #{forward.6} parent=0 // pred_region
    _
  $region13: #{forward.6} parent=0 // pred_fallthru
    _
  // Predicated region
  $region14: #{forward.6} parent=0 // pred_check
    _
  $region15: #{forward.6} parent=0 // pred_check_branch
    %20 = sbr.rel (0) target = $region17
  $region16: #{forward.6} parent=0 // pred_region
    _
  $region17: #{forward.6} parent=0 // pred_fallthru
    _
  // Predicated region
  $region18: #{forward.6} parent=0 // pred_check
    _
  $region19: #{forward.6} parent=0 // pred_check_branch
    %22 = sbr.rel (0) target = $region21
  $region20: #{forward.6} parent=0 // pred_region
    _
  $region21: #{forward.6} parent=0 // pred_fallthru
    _
  // Predicated region
  $region22: #{forward.6} parent=0 // pred_check
    _
  $region23: #{forward.6} parent=0 // pred_check_branch
    %24 = sbr.rel (0) target = $region25
  $region24: #{forward.6} parent=0 // pred_region
    _
  $region25: #{forward.6} parent=0 // pred_fallthru
    _
  %v25 = vld [vmem:[%s0] sm:$0xf]
  %v26 = vld [vmem:[%s0 + $0x4] sm:$0xf]
  %v27 = vld [vmem:[%s1] sm:$0xff]
  %v28 = vld [vmem:[%s1 + $0x8] sm:$0xff]
  %vm29 = vcmask 64512
  %v31 = vsel %vm29, %v25, 0
  %33 = vmatprep.subr.mxu0 0.0
  %34 = vmatpush1.msra.mxu0 %v27
  %35 = vmatprep.subr.mxu0 0.0
  %36 = vmatpush1.msra.mxu0 0.0
  %37 = vmatprep.subr.mxu0 0.0
  %38 = vmatpush1.msra.mxu0 0.0
  %39 = vmatprep.subr.mxu0 0.0
  %40 = vmatpush1.msra.mxu0 0.0
  %41 = vmatprep.subr.mxu0 0.0
  %42 = vmatpush1.msra.mxu0 0.0
  %43 = vmatprep.subr.mxu0 0.0
  %44 = vmatpush1.msra.mxu0 0.0
  %45 = vmatprep.subr.mxu0 0.0
  %46 = vmatpush1.msra.mxu0 0.0
  %47 = vmatprep.subr.mxu0 0.0
  %48 = vmatpush1.msra.mxu0 0.0
  %49 = vmatprep.subr.mxu0 0.0
  %50 = vmatpush1.msra.mxu0 0.0
  %51 = vmatprep.subr.mxu0 0.0
  %52 = vmatpush1.msra.mxu0 0.0
  %53 = vmatprep.subr.mxu0 0.0
  %54 = vmatpush1.msra.mxu0 0.0
  %55 = vmatprep.subr.mxu0 0.0
  %56 = vmatpush1.msra.mxu0 0.0
  %57 = vmatprep.subr.mxu0 0.0
  %58 = vmatpush1.msra.mxu0 0.0
  %59 = vmatprep.subr.mxu0 0.0
  %60 = vmatpush1.msra.mxu0 0.0
  %61 = vmatprep.subr.mxu0 0.0
  %62 = vmatpush1.msra.mxu0 0.0
  %63 = vmatprep.subr.mxu0 0.0
  %64 = vmatpush1.msra.mxu0 0.0
  %65 = vmatprep.subr.mxu0 0.0
  %66 = vmatpush1.msra.mxu0 0.0
  %67 = vmatprep.subr.mxu0 0.0
  %68 = vmatpush1.msra.mxu0 0.0
  %69 = vmatprep.subr.mxu0 0.0
  %70 = vmatpush1.msra.mxu0 0.0
  %71 = vmatprep.subr.mxu0 0.0
  %72 = vmatpush1.msra.mxu0 0.0
  %73 = vmatprep.subr.mxu0 0.0
  %74 = vmatpush1.msra.mxu0 0.0
  %75 = vmatprep.subr.mxu0 0.0
  %76 = vmatpush1.msra.mxu0 0.0
  %77 = vmatprep.subr.mxu0 0.0
  %78 = vmatpush1.msra.mxu0 0.0
  %79 = vmatprep.subr.mxu0 0.0
  %80 = vmatpush1.msra.mxu0 0.0
  %81 = vmatprep.subr.mxu0 0.0
  %82 = vmatpush1.msra.mxu0 0.0
  %83 = vmatprep.subr.mxu0 0.0
  %84 = vmatpush1.msra.mxu0 0.0
  %85 = vmatprep.subr.mxu0 0.0
  %86 = vmatpush1.msra.mxu0 0.0
  %87 = vmatprep.subr.mxu0 0.0
  %88 = vmatpush1.msra.mxu0 0.0
  %89 = vmatprep.subr.mxu0 0.0
  %90 = vmatpush1.msra.mxu0 0.0
  %91 = vmatprep.subr.mxu0 0.0
  %92 = vmatpush1.msra.mxu0 0.0
  %93 = vmatprep.subr.mxu0 0.0
  %94 = vmatpush1.msra.mxu0 0.0
  %95 = vmatprep.subr.mxu0 0.0
  %96 = vmatpush1.msra.mxu0 0.0
  %97 = vmatprep.mubr.f32.mxu0 0.0
  %98 = vmatmul.mubr.f32.gmra.mrb[0].mxu0 %v31
  %v99 = vpop.f32.mrb[0].mxu0
  %v100 = vadd.f32 0.0, %v99
  %v101 = vpop.f32.mrb[0].mxu0
  %102 = vdwg.mxu0
  %v104 = vsel %vm29, %v26, 0
  %106 = vmatprep.subr.mxu0 0.0
  %107 = vmatpush1.msra.mxu0 %v28
  %108 = vmatprep.subr.mxu0 0.0
  %109 = vmatpush1.msra.mxu0 0.0
  %110 = vmatprep.subr.mxu0 0.0
  %111 = vmatpush1.msra.mxu0 0.0
  %112 = vmatprep.subr.mxu0 0.0
  %113 = vmatpush1.msra.mxu0 0.0
  %114 = vmatprep.subr.mxu0 0.0
  %115 = vmatpush1.msra.mxu0 0.0
  %116 = vmatprep.subr.mxu0 0.0
  %117 = vmatpush1.msra.mxu0 0.0
  %118 = vmatprep.subr.mxu0 0.0
  %119 = vmatpush1.msra.mxu0 0.0
  %120 = vmatprep.subr.mxu0 0.0
  %121 = vmatpush1.msra.mxu0 0.0
  %122 = vmatprep.subr.mxu0 0.0
  %123 = vmatpush1.msra.mxu0 0.0
  %124 = vmatprep.subr.mxu0 0.0
  %125 = vmatpush1.msra.mxu0 0.0
  %126 = vmatprep.subr.mxu0 0.0
  %127 = vmatpush1.msra.mxu0 0.0
  %128 = vmatprep.subr.mxu0 0.0
  %129 = vmatpush1.msra.mxu0 0.0
  %130 = vmatprep.subr.mxu0 0.0
  %131 = vmatpush1.msra.mxu0 0.0
  %132 = vmatprep.subr.mxu0 0.0
  %133 = vmatpush1.msra.mxu0 0.0
  %134 = vmatprep.subr.mxu0 0.0
  %135 = vmatpush1.msra.mxu0 0.0
  %136 = vmatprep.subr.mxu0 0.0
  %137 = vmatpush1.msra.mxu0 0.0
  %138 = vmatprep.subr.mxu0 0.0
  %139 = vmatpush1.msra.mxu0 0.0
  %140 = vmatprep.subr.mxu0 0.0
  %141 = vmatpush1.msra.mxu0 0.0
  %142 = vmatprep.subr.mxu0 0.0
  %143 = vmatpush1.msra.mxu0 0.0
  %144 = vmatprep.subr.mxu0 0.0
  %145 = vmatpush1.msra.mxu0 0.0
  %146 = vmatprep.subr.mxu0 0.0
  %147 = vmatpush1.msra.mxu0 0.0
  %148 = vmatprep.subr.mxu0 0.0
  %149 = vmatpush1.msra.mxu0 0.0
  %150 = vmatprep.subr.mxu0 0.0
  %151 = vmatpush1.msra.mxu0 0.0
  %152 = vmatprep.subr.mxu0 0.0
  %153 = vmatpush1.msra.mxu0 0.0
  %154 = vmatprep.subr.mxu0 0.0
  %155 = vmatpush1.msra.mxu0 0.0
  %156 = vmatprep.subr.mxu0 0.0
  %157 = vmatpush1.msra.mxu0 0.0
  %158 = vmatprep.subr.mxu0 0.0
  %159 = vmatpush1.msra.mxu0 0.0
  %160 = vmatprep.subr.mxu0 0.0
  %161 = vmatpush1.msra.mxu0 0.0
  %162 = vmatprep.subr.mxu0 0.0
  %163 = vmatpush1.msra.mxu0 0.0
  %164 = vmatprep.subr.mxu0 0.0
  %165 = vmatpush1.msra.mxu0 0.0
  %166 = vmatprep.subr.mxu0 0.0
  %167 = vmatpush1.msra.mxu0 0.0
  %168 = vmatprep.subr.mxu0 0.0
  %169 = vmatpush1.msra.mxu0 0.0
  %170 = vmatprep.mubr.f32.mxu0 0.0
  %171 = vmatmul.mubr.f32.gmra.mrb[0].mxu0 %v104
  %v172 = vpop.f32.mrb[0].mxu0
  %v173 = vadd.f32 0.0, %v172
  %v174 = vpop.f32.mrb[0].mxu0
  %175 = vdwg.mxu0
  %v176 = vld [vmem:[%s2] sm:$0xff]
  %v177 = vld [vmem:[%s2 + $0x8] sm:$0xff]
  %178 = vmatprep.subr.mxu0 0.0
  %179 = vmatpush1.msra.mxu0 %v176
  %180 = vmatprep.subr.mxu0 0.0
  %181 = vmatpush1.msra.mxu0 0.0
  %182 = vmatprep.subr.mxu0 0.0
  %183 = vmatpush1.msra.mxu0 0.0
  %184 = vmatprep.subr.mxu0 0.0
  %185 = vmatpush1.msra.mxu0 0.0
  %186 = vmatprep.subr.mxu0 0.0
  %187 = vmatpush1.msra.mxu0 0.0
  %188 = vmatprep.subr.mxu0 0.0
  %189 = vmatpush1.msra.mxu0 0.0
  %190 = vmatprep.subr.mxu0 0.0
  %191 = vmatpush1.msra.mxu0 0.0
  %192 = vmatprep.subr.mxu0 0.0
  %193 = vmatpush1.msra.mxu0 0.0
  %194 = vmatprep.subr.mxu0 0.0
  %195 = vmatpush1.msra.mxu0 0.0
  %196 = vmatprep.subr.mxu0 0.0
  %197 = vmatpush1.msra.mxu0 0.0
  %198 = vmatprep.subr.mxu0 0.0
  %199 = vmatpush1.msra.mxu0 0.0
  %200 = vmatprep.subr.mxu0 0.0
  %201 = vmatpush1.msra.mxu0 0.0
  %202 = vmatprep.subr.mxu0 0.0
  %203 = vmatpush1.msra.mxu0 0.0
  %204 = vmatprep.subr.mxu0 0.0
  %205 = vmatpush1.msra.mxu0 0.0
  %206 = vmatprep.subr.mxu0 0.0
  %207 = vmatpush1.msra.mxu0 0.0
  %208 = vmatprep.subr.mxu0 0.0
  %209 = vmatpush1.msra.mxu0 0.0
  %210 = vmatprep.subr.mxu0 0.0
  %211 = vmatpush1.msra.mxu0 0.0
  %212 = vmatprep.subr.mxu0 0.0
  %213 = vmatpush1.msra.mxu0 0.0
  %214 = vmatprep.subr.mxu0 0.0
  %215 = vmatpush1.msra.mxu0 0.0
  %216 = vmatprep.subr.mxu0 0.0
  %217 = vmatpush1.msra.mxu0 0.0
  %218 = vmatprep.subr.mxu0 0.0
  %219 = vmatpush1.msra.mxu0 0.0
  %220 = vmatprep.subr.mxu0 0.0
  %221 = vmatpush1.msra.mxu0 0.0
  %222 = vmatprep.subr.mxu0 0.0
  %223 = vmatpush1.msra.mxu0 0.0
  %224 = vmatprep.subr.mxu0 0.0
  %225 = vmatpush1.msra.mxu0 0.0
  %226 = vmatprep.subr.mxu0 0.0
  %227 = vmatpush1.msra.mxu0 0.0
  %228 = vmatprep.subr.mxu0 0.0
  %229 = vmatpush1.msra.mxu0 0.0
  %230 = vmatprep.subr.mxu0 0.0
  %231 = vmatpush1.msra.mxu0 0.0
  %232 = vmatprep.subr.mxu0 0.0
  %233 = vmatpush1.msra.mxu0 0.0
  %234 = vmatprep.subr.mxu0 0.0
  %235 = vmatpush1.msra.mxu0 0.0
  %236 = vmatprep.subr.mxu0 0.0
  %237 = vmatpush1.msra.mxu0 0.0
  %238 = vmatprep.subr.mxu0 0.0
  %239 = vmatpush1.msra.mxu0 0.0
  %240 = vmatprep.subr.mxu0 0.0
  %241 = vmatpush1.msra.mxu0 0.0
  %242 = vmatprep.mubr.f32.mxu0 0.0
  %243 = vmatmul.mubr.f32.gmra.mrb[0].mxu0 %v31
  %v244 = vpop.f32.mrb[0].mxu0
  %v245 = vadd.f32 0.0, %v244
  %v246 = vpop.f32.mrb[0].mxu0
  %247 = vdwg.mxu0
  %248 = vmatprep.subr.mxu0 0.0
  %249 = vmatpush1.msra.mxu0 %v177
  %250 = vmatprep.subr.mxu0 0.0
  %251 = vmatpush1.msra.mxu0 0.0
  %252 = vmatprep.subr.mxu0 0.0
  %253 = vmatpush1.msra.mxu0 0.0
  %254 = vmatprep.subr.mxu0 0.0
  %255 = vmatpush1.msra.mxu0 0.0
  %256 = vmatprep.subr.mxu0 0.0
  %257 = vmatpush1.msra.mxu0 0.0
  %258 = vmatprep.subr.mxu0 0.0
  %259 = vmatpush1.msra.mxu0 0.0
  %260 = vmatprep.subr.mxu0 0.0
  %261 = vmatpush1.msra.mxu0 0.0
  %262 = vmatprep.subr.mxu0 0.0
  %263 = vmatpush1.msra.mxu0 0.0
  %264 = vmatprep.subr.mxu0 0.0
  %265 = vmatpush1.msra.mxu0 0.0
  %266 = vmatprep.subr.mxu0 0.0
  %267 = vmatpush1.msra.mxu0 0.0
  %268 = vmatprep.subr.mxu0 0.0
  %269 = vmatpush1.msra.mxu0 0.0
  %270 = vmatprep.subr.mxu0 0.0
  %271 = vmatpush1.msra.mxu0 0.0
  %272 = vmatprep.subr.mxu0 0.0
  %273 = vmatpush1.msra.mxu0 0.0
  %274 = vmatprep.subr.mxu0 0.0
  %275 = vmatpush1.msra.mxu0 0.0
  %276 = vmatprep.subr.mxu0 0.0
  %277 = vmatpush1.msra.mxu0 0.0
  %278 = vmatprep.subr.mxu0 0.0
  %279 = vmatpush1.msra.mxu0 0.0
  %280 = vmatprep.subr.mxu0 0.0
  %281 = vmatpush1.msra.mxu0 0.0
  %282 = vmatprep.subr.mxu0 0.0
  %283 = vmatpush1.msra.mxu0 0.0
  %284 = vmatprep.subr.mxu0 0.0
  %285 = vmatpush1.msra.mxu0 0.0
  %286 = vmatprep.subr.mxu0 0.0
  %287 = vmatpush1.msra.mxu0 0.0
  %288 = vmatprep.subr.mxu0 0.0
  %289 = vmatpush1.msra.mxu0 0.0
  %290 = vmatprep.subr.mxu0 0.0
  %291 = vmatpush1.msra.mxu0 0.0
  %292 = vmatprep.subr.mxu0 0.0
  %293 = vmatpush1.msra.mxu0 0.0
  %294 = vmatprep.subr.mxu0 0.0
  %295 = vmatpush1.msra.mxu0 0.0
  %296 = vmatprep.subr.mxu0 0.0
  %297 = vmatpush1.msra.mxu0 0.0
  %298 = vmatprep.subr.mxu0 0.0
  %299 = vmatpush1.msra.mxu0 0.0
  %300 = vmatprep.subr.mxu0 0.0
  %301 = vmatpush1.msra.mxu0 0.0
  %302 = vmatprep.subr.mxu0 0.0
  %303 = vmatpush1.msra.mxu0 0.0
  %304 = vmatprep.subr.mxu0 0.0
  %305 = vmatpush1.msra.mxu0 0.0
  %306 = vmatprep.subr.mxu0 0.0
  %307 = vmatpush1.msra.mxu0 0.0
  %308 = vmatprep.subr.mxu0 0.0
  %309 = vmatpush1.msra.mxu0 0.0
  %310 = vmatprep.subr.mxu0 0.0
  %311 = vmatpush1.msra.mxu0 0.0
  %312 = vmatprep.mubr.f32.mxu0 0.0
  %313 = vmatmul.mubr.f32.gmra.mrb[0].mxu0 %v104
  %v314 = vpop.f32.mrb[0].mxu0
  %v315 = vadd.f32 0.0, %v314
  %v316 = vpop.f32.mrb[0].mxu0
  %317 = vdwg.mxu0
  %v319 = vsel %vm29, %v245, 0
  %321 = vmatprep.subr.mxu0 0.0
  %322 = vmatpush1.xpose.msra.mxu0 %v31
  %323 = vmatprep.subr.mxu0 0.0
  %324 = vmatpush1.xpose.msra.mxu0 0.0
  %325 = vmatprep.subr.mxu0 0.0
  %326 = vmatpush1.xpose.msra.mxu0 0.0
  %327 = vmatprep.subr.mxu0 0.0
  %328 = vmatpush1.xpose.msra.mxu0 0.0
  %329 = vmatprep.subr.mxu0 0.0
  %330 = vmatpush1.xpose.msra.mxu0 0.0
  %331 = vmatprep.subr.mxu0 0.0
  %332 = vmatpush1.xpose.msra.mxu0 0.0
  %333 = vmatprep.subr.mxu0 0.0
  %334 = vmatpush1.xpose.msra.mxu0 0.0
  %335 = vmatprep.subr.mxu0 0.0
  %336 = vmatpush1.xpose.msra.mxu0 0.0
  %337 = vmatprep.subr.mxu0 0.0
  %338 = vmatpush1.xpose.msra.mxu0 0.0
  %339 = vmatprep.subr.mxu0 0.0
  %340 = vmatpush1.xpose.msra.mxu0 0.0
  %341 = vmatprep.subr.mxu0 0.0
  %342 = vmatpush1.xpose.msra.mxu0 0.0
  %343 = vmatprep.subr.mxu0 0.0
  %344 = vmatpush1.xpose.msra.mxu0 0.0
  %345 = vmatprep.subr.mxu0 0.0
  %346 = vmatpush1.xpose.msra.mxu0 0.0
  %347 = vmatprep.subr.mxu0 0.0
  %348 = vmatpush1.xpose.msra.mxu0 0.0
  %349 = vmatprep.subr.mxu0 0.0
  %350 = vmatpush1.xpose.msra.mxu0 0.0
  %351 = vmatprep.subr.mxu0 0.0
  %352 = vmatpush1.xpose.msra.mxu0 0.0
  %353 = vmatprep.subr.mxu0 0.0
  %354 = vmatpush1.xpose.msra.mxu0 0.0
  %355 = vmatprep.subr.mxu0 0.0
  %356 = vmatpush1.xpose.msra.mxu0 0.0
  %357 = vmatprep.subr.mxu0 0.0
  %358 = vmatpush1.xpose.msra.mxu0 0.0
  %359 = vmatprep.subr.mxu0 0.0
  %360 = vmatpush1.xpose.msra.mxu0 0.0
  %361 = vmatprep.subr.mxu0 0.0
  %362 = vmatpush1.xpose.msra.mxu0 0.0
  %363 = vmatprep.subr.mxu0 0.0
  %364 = vmatpush1.xpose.msra.mxu0 0.0
  %365 = vmatprep.subr.mxu0 0.0
  %366 = vmatpush1.xpose.msra.mxu0 0.0
  %367 = vmatprep.subr.mxu0 0.0
  %368 = vmatpush1.xpose.msra.mxu0 0.0
  %369 = vmatprep.subr.mxu0 0.0
  %370 = vmatpush1.xpose.msra.mxu0 0.0
  %371 = vmatprep.subr.mxu0 0.0
  %372 = vmatpush1.xpose.msra.mxu0 0.0
  %373 = vmatprep.subr.mxu0 0.0
  %374 = vmatpush1.xpose.msra.mxu0 0.0
  %375 = vmatprep.subr.mxu0 0.0
  %376 = vmatpush1.xpose.msra.mxu0 0.0
  %377 = vmatprep.subr.mxu0 0.0
  %378 = vmatpush1.xpose.msra.mxu0 0.0
  %379 = vmatprep.subr.mxu0 0.0
  %380 = vmatpush1.xpose.msra.mxu0 0.0
  %381 = vmatprep.subr.mxu0 0.0
  %382 = vmatpush1.xpose.msra.mxu0 0.0
  %383 = vmatprep.subr.mxu0 0.0
  %384 = vmatpush1.xpose.msra.mxu0 0.0
  %385 = vmatprep.mubr.f32.mxu0 0.0
  %386 = vmatmul.mubr.f32.gmra.mrb[0].mxu0 %v319
  %v387 = vpop.f32.mrb[0].mxu0
  %v388 = vadd.f32 0.0, %v387
  %v389 = vpop.f32.mrb[0].mxu0
  %390 = vdwg.mxu0
  %v392 = vsel %vm29, %v315, 0
  %394 = vmatprep.subr.mxu0 0.0
  %395 = vmatpush1.xpose.msra.mxu0 %v104
  %396 = vmatprep.subr.mxu0 0.0
  %397 = vmatpush1.xpose.msra.mxu0 0.0
  %398 = vmatprep.subr.mxu0 0.0
  %399 = vmatpush1.xpose.msra.mxu0 0.0
  %400 = vmatprep.subr.mxu0 0.0
  %401 = vmatpush1.xpose.msra.mxu0 0.0
  %402 = vmatprep.subr.mxu0 0.0
  %403 = vmatpush1.xpose.msra.mxu0 0.0
  %404 = vmatprep.subr.mxu0 0.0
  %405 = vmatpush1.xpose.msra.mxu0 0.0
  %406 = vmatprep.subr.mxu0 0.0
  %407 = vmatpush1.xpose.msra.mxu0 0.0
  %408 = vmatprep.subr.mxu0 0.0
  %409 = vmatpush1.xpose.msra.mxu0 0.0
  %410 = vmatprep.subr.mxu0 0.0
  %411 = vmatpush1.xpose.msra.mxu0 0.0
  %412 = vmatprep.subr.mxu0 0.0
  %413 = vmatpush1.xpose.msra.mxu0 0.0
  %414 = vmatprep.subr.mxu0 0.0
  %415 = vmatpush1.xpose.msra.mxu0 0.0
  %416 = vmatprep.subr.mxu0 0.0
  %417 = vmatpush1.xpose.msra.mxu0 0.0
  %418 = vmatprep.subr.mxu0 0.0
  %419 = vmatpush1.xpose.msra.mxu0 0.0
  %420 = vmatprep.subr.mxu0 0.0
  %421 = vmatpush1.xpose.msra.mxu0 0.0
  %422 = vmatprep.subr.mxu0 0.0
  %423 = vmatpush1.xpose.msra.mxu0 0.0
  %424 = vmatprep.subr.mxu0 0.0
  %425 = vmatpush1.xpose.msra.mxu0 0.0
  %426 = vmatprep.subr.mxu0 0.0
  %427 = vmatpush1.xpose.msra.mxu0 0.0
  %428 = vmatprep.subr.mxu0 0.0
  %429 = vmatpush1.xpose.msra.mxu0 0.0
  %430 = vmatprep.subr.mxu0 0.0
  %431 = vmatpush1.xpose.msra.mxu0 0.0
  %432 = vmatprep.subr.mxu0 0.0
  %433 = vmatpush1.xpose.msra.mxu0 0.0
  %434 = vmatprep.subr.mxu0 0.0
  %435 = vmatpush1.xpose.msra.mxu0 0.0
  %436 = vmatprep.subr.mxu0 0.0
  %437 = vmatpush1.xpose.msra.mxu0 0.0
  %438 = vmatprep.subr.mxu0 0.0
  %439 = vmatpush1.xpose.msra.mxu0 0.0
  %440 = vmatprep.subr.mxu0 0.0
  %441 = vmatpush1.xpose.msra.mxu0 0.0
  %442 = vmatprep.subr.mxu0 0.0
  %443 = vmatpush1.xpose.msra.mxu0 0.0
  %444 = vmatprep.subr.mxu0 0.0
  %445 = vmatpush1.xpose.msra.mxu0 0.0
  %446 = vmatprep.subr.mxu0 0.0
  %447 = vmatpush1.xpose.msra.mxu0 0.0
  %448 = vmatprep.subr.mxu0 0.0
  %449 = vmatpush1.xpose.msra.mxu0 0.0
  %450 = vmatprep.subr.mxu0 0.0
  %451 = vmatpush1.xpose.msra.mxu0 0.0
  %452 = vmatprep.subr.mxu0 0.0
  %453 = vmatpush1.xpose.msra.mxu0 0.0
  %454 = vmatprep.subr.mxu0 0.0
  %455 = vmatpush1.xpose.msra.mxu0 0.0
  %456 = vmatprep.subr.mxu0 0.0
  %457 = vmatpush1.xpose.msra.mxu0 0.0
  %458 = vmatprep.mubr.f32.mxu0 0.0
  %459 = vmatmul.mubr.f32.gmra.mrb[0].mxu0 %v392
  %v460 = vpop.f32.mrb[0].mxu0
  %v461 = vadd.f32 0.0, %v460
  %v462 = vpop.f32.mrb[0].mxu0
  %463 = vdwg.mxu0
  %v464 = vld [vmem:[%s3] sm:$0x3]
  %v465 = vlaneseq
  %v466 = vshrl.u32 %v465, 7
  %v467 = vsub.s32 0, %v466
  %v468 = vrot.slane %v464, %v467
  %v469 = vmul.f32 %v100, %v468
  %v470 = vmul.f32 %v173, %v468
  %vm471 = vcmask 257024
  %v472 = vsel %vm471, %v469, 0.0
  %473 = vadd.xlane.f32.xlu0 %v472
  %v474 = vpop.xlane.xlu0 %473
  %v475 = vsel %vm471, %v470, 0.0
  %476 = vadd.xlane.f32.xlu0 %v475
  %v477 = vpop.xlane.xlu0 %476
  %v478 = vlaneseq
  %v479 = vshrl.u32 %v478, 7
  %v480 = vsub.s32 1, %v479
  %v481 = vrot.slane %v464, %v480
  %v482 = vmul.f32 %v100, %v481
  %v483 = vmul.f32 %v173, %v481
  %v484 = vsel %vm471, %v482, 0.0
  %485 = vadd.xlane.f32.xlu0 %v484
  %v486 = vpop.xlane.xlu0 %485
  %v487 = vsel %vm471, %v483, 0.0
  %488 = vadd.xlane.f32.xlu0 %v487
  %v489 = vpop.xlane.xlu0 %488
  %vm490 = vcmask 7168
  %v492 = vsel %vm490, 1.0, 0
  %v495 = vsel %vm490, %v486, 0
  %497 = vmatprep.subr.mxu0 0.0
  %498 = vmatpush1.xpose.msra.mxu0 %v495
  %499 = vmatprep.subr.mxu0 0.0
  %500 = vmatpush1.xpose.msra.mxu0 0.0
  %501 = vmatprep.subr.mxu0 0.0
  %502 = vmatpush1.xpose.msra.mxu0 0.0
  %503 = vmatprep.subr.mxu0 0.0
  %504 = vmatpush1.xpose.msra.mxu0 0.0
  %505 = vmatprep.subr.mxu0 0.0
  %506 = vmatpush1.xpose.msra.mxu0 0.0
  %507 = vmatprep.subr.mxu0 0.0
  %508 = vmatpush1.xpose.msra.mxu0 0.0
  %509 = vmatprep.subr.mxu0 0.0
  %510 = vmatpush1.xpose.msra.mxu0 0.0
  %511 = vmatprep.subr.mxu0 0.0
  %512 = vmatpush1.xpose.msra.mxu0 0.0
  %513 = vmatprep.subr.mxu0 0.0
  %514 = vmatpush1.xpose.msra.mxu0 0.0
  %515 = vmatprep.subr.mxu0 0.0
  %516 = vmatpush1.xpose.msra.mxu0 0.0
  %517 = vmatprep.subr.mxu0 0.0
  %518 = vmatpush1.xpose.msra.mxu0 0.0
  %519 = vmatprep.subr.mxu0 0.0
  %520 = vmatpush1.xpose.msra.mxu0 0.0
  %521 = vmatprep.subr.mxu0 0.0
  %522 = vmatpush1.xpose.msra.mxu0 0.0
  %523 = vmatprep.subr.mxu0 0.0
  %524 = vmatpush1.xpose.msra.mxu0 0.0
  %525 = vmatprep.subr.mxu0 0.0
  %526 = vmatpush1.xpose.msra.mxu0 0.0
  %527 = vmatprep.subr.mxu0 0.0
  %528 = vmatpush1.xpose.msra.mxu0 0.0
  %529 = vmatprep.subr.mxu0 0.0
  %530 = vmatpush1.xpose.msra.mxu0 0.0
  %531 = vmatprep.subr.mxu0 0.0
  %532 = vmatpush1.xpose.msra.mxu0 0.0
  %533 = vmatprep.subr.mxu0 0.0
  %534 = vmatpush1.xpose.msra.mxu0 0.0
  %535 = vmatprep.subr.mxu0 0.0
  %536 = vmatpush1.xpose.msra.mxu0 0.0
  %537 = vmatprep.subr.mxu0 0.0
  %538 = vmatpush1.xpose.msra.mxu0 0.0
  %539 = vmatprep.subr.mxu0 0.0
  %540 = vmatpush1.xpose.msra.mxu0 0.0
  %541 = vmatprep.subr.mxu0 0.0
  %542 = vmatpush1.xpose.msra.mxu0 0.0
  %543 = vmatprep.subr.mxu0 0.0
  %544 = vmatpush1.xpose.msra.mxu0 0.0
  %545 = vmatprep.subr.mxu0 0.0
  %546 = vmatpush1.xpose.msra.mxu0 0.0
  %547 = vmatprep.subr.mxu0 0.0
  %548 = vmatpush1.xpose.msra.mxu0 0.0
  %549 = vmatprep.subr.mxu0 0.0
  %550 = vmatpush1.xpose.msra.mxu0 0.0
  %551 = vmatprep.subr.mxu0 0.0
  %552 = vmatpush1.xpose.msra.mxu0 0.0
  %553 = vmatprep.subr.mxu0 0.0
  %554 = vmatpush1.xpose.msra.mxu0 0.0
  %555 = vmatprep.subr.mxu0 0.0
  %556 = vmatpush1.xpose.msra.mxu0 0.0
  %557 = vmatprep.subr.mxu0 0.0
  %558 = vmatpush1.xpose.msra.mxu0 0.0
  %559 = vmatprep.subr.mxu0 0.0
  %560 = vmatpush1.xpose.msra.mxu0 0.0
  %561 = vmatprep.mubr.f32.mxu0 0.0
  %562 = vmatmul.mubr.f32.gmra.mrb[0].mxu0 %v492
  %v563 = vpop.f32.mrb[0].mxu0
  %v564 = vadd.f32 0.0, %v563
  %v565 = vpop.f32.mrb[0].mxu0
  %566 = vdwg.mxu0
  %v568 = vsel %vm490, %v489, 0
  %570 = vmatprep.subr.mxu0 0.0
  %571 = vmatpush1.xpose.msra.mxu0 %v568
  %572 = vmatprep.subr.mxu0 0.0
  %573 = vmatpush1.xpose.msra.mxu0 0.0
  %574 = vmatprep.subr.mxu0 0.0
  %575 = vmatpush1.xpose.msra.mxu0 0.0
  %576 = vmatprep.subr.mxu0 0.0
  %577 = vmatpush1.xpose.msra.mxu0 0.0
  %578 = vmatprep.subr.mxu0 0.0
  %579 = vmatpush1.xpose.msra.mxu0 0.0
  %580 = vmatprep.subr.mxu0 0.0
  %581 = vmatpush1.xpose.msra.mxu0 0.0
  %582 = vmatprep.subr.mxu0 0.0
  %583 = vmatpush1.xpose.msra.mxu0 0.0
  %584 = vmatprep.subr.mxu0 0.0
  %585 = vmatpush1.xpose.msra.mxu0 0.0
  %586 = vmatprep.subr.mxu0 0.0
  %587 = vmatpush1.xpose.msra.mxu0 0.0
  %588 = vmatprep.subr.mxu0 0.0
  %589 = vmatpush1.xpose.msra.mxu0 0.0
  %590 = vmatprep.subr.mxu0 0.0
  %591 = vmatpush1.xpose.msra.mxu0 0.0
  %592 = vmatprep.subr.mxu0 0.0
  %593 = vmatpush1.xpose.msra.mxu0 0.0
  %594 = vmatprep.subr.mxu0 0.0
  %595 = vmatpush1.xpose.msra.mxu0 0.0
  %596 = vmatprep.subr.mxu0 0.0
  %597 = vmatpush1.xpose.msra.mxu0 0.0
  %598 = vmatprep.subr.mxu0 0.0
  %599 = vmatpush1.xpose.msra.mxu0 0.0
  %600 = vmatprep.subr.mxu0 0.0
  %601 = vmatpush1.xpose.msra.mxu0 0.0
  %602 = vmatprep.subr.mxu0 0.0
  %603 = vmatpush1.xpose.msra.mxu0 0.0
  %604 = vmatprep.subr.mxu0 0.0
  %605 = vmatpush1.xpose.msra.mxu0 0.0
  %606 = vmatprep.subr.mxu0 0.0
  %607 = vmatpush1.xpose.msra.mxu0 0.0
  %608 = vmatprep.subr.mxu0 0.0
  %609 = vmatpush1.xpose.msra.mxu0 0.0
  %610 = vmatprep.subr.mxu0 0.0
  %611 = vmatpush1.xpose.msra.mxu0 0.0
  %612 = vmatprep.subr.mxu0 0.0
  %613 = vmatpush1.xpose.msra.mxu0 0.0
  %614 = vmatprep.subr.mxu0 0.0
  %615 = vmatpush1.xpose.msra.mxu0 0.0
  %616 = vmatprep.subr.mxu0 0.0
  %617 = vmatpush1.xpose.msra.mxu0 0.0
  %618 = vmatprep.subr.mxu0 0.0
  %619 = vmatpush1.xpose.msra.mxu0 0.0
  %620 = vmatprep.subr.mxu0 0.0
  %621 = vmatpush1.xpose.msra.mxu0 0.0
  %622 = vmatprep.subr.mxu0 0.0
  %623 = vmatpush1.xpose.msra.mxu0 0.0
  %624 = vmatprep.subr.mxu0 0.0
  %625 = vmatpush1.xpose.msra.mxu0 0.0
  %626 = vmatprep.subr.mxu0 0.0
  %627 = vmatpush1.xpose.msra.mxu0 0.0
  %628 = vmatprep.subr.mxu0 0.0
  %629 = vmatpush1.xpose.msra.mxu0 0.0
  %630 = vmatprep.subr.mxu0 0.0
  %631 = vmatpush1.xpose.msra.mxu0 0.0
  %632 = vmatprep.subr.mxu0 0.0
  %633 = vmatpush1.xpose.msra.mxu0 0.0
  %634 = vmatprep.mubr.f32.mxu0 0.0
  %635 = vmatmul.mubr.f32.gmra.mrb[0].mxu0 %v492
  %v636 = vpop.f32.mrb[0].mxu0
  %v637 = vadd.f32 0.0, %v636
  %v638 = vpop.f32.mrb[0].mxu0
  %639 = vdwg.mxu0
  %v640 = vadd.f32 %v474, %v564
  %v641 = vadd.f32 %v477, %v637
  %vm642 = vcmp.gt.f32.partialorder %v640, 0.0
  %vm643 = vcmp.gt.f32.partialorder %v641, 0.0
  %v644 = vmul.f32 %v640, 0.2
  %v645 = vmul.f32 %v641, 0.2
  %v646 = vsel %vm642, %v640, %v644
  %v647 = vsel %vm643, %v641, %v645
  %v648 = vadd.f32 %v646, %v388
  %v649 = vadd.f32 %v647, %v461
  %vm650 = vcmask 27648
  %v651 = vsel %vm650, %v648, -inf
  %652 = vmax.xlane.f32.xlu0 %v651
  %v653 = vpop.xlane.xlu0 %652
  %v654 = vsel %vm650, %v649, -inf
  %655 = vmax.xlane.f32.xlu0 %v654
  %v656 = vpop.xlane.xlu0 %655
  %v657 = vsub.f32 %v648, %v653
  %v658 = vsub.f32 %v649, %v656
  %v659 = vmul.f32 %v657, 1.442695
  %v660 = vpow.pop %v659
  %v661 = vmul.f32 %v658, 1.442695
  %v662 = vpow.pop %v661
  %v663 = vsel %vm650, %v660, 0.0
  %664 = vadd.xlane.f32.xlu0 %v663
  %v665 = vpop.xlane.xlu0 %664
  %v666 = vsel %vm650, %v662, 0.0
  %667 = vadd.xlane.f32.xlu0 %v666
  %v668 = vpop.xlane.xlu0 %667
  %v669 = vrcp.pop %v665
  %v670 = vrcp.pop %v668
  %v671 = vmul.f32 %v660, %v669
  %v672 = vmul.f32 %v662, %v670
  %v673 = vlaneseq
  %v674 = vshrl.u32 %v673, 7
  %v675 = vlaneseq
  %v676 = vand.u32 %v675, 127
  %vm677 = vcmp.eq.s32.totalorder %v674, %v676
  %v678 = vld [vmem:[%s4] sm:$0xff]
  %v679 = vld [vmem:[%s4 + $0x8] sm:$0xff]
  %v680 = vld [vmem:[%s4 + $0x10] sm:$0xff]
  %v681 = vld [vmem:[%s4 + $0x18] sm:$0xff]
  %vm682 = vcmask 261120
  %v684 = vsel %vm682, %v100, 0
  %686 = vmatprep.subr.mxu0 0.0
  %687 = vmatpush1.msra.mxu0 %v678
  %688 = vmatprep.subr.mxu0 0.0
  %689 = vmatpush1.msra.mxu0 %v679
  %690 = vmatprep.subr.mxu0 0.0
  %691 = vmatpush1.msra.mxu0 %v680
  %692 = vmatprep.subr.mxu0 0.0
  %693 = vmatpush1.msra.mxu0 %v681
  %694 = vmatprep.subr.mxu0 0.0
  %695 = vmatpush1.msra.mxu0 0.0
  %696 = vmatprep.subr.mxu0 0.0
  %697 = vmatpush1.msra.mxu0 0.0
  %698 = vmatprep.subr.mxu0 0.0
  %699 = vmatpush1.msra.mxu0 0.0
  %700 = vmatprep.subr.mxu0 0.0
  %701 = vmatpush1.msra.mxu0 0.0
  %702 = vmatprep.subr.mxu0 0.0
  %703 = vmatpush1.msra.mxu0 0.0
  %704 = vmatprep.subr.mxu0 0.0
  %705 = vmatpush1.msra.mxu0 0.0
  %706 = vmatprep.subr.mxu0 0.0
  %707 = vmatpush1.msra.mxu0 0.0
  %708 = vmatprep.subr.mxu0 0.0
  %709 = vmatpush1.msra.mxu0 0.0
  %710 = vmatprep.subr.mxu0 0.0
  %711 = vmatpush1.msra.mxu0 0.0
  %712 = vmatprep.subr.mxu0 0.0
  %713 = vmatpush1.msra.mxu0 0.0
  %714 = vmatprep.subr.mxu0 0.0
  %715 = vmatpush1.msra.mxu0 0.0
  %716 = vmatprep.subr.mxu0 0.0
  %717 = vmatpush1.msra.mxu0 0.0
  %718 = vmatprep.subr.mxu0 0.0
  %719 = vmatpush1.msra.mxu0 0.0
  %720 = vmatprep.subr.mxu0 0.0
  %721 = vmatpush1.msra.mxu0 0.0
  %722 = vmatprep.subr.mxu0 0.0
  %723 = vmatpush1.msra.mxu0 0.0
  %724 = vmatprep.subr.mxu0 0.0
  %725 = vmatpush1.msra.mxu0 0.0
  %726 = vmatprep.subr.mxu0 0.0
  %727 = vmatpush1.msra.mxu0 0.0
  %728 = vmatprep.subr.mxu0 0.0
  %729 = vmatpush1.msra.mxu0 0.0
  %730 = vmatprep.subr.mxu0 0.0
  %731 = vmatpush1.msra.mxu0 0.0
  %732 = vmatprep.subr.mxu0 0.0
  %733 = vmatpush1.msra.mxu0 0.0
  %734 = vmatprep.subr.mxu0 0.0
  %735 = vmatpush1.msra.mxu0 0.0
  %736 = vmatprep.subr.mxu0 0.0
  %737 = vmatpush1.msra.mxu0 0.0
  %738 = vmatprep.subr.mxu0 0.0
  %739 = vmatpush1.msra.mxu0 0.0
  %740 = vmatprep.subr.mxu0 0.0
  %741 = vmatpush1.msra.mxu0 0.0
  %742 = vmatprep.subr.mxu0 0.0
  %743 = vmatpush1.msra.mxu0 0.0
  %744 = vmatprep.subr.mxu0 0.0
  %745 = vmatpush1.msra.mxu0 0.0
  %746 = vmatprep.subr.mxu0 0.0
  %747 = vmatpush1.msra.mxu0 0.0
  %748 = vmatprep.subr.mxu0 0.0
  %749 = vmatpush1.msra.mxu0 0.0
  %750 = vmatprep.mubr.f32.mxu0 0.0
  %751 = vmatmul.mubr.f32.gmra.mrb[0].mxu0 %v684
  %v752 = vpop.f32.mrb[0].mxu0
  %v753 = vadd.f32 0.0, %v752
  %v754 = vpop.f32.mrb[0].mxu0
  %755 = vdwg.mxu0
  %v757 = vsel %vm682, %v173, 0
  %759 = vmatprep.subr.mxu0 0.0
  %760 = vmatpush1.msra.mxu0 %v678
  %761 = vmatprep.subr.mxu0 0.0
  %762 = vmatpush1.msra.mxu0 %v679
  %763 = vmatprep.subr.mxu0 0.0
  %764 = vmatpush1.msra.mxu0 %v680
  %765 = vmatprep.subr.mxu0 0.0
  %766 = vmatpush1.msra.mxu0 %v681
  %767 = vmatprep.subr.mxu0 0.0
  %768 = vmatpush1.msra.mxu0 0.0
  %769 = vmatprep.subr.mxu0 0.0
  %770 = vmatpush1.msra.mxu0 0.0
  %771 = vmatprep.subr.mxu0 0.0
  %772 = vmatpush1.msra.mxu0 0.0
  %773 = vmatprep.subr.mxu0 0.0
  %774 = vmatpush1.msra.mxu0 0.0
  %775 = vmatprep.subr.mxu0 0.0
  %776 = vmatpush1.msra.mxu0 0.0
  %777 = vmatprep.subr.mxu0 0.0
  %778 = vmatpush1.msra.mxu0 0.0
  %779 = vmatprep.subr.mxu0 0.0
  %780 = vmatpush1.msra.mxu0 0.0
  %781 = vmatprep.subr.mxu0 0.0
  %782 = vmatpush1.msra.mxu0 0.0
  %783 = vmatprep.subr.mxu0 0.0
  %784 = vmatpush1.msra.mxu0 0.0
  %785 = vmatprep.subr.mxu0 0.0
  %786 = vmatpush1.msra.mxu0 0.0
  %787 = vmatprep.subr.mxu0 0.0
  %788 = vmatpush1.msra.mxu0 0.0
  %789 = vmatprep.subr.mxu0 0.0
  %790 = vmatpush1.msra.mxu0 0.0
  %791 = vmatprep.subr.mxu0 0.0
  %792 = vmatpush1.msra.mxu0 0.0
  %793 = vmatprep.subr.mxu0 0.0
  %794 = vmatpush1.msra.mxu0 0.0
  %795 = vmatprep.subr.mxu0 0.0
  %796 = vmatpush1.msra.mxu0 0.0
  %797 = vmatprep.subr.mxu0 0.0
  %798 = vmatpush1.msra.mxu0 0.0
  %799 = vmatprep.subr.mxu0 0.0
  %800 = vmatpush1.msra.mxu0 0.0
  %801 = vmatprep.subr.mxu0 0.0
  %802 = vmatpush1.msra.mxu0 0.0
  %803 = vmatprep.subr.mxu0 0.0
  %804 = vmatpush1.msra.mxu0 0.0
  %805 = vmatprep.subr.mxu0 0.0
  %806 = vmatpush1.msra.mxu0 0.0
  %807 = vmatprep.subr.mxu0 0.0
  %808 = vmatpush1.msra.mxu0 0.0
  %809 = vmatprep.subr.mxu0 0.0
  %810 = vmatpush1.msra.mxu0 0.0
  %811 = vmatprep.subr.mxu0 0.0
  %812 = vmatpush1.msra.mxu0 0.0
  %813 = vmatprep.subr.mxu0 0.0
  %814 = vmatpush1.msra.mxu0 0.0
  %815 = vmatprep.subr.mxu0 0.0
  %816 = vmatpush1.msra.mxu0 0.0
  %817 = vmatprep.subr.mxu0 0.0
  %818 = vmatpush1.msra.mxu0 0.0
  %819 = vmatprep.subr.mxu0 0.0
  %820 = vmatpush1.msra.mxu0 0.0
  %821 = vmatprep.subr.mxu0 0.0
  %822 = vmatpush1.msra.mxu0 0.0
  %823 = vmatprep.mubr.f32.mxu0 0.0
  %824 = vmatmul.mubr.f32.gmra.mrb[0].mxu0 %v757
  %v825 = vpop.f32.mrb[0].mxu0
  %v826 = vadd.f32 0.0, %v825
  %v827 = vpop.f32.mrb[0].mxu0
  %828 = vdwg.mxu0
  %v829 = vld [vmem:[%s5] sm:$0x1]
  %vm830 = vcmp.eq.f32.partialorder %v671, 0.0
  %vm831 = vcmp.eq.f32.partialorder %v672, 0.0
  %v832 = vsel %vm677, 1, 0
  %vm833 = vcmp.eq.s32.totalorder %v832, 1
  %vm834 = vmand %vm833, %vm830
  %vm835 = vmand %vm833, %vm831
  %v836 = vsel %vm834, 1.0, %v671
  %v837 = vsel %vm835, 1.0, %v672
  %v838 = vsel %vm650, %v836, 0.0
  %839 = vadd.xlane.f32.xlu0 %v838
  %v840 = vpop.xlane.xlu0 %839
  %v841 = vsel %vm650, %v837, 0.0
  %842 = vadd.xlane.f32.xlu0 %v841
  %v843 = vpop.xlane.xlu0 %842
  %vm844 = vcmp.gt.f32.partialorder %v840, 0.0
  %vm845 = vcmp.gt.f32.partialorder %v843, 0.0
  %v846 = vrsqrt.pop %v840
  %v847 = vrsqrt.pop %v843
  %v848 = vsel %vm844, %v846, 0.0
  %v849 = vsel %vm845, %v847, 0.0
  %850 = vxpose.xlu0.b32.start [1/16] %v836, 128
  %851 = vxpose.xlu0.b32.cont [2/16] 0.0, 128
  %852 = vxpose.xlu0.b32.cont [3/16] 0.0, 128
  %853 = vxpose.xlu0.b32.cont [4/16] 0.0, 128
  %854 = vxpose.xlu0.b32.cont [5/16] 0.0, 128
  %855 = vxpose.xlu0.b32.cont [6/16] 0.0, 128
  %856 = vxpose.xlu0.b32.cont [7/16] 0.0, 128
  %857 = vxpose.xlu0.b32.cont [8/16] 0.0, 128
  %858 = vxpose.xlu0.b32.cont [9/16] 0.0, 128
  %859 = vxpose.xlu0.b32.cont [10/16] 0.0, 128
  %860 = vxpose.xlu0.b32.cont [11/16] 0.0, 128
  %861 = vxpose.xlu0.b32.cont [12/16] 0.0, 128
  %862 = vxpose.xlu0.b32.cont [13/16] 0.0, 128
  %863 = vxpose.xlu0.b32.cont [14/16] 0.0, 128
  %864 = vxpose.xlu0.b32.cont [15/16] 0.0, 128
  %865 = vxpose.xlu0.b32.end [16/16] 0.0, 128
  %v866 = vpop.trf.xlu0
  %v867 = vpop.trf.xlu0
  %v868 = vpop.trf.xlu0
  %v869 = vpop.trf.xlu0
  %v870 = vpop.trf.xlu0
  %v871 = vpop.trf.xlu0
  %v872 = vpop.trf.xlu0
  %v873 = vpop.trf.xlu0
  %v874 = vpop.trf.xlu0
  %v875 = vpop.trf.xlu0
  %v876 = vpop.trf.xlu0
  %v877 = vpop.trf.xlu0
  %v878 = vpop.trf.xlu0
  %v879 = vpop.trf.xlu0
  %v880 = vpop.trf.xlu0
  %v881 = vpop.trf.xlu0
  %882 = vxpose.xlu0.b32.start [1/16] %v837, 128
  %883 = vxpose.xlu0.b32.cont [2/16] 0.0, 128
  %884 = vxpose.xlu0.b32.cont [3/16] 0.0, 128
  %885 = vxpose.xlu0.b32.cont [4/16] 0.0, 128
  %886 = vxpose.xlu0.b32.cont [5/16] 0.0, 128
  %887 = vxpose.xlu0.b32.cont [6/16] 0.0, 128
  %888 = vxpose.xlu0.b32.cont [7/16] 0.0, 128
  %889 = vxpose.xlu0.b32.cont [8/16] 0.0, 128
  %890 = vxpose.xlu0.b32.cont [9/16] 0.0, 128
  %891 = vxpose.xlu0.b32.cont [10/16] 0.0, 128
  %892 = vxpose.xlu0.b32.cont [11/16] 0.0, 128
  %893 = vxpose.xlu0.b32.cont [12/16] 0.0, 128
  %894 = vxpose.xlu0.b32.cont [13/16] 0.0, 128
  %895 = vxpose.xlu0.b32.cont [14/16] 0.0, 128
  %896 = vxpose.xlu0.b32.cont [15/16] 0.0, 128
  %897 = vxpose.xlu0.b32.end [16/16] 0.0, 128
  %v898 = vpop.trf.xlu0
  %v899 = vpop.trf.xlu0
  %v900 = vpop.trf.xlu0
  %v901 = vpop.trf.xlu0
  %v902 = vpop.trf.xlu0
  %v903 = vpop.trf.xlu0
  %v904 = vpop.trf.xlu0
  %v905 = vpop.trf.xlu0
  %v906 = vpop.trf.xlu0
  %v907 = vpop.trf.xlu0
  %v908 = vpop.trf.xlu0
  %v909 = vpop.trf.xlu0
  %v910 = vpop.trf.xlu0
  %v911 = vpop.trf.xlu0
  %v912 = vpop.trf.xlu0
  %v913 = vpop.trf.xlu0
  %v914 = vmul.f32 %v848, %v753
  %v915 = vmul.f32 %v849, %v826
  %vm916 = vcmask 31744
  %v918 = vsel %vm916, %v866, 0
  %vm920 = vcmask 1043456
  %v922 = vsel %vm920, %v914, 0
  %924 = vmatprep.subr.mxu0 0.0
  %925 = vmatpush1.msra.mxu0 %v922
  %926 = vmatprep.subr.mxu0 0.0
  %927 = vmatpush1.msra.mxu0 0.0
  %928 = vmatprep.subr.mxu0 0.0
  %929 = vmatpush1.msra.mxu0 0.0
  %930 = vmatprep.subr.mxu0 0.0
  %931 = vmatpush1.msra.mxu0 0.0
  %932 = vmatprep.subr.mxu0 0.0
  %933 = vmatpush1.msra.mxu0 0.0
  %934 = vmatprep.subr.mxu0 0.0
  %935 = vmatpush1.msra.mxu0 0.0
  %936 = vmatprep.subr.mxu0 0.0
  %937 = vmatpush1.msra.mxu0 0.0
  %938 = vmatprep.subr.mxu0 0.0
  %939 = vmatpush1.msra.mxu0 0.0
  %940 = vmatprep.subr.mxu0 0.0
  %941 = vmatpush1.msra.mxu0 0.0
  %942 = vmatprep.subr.mxu0 0.0
  %943 = vmatpush1.msra.mxu0 0.0
  %944 = vmatprep.subr.mxu0 0.0
  %945 = vmatpush1.msra.mxu0 0.0
  %946 = vmatprep.subr.mxu0 0.0
  %947 = vmatpush1.msra.mxu0 0.0
  %948 = vmatprep.subr.mxu0 0.0
  %949 = vmatpush1.msra.mxu0 0.0
  %950 = vmatprep.subr.mxu0 0.0
  %951 = vmatpush1.msra.mxu0 0.0
  %952 = vmatprep.subr.mxu0 0.0
  %953 = vmatpush1.msra.mxu0 0.0
  %954 = vmatprep.subr.mxu0 0.0
  %955 = vmatpush1.msra.mxu0 0.0
  %956 = vmatprep.subr.mxu0 0.0
  %957 = vmatpush1.msra.mxu0 0.0
  %958 = vmatprep.subr.mxu0 0.0
  %959 = vmatpush1.msra.mxu0 0.0
  %960 = vmatprep.subr.mxu0 0.0
  %961 = vmatpush1.msra.mxu0 0.0
  %962 = vmatprep.subr.mxu0 0.0
  %963 = vmatpush1.msra.mxu0 0.0
  %964 = vmatprep.subr.mxu0 0.0
  %965 = vmatpush1.msra.mxu0 0.0
  %966 = vmatprep.subr.mxu0 0.0
  %967 = vmatpush1.msra.mxu0 0.0
  %968 = vmatprep.subr.mxu0 0.0
  %969 = vmatpush1.msra.mxu0 0.0
  %970 = vmatprep.subr.mxu0 0.0
  %971 = vmatpush1.msra.mxu0 0.0
  %972 = vmatprep.subr.mxu0 0.0
  %973 = vmatpush1.msra.mxu0 0.0
  %974 = vmatprep.subr.mxu0 0.0
  %975 = vmatpush1.msra.mxu0 0.0
  %976 = vmatprep.subr.mxu0 0.0
  %977 = vmatpush1.msra.mxu0 0.0
  %978 = vmatprep.subr.mxu0 0.0
  %979 = vmatpush1.msra.mxu0 0.0
  %980 = vmatprep.subr.mxu0 0.0
  %981 = vmatpush1.msra.mxu0 0.0
  %982 = vmatprep.subr.mxu0 0.0
  %983 = vmatpush1.msra.mxu0 0.0
  %984 = vmatprep.subr.mxu0 0.0
  %985 = vmatpush1.msra.mxu0 0.0
  %986 = vmatprep.subr.mxu0 0.0
  %987 = vmatpush1.msra.mxu0 0.0
  %988 = vmatprep.mubr.f32.mxu0 0.0
  %989 = vmatmul.mubr.f32.gmra.mrb[0].mxu0 %v918
  %v990 = vpop.f32.mrb[0].mxu0
  %v991 = vadd.f32 0.0, %v990
  %v992 = vpop.f32.mrb[0].mxu0
  %993 = vdwg.mxu0
  %v995 = vsel %vm916, %v898, 0
  %v998 = vsel %vm920, %v915, 0
  %1000 = vmatprep.subr.mxu0 0.0
  %1001 = vmatpush1.msra.mxu0 %v998
  %1002 = vmatprep.subr.mxu0 0.0
  %1003 = vmatpush1.msra.mxu0 0.0
  %1004 = vmatprep.subr.mxu0 0.0
  %1005 = vmatpush1.msra.mxu0 0.0
  %1006 = vmatprep.subr.mxu0 0.0
  %1007 = vmatpush1.msra.mxu0 0.0
  %1008 = vmatprep.subr.mxu0 0.0
  %1009 = vmatpush1.msra.mxu0 0.0
  %1010 = vmatprep.subr.mxu0 0.0
  %1011 = vmatpush1.msra.mxu0 0.0
  %1012 = vmatprep.subr.mxu0 0.0
  %1013 = vmatpush1.msra.mxu0 0.0
  %1014 = vmatprep.subr.mxu0 0.0
  %1015 = vmatpush1.msra.mxu0 0.0
  %1016 = vmatprep.subr.mxu0 0.0
  %1017 = vmatpush1.msra.mxu0 0.0
  %1018 = vmatprep.subr.mxu0 0.0
  %1019 = vmatpush1.msra.mxu0 0.0
  %1020 = vmatprep.subr.mxu0 0.0
  %1021 = vmatpush1.msra.mxu0 0.0
  %1022 = vmatprep.subr.mxu0 0.0
  %1023 = vmatpush1.msra.mxu0 0.0
  %1024 = vmatprep.subr.mxu0 0.0
  %1025 = vmatpush1.msra.mxu0 0.0
  %1026 = vmatprep.subr.mxu0 0.0
  %1027 = vmatpush1.msra.mxu0 0.0
  %1028 = vmatprep.subr.mxu0 0.0
  %1029 = vmatpush1.msra.mxu0 0.0
  %1030 = vmatprep.subr.mxu0 0.0
  %1031 = vmatpush1.msra.mxu0 0.0
  %1032 = vmatprep.subr.mxu0 0.0
  %1033 = vmatpush1.msra.mxu0 0.0
  %1034 = vmatprep.subr.mxu0 0.0
  %1035 = vmatpush1.msra.mxu0 0.0
  %1036 = vmatprep.subr.mxu0 0.0
  %1037 = vmatpush1.msra.mxu0 0.0
  %1038 = vmatprep.subr.mxu0 0.0
  %1039 = vmatpush1.msra.mxu0 0.0
  %1040 = vmatprep.subr.mxu0 0.0
  %1041 = vmatpush1.msra.mxu0 0.0
  %1042 = vmatprep.subr.mxu0 0.0
  %1043 = vmatpush1.msra.mxu0 0.0
  %1044 = vmatprep.subr.mxu0 0.0
  %1045 = vmatpush1.msra.mxu0 0.0
  %1046 = vmatprep.subr.mxu0 0.0
  %1047 = vmatpush1.msra.mxu0 0.0
  %1048 = vmatprep.subr.mxu0 0.0
  %1049 = vmatpush1.msra.mxu0 0.0
  %1050 = vmatprep.subr.mxu0 0.0
  %1051 = vmatpush1.msra.mxu0 0.0
  %1052 = vmatprep.subr.mxu0 0.0
  %1053 = vmatpush1.msra.mxu0 0.0
  %1054 = vmatprep.subr.mxu0 0.0
  %1055 = vmatpush1.msra.mxu0 0.0
  %1056 = vmatprep.subr.mxu0 0.0
  %1057 = vmatpush1.msra.mxu0 0.0
  %1058 = vmatprep.subr.mxu0 0.0
  %1059 = vmatpush1.msra.mxu0 0.0
  %1060 = vmatprep.subr.mxu0 0.0
  %1061 = vmatpush1.msra.mxu0 0.0
  %1062 = vmatprep.subr.mxu0 0.0
  %1063 = vmatpush1.msra.mxu0 0.0
  %1064 = vmatprep.mubr.f32.mxu0 0.0
  %1065 = vmatmul.mubr.f32.gmra.mrb[0].mxu0 %v995
  %v1066 = vpop.f32.mrb[0].mxu0
  %v1067 = vadd.f32 0.0, %v1066
  %v1068 = vpop.f32.mrb[0].mxu0
  %1069 = vdwg.mxu0
  %v1070 = vmul.f32 %v848, %v991
  %v1071 = vmul.f32 %v849, %v1067
  %v1073 = vlaneseq
  %v1074 = vshrl.u32 %v1073, 7
  %v1075 = vsub.s32 0, %v1074
  %v1076 = vrot.slane %v829, %v1075
  %v1078 = vadd.f32 %v1070, %v1076
  %v1079 = vadd.f32 %v1071, %v1076
  %v1080 = vmax.f32 %v1078, 0.0
  %v1081 = vmax.f32 %v1079, 0.0
  %v1082 = vsel %vm471, %v100, -inf
  %v1083 = vrot.slane %v1082, 4
  %v1084 = vmax.f32 %v1082, %v1083
  %v1085 = vrot.slane %v1084, 2
  %v1086 = vmax.f32 %v1084, %v1085
  %v1087 = vrot.slane %v1086, 1
  %v1088 = vmax.f32 %v1086, %v1087
  %v1089 = vsel %vm471, %v173, -inf
  %v1090 = vrot.slane %v1089, 4
  %v1091 = vmax.f32 %v1089, %v1090
  %v1092 = vrot.slane %v1091, 2
  %v1093 = vmax.f32 %v1091, %v1092
  %v1094 = vrot.slane %v1093, 1
  %v1095 = vmax.f32 %v1093, %v1094
  %v1096 = vsel %vm471, %v100, 0.0
  %v1097 = vrot.slane %v1096, 4
  %v1098 = vadd.f32 %v1096, %v1097
  %v1099 = vrot.slane %v1098, 2
  %v1100 = vadd.f32 %v1098, %v1099
  %v1101 = vrot.slane %v1100, 1
  %v1102 = vadd.f32 %v1100, %v1101
  %v1103 = vsel %vm471, %v173, 0.0
  %v1104 = vrot.slane %v1103, 4
  %v1105 = vadd.f32 %v1103, %v1104
  %v1106 = vrot.slane %v1105, 2
  %v1107 = vadd.f32 %v1105, %v1106
  %v1108 = vrot.slane %v1107, 1
  %v1109 = vadd.f32 %v1107, %v1108
  %v1110 = vmul.f32 %v1102, 0.25
  %v1111 = vmul.f32 %v1109, 0.25
  %vm1114 = vcmask 1041409
  %v1115 = vsel %vm1114, %v1095, %v1088
  %v1119 = vsel %vm1114, %v1111, %v1110
  %1120 = vrot.lane.b32.xlu0 %v1119, 32
  %v1121 = vpop.permute.xlu0 %1120
  %v1123 = vsel %vm682, %v1115, %v1121
  %vm1124 = vcmask 517120
  %1125 = vst.msk [vmem:[%s6] sm:$0x3] %vm1124, %v1123
  %v1126 = vsel %vm471, %v1080, -inf
  %v1127 = vrot.slane %v1126, 4
  %v1128 = vmax.f32 %v1126, %v1127
  %v1129 = vrot.slane %v1128, 2
  %v1130 = vmax.f32 %v1128, %v1129
  %v1131 = vrot.slane %v1130, 1
  %v1132 = vmax.f32 %v1130, %v1131
  %v1133 = vsel %vm471, %v1081, -inf
  %v1134 = vrot.slane %v1133, 4
  %v1135 = vmax.f32 %v1133, %v1134
  %v1136 = vrot.slane %v1135, 2
  %v1137 = vmax.f32 %v1135, %v1136
  %v1138 = vrot.slane %v1137, 1
  %v1139 = vmax.f32 %v1137, %v1138
  %v1140 = vsel %vm471, %v1080, 0.0
  %v1141 = vrot.slane %v1140, 4
  %v1142 = vadd.f32 %v1140, %v1141
  %v1143 = vrot.slane %v1142, 2
  %v1144 = vadd.f32 %v1142, %v1143
  %v1145 = vrot.slane %v1144, 1
  %v1146 = vadd.f32 %v1144, %v1145
  %v1147 = vsel %vm471, %v1081, 0.0
  %v1148 = vrot.slane %v1147, 4
  %v1149 = vadd.f32 %v1147, %v1148
  %v1150 = vrot.slane %v1149, 2
  %v1151 = vadd.f32 %v1149, %v1150
  %v1152 = vrot.slane %v1151, 1
  %v1153 = vadd.f32 %v1151, %v1152
  %v1154 = vmul.f32 %v1146, 0.25
  %v1155 = vmul.f32 %v1153, 0.25
  %v1158 = vsel %vm1114, %v1139, %v1132
  %v1162 = vsel %vm1114, %v1155, %v1154
  %1163 = vrot.lane.b32.xlu0 %v1162, 32
  %v1164 = vpop.permute.xlu0 %1163
  %v1166 = vsel %vm682, %v1158, %v1164
  %1167 = vst.msk [vmem:[%s7] sm:$0x3] %vm1124, %v1166
  // Predicated region
  $region26: #{forward.6} parent=0 // pred_check
    _
  $region27: #{forward.6} parent=0 // pred_check_branch
    %1169 = sbr.rel (0) target = $region29
  $region28: #{forward.6} parent=0 // pred_region
    _
  $region29: #{forward.6} parent=0 // pred_fallthru
    _
  // Predicated region
  $region30: #{forward.6} parent=0 // pred_check
    _
  $region31: #{forward.6} parent=0 // pred_check_branch
    %1171 = sbr.rel (0) target = $region33
  $region32: #{forward.6} parent=0 // pred_region
    _
  $region33: #{forward.6} parent=0 // pred_fallthru
    _
  // Predicated region
  $region34: #{forward.6} parent=0 // pred_check
    _
  $region35: #{forward.6} parent=0 // pred_check_branch
    %1173 = sbr.rel (0) target = $region37
  $region36: #{forward.6} parent=0 // pred_region
    _
  $region37: #{forward.6} parent=0 // pred_fallthru
    _
  // Predicated region
  $region38: #{forward.6} parent=0 // pred_check
    _
  $region39: #{forward.6} parent=0 // pred_check_branch
    %1175 = sbr.rel (0) target = $region41
  $region40: #{forward.6} parent=0 // pred_region
    _
  $region41: #{forward.6} parent=0 // pred_fallthru
    _

</llo_original>
